<compile_context>
chip_gen: v5e
topology: v5e:2x2
jax: 0.10.0
libtpu: 0.0.40
codegen_flags: <defaults>
</compile_context>

<pallas_src>
import functools

import jax
import jax.numpy as jnp
from jax import lax
from jax.experimental import pallas as pl
from jax.experimental.pallas import tpu as pltpu

_BN_EPS = 1e-5
_LANE = 128


def _round_up(x, m):
    return (x + m - 1) // m * m


def _fold_bn(gamma, beta, mean, var, cpad):
    """Fold BN (inference) to scale/bias, zero-padded to `cpad` channels."""
    scale = gamma / jnp.sqrt(var + _BN_EPS)
    bias = beta - mean * scale
    scale = jnp.pad(scale, (0, cpad - scale.shape[0]))
    bias = jnp.pad(bias, (0, cpad - bias.shape[0]))
    return scale.reshape(1, -1), bias.reshape(1, -1)


def _pick_tile_oh(oh, iw, chp, stride, *, max_tile=None,
                  vmem_budget_bytes=2 << 20):
    """Largest divisor of `oh` whose halo'd hidden row-window fits the budget."""
    cap = min(oh, 16 if max_tile is None else max_tile)
    best = 1
    for t in range(1, cap + 1):
        if oh % t:
            continue
        tih = (t - 1) * stride + 3
        if tih * (iw + 2) * chp * 4 <= vmem_budget_bytes:
            best = t
    return best


# ---------------------------------------------------------------------------
# Fused InvertedResidual kernel.
#   x_ref     : (Lp, Cp)    flattened, spatially zero-padded, channel-padded
#   mask_ref  : (Lp, 1)     1.0 inside the image, 0.0 on the pad ring
#   we_ref    : (Cp, Chp)   expand 1x1 weights            (only if has_expand)
#   s1/b1_ref : (1, Chp)    folded BN1 scale / bias        (only if has_expand)
#   wd_ref    : (3, 3, Chp) depthwise 3x3 weights
#   s2/b2_ref : (1, Chp)    folded BN2 scale / bias
#   wp_ref    : (Chp, Cop)  project 1x1 weights
#   s3/b3_ref : (1, Cop)    folded BN3 scale / bias
#   o_ref     : (T, OW, Cop) output row tile
#   h_scr     : (TIH*(W+2), Chp) VMEM scratch holding the hidden row window
# ---------------------------------------------------------------------------
def _fused_kernel(*refs, stride, tile_oh, img_w, use_residual, has_expand):
    if has_expand:
        (x_ref, mask_ref, we_ref, s1_ref, b1_ref, wd_ref, s2_ref, b2_ref,
         wp_ref, s3_ref, b3_ref, o_ref, h_scr) = refs
    else:
        (x_ref, wd_ref, s2_ref, b2_ref, wp_ref, s3_ref, b3_ref,
         o_ref, h_scr) = refs

    s = stride
    t = tile_oh
    wp2 = img_w + 2                       # padded image width
    tih = (t - 1) * s + 3                 # input rows needed (1-row halo)
    ow = (img_w - 1) // s + 1             # output width

    r = pl.program_id(1)                  # output-row-tile index
    flat0 = r * (t * s * wp2)             # window start in flattened H*W space

    # ---- expand 1x1 conv + BN + ReLU6 (optional) --------------------------
    xwin = x_ref[pl.ds(flat0, tih * wp2), :]           # (tih*wp2, Cp)
    if has_expand:
        hidden = jnp.dot(xwin, we_ref[...],
                         preferred_element_type=jnp.float32)
        hidden = jnp.clip(hidden * s1_ref[...] + b1_ref[...], 0.0, 6.0)
        # zero the depthwise zero-pad ring (BN bias would otherwise leak in)
        hidden = hidden * mask_ref[pl.ds(flat0, tih * wp2), :]
    else:
        hidden = xwin.astype(jnp.float32)  # pad ring is already zero
    h_scr[...] = hidden                    # hidden tensor stays in VMEM only

    wd = wd_ref[...]                       # (3, 3, Chp)
    chp = wd.shape[-1]

    # ---- depthwise 3x3 (stride s) + BN + ReLU6, project 1x1 + BN ----------
    for t_l in range(t):                   # unrolled over output rows of tile
        acc = jnp.zeros((ow, chp), jnp.float32)
        for kh in range(3):
            row = h_scr[pl.ds((t_l * s + kh) * wp2, wp2), :]   # (wp2, Chp)
            for kw in range(3):
                patch = lax.slice(row, (kw, 0),
                                  (kw + (ow - 1) * s + 1, chp), (s, 1))
                acc = acc + patch * wd[kh, kw]
        hd = jnp.clip(acc * s2_ref[...] + b2_ref[...], 0.0, 6.0)

        out_row = jnp.dot(hd, wp_ref[...],
                          preferred_element_type=jnp.float32)
        out_row = out_row * s3_ref[...] + b3_ref[...]
        if use_residual:                   # stride == 1  ->  ow == img_w
            res = x_ref[pl.ds((r * t + t_l + 1) * wp2 + 1, img_w), :]
            out_row = out_row + res
        o_ref[t_l, :, :] = out_row.astype(o_ref.dtype)


# ---------------------------------------------------------------------------
# Wrapper: NCHW in, NCHW out (PyTorch convention).
# ---------------------------------------------------------------------------
def inverted_residual_forward(x_nchw, params, *, in_c, out_c, stride,
                              expand_ratio, max_tile_oh=None):
    use_short_cut = (stride == 1 and in_c == out_c)
    has_expand = expand_ratio != 1
    hidden_c = in_c * expand_ratio

    nb, _, ih, iw = x_nchw.shape
    oh = (ih - 1) // stride + 1
    ow = (iw - 1) // stride + 1
    lp = (ih + 2) * (iw + 2)              # flattened padded spatial extent

    # lane-dense channel padding (multiple of 128)
    cp = _round_up(in_c, _LANE)
    chp = _round_up(hidden_c, _LANE)
    cop = _round_up(out_c, _LANE)

    # NCHW -> NHWC, 1-px spatial zero-pad, channel zero-pad, flatten H*W.
    x = jnp.transpose(x_nchw, (0, 2, 3, 1))
    x = jnp.pad(x, ((0, 0), (1, 1), (1, 1), (0, cp - in_c)))
    x = x.reshape(nb, lp, cp)

    args = [x]
    in_specs = [pl.BlockSpec((None, lp, cp), lambda b, rt: (b, 0, 0))]

    if has_expand:
        row_ok = (jnp.arange(ih + 2) >= 1) & (jnp.arange(ih + 2) <= ih)
        col_ok = (jnp.arange(iw + 2) >= 1) & (jnp.arange(iw + 2) <= iw)
        mask = (row_ok[:, None] & col_ok[None, :]).astype(jnp.float32)
        mask = mask.reshape(lp, 1)

        w_e = jnp.transpose(params["w_expand"][:, :, 0, 0], (1, 0))
        w_e = jnp.pad(w_e, ((0, cp - in_c), (0, chp - hidden_c)))
        s1, b1 = _fold_bn(*params["bn1"], chp)
        args += [mask, w_e, s1, b1]
        in_specs += [pl.BlockSpec((lp, 1), lambda b, rt: (0, 0)),
                     pl.BlockSpec((cp, chp), lambda b, rt: (0, 0)),
                     pl.BlockSpec((1, chp), lambda b, rt: (0, 0)),
                     pl.BlockSpec((1, chp), lambda b, rt: (0, 0))]

    w_d = jnp.transpose(params["w_dw"][:, 0, :, :], (1, 2, 0))
    w_d = jnp.pad(w_d, ((0, 0), (0, 0), (0, chp - hidden_c)))
    s2, b2 = _fold_bn(*params["bn2"], chp)
    w_p = jnp.transpose(params["w_proj"][:, :, 0, 0], (1, 0))
    w_p = jnp.pad(w_p, ((0, chp - hidden_c), (0, cop - out_c)))
    s3, b3 = _fold_bn(*params["bn3"], cop)

    args += [w_d, s2, b2, w_p, s3, b3]
    in_specs += [pl.BlockSpec((3, 3, chp), lambda b, rt: (0, 0, 0)),
                 pl.BlockSpec((1, chp), lambda b, rt: (0, 0)),
                 pl.BlockSpec((1, chp), lambda b, rt: (0, 0)),
                 pl.BlockSpec((chp, cop), lambda b, rt: (0, 0)),
                 pl.BlockSpec((1, cop), lambda b, rt: (0, 0)),
                 pl.BlockSpec((1, cop), lambda b, rt: (0, 0))]

    tile_oh = _pick_tile_oh(oh, iw, chp, stride, max_tile=max_tile_oh)
    tih = (tile_oh - 1) * stride + 3

    kern = functools.partial(
        _fused_kernel, stride=stride, tile_oh=tile_oh, img_w=iw,
        use_residual=use_short_cut, has_expand=has_expand)

    out = pl.pallas_call(
        kern,
        out_shape=jax.ShapeDtypeStruct((nb, oh, ow, cop), x.dtype),
        grid=(nb, oh // tile_oh),
        in_specs=in_specs,
        out_specs=pl.BlockSpec((None, tile_oh, ow, cop),
                               lambda b, rt: (b, rt, 0, 0)),
        scratch_shapes=[pltpu.VMEM((tih * (iw + 2), chp), jnp.float32)],
        compiler_params=pltpu.CompilerParams(
            dimension_semantics=("parallel", "parallel")),
    )(*args)

    out = out[..., :out_c]                         # drop lane padding
    return jnp.transpose(out, (0, 3, 1, 2))        # NHWC -> NCHW


# ---------------------------------------------------------------------------
# Parameter construction (deterministic, BatchNorm in inference mode)
# ---------------------------------------------------------------------------
def init_params(key, in_c, out_c, expand_ratio):
    hidden = in_c * expand_ratio
    ks = jax.random.split(key, 16)
    p = {}
    if expand_ratio != 1:
        p["w_expand"] = jax.random.normal(ks[0], (hidden, in_c, 1, 1),
                                          jnp.float32) * 0.1
        p["bn1"] = (jax.random.uniform(ks[1], (hidden,), minval=0.5, maxval=1.5),
                    jax.random.normal(ks[2], (hidden,)) * 0.1,
                    jax.random.normal(ks[3], (hidden,)) * 0.1,
                    jax.random.uniform(ks[4], (hidden,), minval=0.5, maxval=1.5))
    p["w_dw"] = jax.random.normal(ks[5], (hidden, 1, 3, 3), jnp.float32) * 0.1
    p["bn2"] = (jax.random.uniform(ks[6], (hidden,), minval=0.5, maxval=1.5),
                jax.random.normal(ks[7], (hidden,)) * 0.1,
                jax.random.normal(ks[8], (hidden,)) * 0.1,
                jax.random.uniform(ks[9], (hidden,), minval=0.5, maxval=1.5))
    p["w_proj"] = jax.random.normal(ks[10], (out_c, hidden, 1, 1),
                                    jnp.float32) * 0.1
    p["bn3"] = (jax.random.uniform(ks[11], (out_c,), minval=0.5, maxval=1.5),
                jax.random.normal(ks[12], (out_c,)) * 0.1,
                jax.random.normal(ks[13], (out_c,)) * 0.1,
                jax.random.uniform(ks[14], (out_c,), minval=0.5, maxval=1.5))
    return p


# ---------------------------------------------------------------------------
# Pure-JAX reference (NCHW, lax.conv_general_dilated) for validation
# ---------------------------------------------------------------------------
def _bn_ref(y, gamma, beta, mean, var):
    inv = gamma / jnp.sqrt(var + _BN_EPS)
    return y * inv[None, :, None, None] + (beta - mean * inv)[None, :, None, None]


def ref_forward(x, p, *, in_c, out_c, stride, expand_ratio):
    use_short_cut = (stride == 1 and in_c == out_c)
    dn = ("NCHW", "OIHW", "NCHW")
    y = x
    if expand_ratio != 1:
        y = lax.conv_general_dilated(y, p["w_expand"], (1, 1), "SAME",
                                     dimension_numbers=dn)
        y = jnp.clip(_bn_ref(y, *p["bn1"]), 0.0, 6.0)
    hidden = y.shape[1]
    y = lax.conv_general_dilated(y, p["w_dw"], (stride, stride),
                                 [(1, 1), (1, 1)], dimension_numbers=dn,
                                 feature_group_count=hidden)
    y = jnp.clip(_bn_ref(y, *p["bn2"]), 0.0, 6.0)
    y = lax.conv_general_dilated(y, p["w_proj"], (1, 1), "SAME",
                                 dimension_numbers=dn)
    y = _bn_ref(y, *p["bn3"])
    return x + y if use_short_cut else y


if __name__ == "__main__":
    key = jax.random.PRNGKey(0)

    configs = [
        # (N, Cin, H, W, Cout, stride, expand_ratio, max_tile_oh)
        (2, 4, 16, 16, 4, 1, 2, 8),    # shortcut + expand, 2 row tiles
        (2, 4, 16, 16, 8, 2, 6, 4),    # stride-2, no shortcut
        (1, 8, 16, 16, 8, 1, 1, 8),    # expand_ratio == 1 (no expand conv)
    ]

    for i, (N, Cin, H, W, Cout, stride, er, mt) in enumerate(configs):
        kx, kp, key = jax.random.split(key, 3)
        x = jax.random.normal(kx, (N, Cin, H, W), jnp.float32)
        params = init_params(kp, Cin, Cout, er)

        out = inverted_residual_forward(
            x, params, in_c=Cin, out_c=Cout, stride=stride, expand_ratio=er,
            max_tile_oh=mt)
        out = jax.block_until_ready(out)

        ref = ref_forward(x, params, in_c=Cin, out_c=Cout, stride=stride,
                          expand_ratio=er)
        assert out.shape == ref.shape, (i, out.shape, ref.shape)
        err = float(jnp.max(jnp.abs(out - ref)))
        assert jnp.allclose(out, ref, atol=1e-4, rtol=1e-4), (i, err)

    print("KERNEL_OK")
</pallas_src>

<mosaic_0001>
module attributes {stable_mosaic.version = 11 : i64} {
  func.func @_fused_kernel(%arg0: i32, %arg1: i32, %arg2: memref<1x324x128xf32, #tpu.memory_space<vmem>>, %arg3: memref<324x1xf32, #tpu.memory_space<vmem>>, %arg4: memref<128x128xf32, #tpu.memory_space<vmem>>, %arg5: memref<1x128xf32, #tpu.memory_space<vmem>>, %arg6: memref<1x128xf32, #tpu.memory_space<vmem>>, %arg7: memref<3x3x128xf32, #tpu.memory_space<vmem>>, %arg8: memref<1x128xf32, #tpu.memory_space<vmem>>, %arg9: memref<1x128xf32, #tpu.memory_space<vmem>>, %arg10: memref<128x128xf32, #tpu.memory_space<vmem>>, %arg11: memref<1x128xf32, #tpu.memory_space<vmem>>, %arg12: memref<1x128xf32, #tpu.memory_space<vmem>>, %arg13: memref<1x8x16x128xf32, #tpu.memory_space<vmem>>, %arg14: memref<180x128xf32, #tpu.memory_space<vmem>>) attributes {dimension_semantics = [#tpu.dimension_semantics<parallel>, #tpu.dimension_semantics<parallel>], iteration_bounds = array<i64: 2, 2>, scalar_prefetch = 0 : i64, scratch_operands = 1 : i64, tpu.core_type = #tpu.core_type<tc>, window_params = [{transform_indices = @transform_0, window_bounds = array<i64: 1, 324, 128>}, {pipeline_mode = #tpu.pipeline_mode<synchronous>, transform_indices = @transform_1, window_bounds = array<i64: 324, 1>}, {pipeline_mode = #tpu.pipeline_mode<synchronous>, transform_indices = @transform_2, window_bounds = array<i64: 128, 128>}, {pipeline_mode = #tpu.pipeline_mode<synchronous>, transform_indices = @transform_3, window_bounds = array<i64: 1, 128>}, {pipeline_mode = #tpu.pipeline_mode<synchronous>, transform_indices = @transform_4, window_bounds = array<i64: 1, 128>}, {pipeline_mode = #tpu.pipeline_mode<synchronous>, transform_indices = @transform_5, window_bounds = array<i64: 3, 3, 128>}, {pipeline_mode = #tpu.pipeline_mode<synchronous>, transform_indices = @transform_6, window_bounds = array<i64: 1, 128>}, {pipeline_mode = #tpu.pipeline_mode<synchronous>, transform_indices = @transform_7, window_bounds = array<i64: 1, 128>}, {pipeline_mode = #tpu.pipeline_mode<synchronous>, transform_indices = @transform_8, window_bounds = array<i64: 128, 128>}, {pipeline_mode = #tpu.pipeline_mode<synchronous>, transform_indices = @transform_9, window_bounds = array<i64: 1, 128>}, {pipeline_mode = #tpu.pipeline_mode<synchronous>, transform_indices = @transform_10, window_bounds = array<i64: 1, 128>}, {transform_indices = @transform_11, window_bounds = array<i64: 1, 8, 16, 128>}]} {
    %c144_i32 = arith.constant 144 : i32
    %0 = arith.muli %arg1, %c144_i32 : i32
    %c0 = arith.constant 0 : index
    %1 = arith.index_cast %0 : i32 to index
    %c0_0 = arith.constant 0 : index
    %2 = vector.load %arg2[%c0, %1, %c0_0] : memref<1x324x128xf32, #tpu.memory_space<vmem>>, vector<1x180x128xf32>
    %3 = vector.shape_cast %2 : vector<1x180x128xf32> to vector<180x128xf32>
    %c0_1 = arith.constant 0 : index
    %c0_2 = arith.constant 0 : index
    %4 = vector.load %arg4[%c0_1, %c0_2] : memref<128x128xf32, #tpu.memory_space<vmem>>, vector<128x128xf32>
    %cst = arith.constant dense<0.000000e+00> : vector<180x128xf32>
    %5 = tpu.matmul %3, %4, %cst {dimension_numbers = #tpu.dot_dimension_numbers<[1], [0], [0], [1], [0, 0, 1, 1], [], []>} : vector<180x128xf32>, vector<128x128xf32>, vector<180x128xf32> -> vector<180x128xf32>
    %c0_3 = arith.constant 0 : index
    %c0_4 = arith.constant 0 : index
    %6 = vector.load %arg5[%c0_3, %c0_4] : memref<1x128xf32, #tpu.memory_space<vmem>>, vector<1x128xf32>
    %7 = vector.broadcast %6 : vector<1x128xf32> to vector<180x128xf32>
    %8 = arith.mulf %5, %7 : vector<180x128xf32>
    %c0_5 = arith.constant 0 : index
    %c0_6 = arith.constant 0 : index
    %9 = vector.load %arg6[%c0_5, %c0_6] : memref<1x128xf32, #tpu.memory_space<vmem>>, vector<1x128xf32>
    %10 = vector.broadcast %9 : vector<1x128xf32> to vector<180x128xf32>
    %11 = arith.addf %8, %10 : vector<180x128xf32>
    %cst_7 = arith.constant 0.000000e+00 : f32
    %cst_8 = arith.constant 6.000000e+00 : f32
    %12 = vector.broadcast %cst_7 : f32 to vector<180x128xf32>
    %13 = arith.maximumf %12, %11 : vector<180x128xf32>
    %14 = vector.broadcast %cst_8 : f32 to vector<180x128xf32>
    %15 = arith.minimumf %14, %13 : vector<180x128xf32>
    %16 = arith.index_cast %0 : i32 to index
    %c0_9 = arith.constant 0 : index
    %17 = vector.load %arg3[%16, %c0_9] : memref<324x1xf32, #tpu.memory_space<vmem>>, vector<180x1xf32>
    %18 = vector.broadcast %17 : vector<180x1xf32> to vector<180x128xf32>
    %19 = arith.mulf %15, %18 : vector<180x128xf32>
    %c0_10 = arith.constant 0 : index
    %c0_11 = arith.constant 0 : index
    %20 = vector.load %arg14[%c0_10, %c0_11] : memref<180x128xf32, #tpu.memory_space<vmem>>, vector<180x128xf32>
    tpu.vector_store %arg14[%c0_10, %c0_11], %19 {strides = array<i32>} : memref<180x128xf32, #tpu.memory_space<vmem>>, vector<180x128xf32>,
    %c0_12 = arith.constant 0 : index
    %c0_13 = arith.constant 0 : index
    %c0_14 = arith.constant 0 : index
    %21 = vector.load %arg7[%c0_12, %c0_13, %c0_14] : memref<3x3x128xf32, #tpu.memory_space<vmem>>, vector<3x3x128xf32>
    %cst_15 = arith.constant 0.000000e+00 : f32
    %22 = vector.broadcast %cst_15 : f32 to vector<16x128xf32>
    %c0_16 = arith.constant 0 : index
    %c0_17 = arith.constant 0 : index
    %23 = vector.load %arg14[%c0_16, %c0_17] : memref<180x128xf32, #tpu.memory_space<vmem>>, vector<18x128xf32>
    %24 = vector.extract_strided_slice %23 {offsets = [0, 0], sizes = [16, 128], strides = [1, 1]} : vector<18x128xf32> to vector<16x128xf32>
    %25 = vector.extract_strided_slice %21 {offsets = [0, 0, 0], sizes = [1, 1, 128], strides = [1, 1, 1]} : vector<3x3x128xf32> to vector<1x1x128xf32>
    %26 = vector.shape_cast %25 : vector<1x1x128xf32> to vector<128xf32>
    %27 = vector.shape_cast %26 : vector<128xf32> to vector<1x128xf32>
    %28 = vector.broadcast %27 : vector<1x128xf32> to vector<16x128xf32>
    %29 = arith.mulf %24, %28 : vector<16x128xf32>
    %30 = arith.addf %22, %29 : vector<16x128xf32>
    %31 = vector.extract_strided_slice %23 {offsets = [1, 0], sizes = [16, 128], strides = [1, 1]} : vector<18x128xf32> to vector<16x128xf32>
    %32 = vector.extract_strided_slice %21 {offsets = [0, 1, 0], sizes = [1, 1, 128], strides = [1, 1, 1]} : vector<3x3x128xf32> to vector<1x1x128xf32>
    %33 = vector.shape_cast %32 : vector<1x1x128xf32> to vector<128xf32>
    %34 = vector.shape_cast %33 : vector<128xf32> to vector<1x128xf32>
    %35 = vector.broadcast %34 : vector<1x128xf32> to vector<16x128xf32>
    %36 = arith.mulf %31, %35 : vector<16x128xf32>
    %37 = arith.addf %30, %36 : vector<16x128xf32>
    %38 = vector.extract_strided_slice %23 {offsets = [2, 0], sizes = [16, 128], strides = [1, 1]} : vector<18x128xf32> to vector<16x128xf32>
    %39 = vector.extract_strided_slice %21 {offsets = [0, 2, 0], sizes = [1, 1, 128], strides = [1, 1, 1]} : vector<3x3x128xf32> to vector<1x1x128xf32>
    %40 = vector.shape_cast %39 : vector<1x1x128xf32> to vector<128xf32>
    %41 = vector.shape_cast %40 : vector<128xf32> to vector<1x128xf32>
    %42 = vector.broadcast %41 : vector<1x128xf32> to vector<16x128xf32>
    %43 = arith.mulf %38, %42 : vector<16x128xf32>
    %44 = arith.addf %37, %43 : vector<16x128xf32>
    %c18 = arith.constant 18 : index
    %c0_18 = arith.constant 0 : index
    %45 = vector.load %arg14[%c18, %c0_18] : memref<180x128xf32, #tpu.memory_space<vmem>>, vector<18x128xf32>
    %46 = vector.extract_strided_slice %45 {offsets = [0, 0], sizes = [16, 128], strides = [1, 1]} : vector<18x128xf32> to vector<16x128xf32>
    %47 = vector.extract_strided_slice %21 {offsets = [1, 0, 0], sizes = [1, 1, 128], strides = [1, 1, 1]} : vector<3x3x128xf32> to vector<1x1x128xf32>
    %48 = vector.shape_cast %47 : vector<1x1x128xf32> to vector<128xf32>
    %49 = vector.shape_cast %48 : vector<128xf32> to vector<1x128xf32>
    %50 = vector.broadcast %49 : vector<1x128xf32> to vector<16x128xf32>
    %51 = arith.mulf %46, %50 : vector<16x128xf32>
    %52 = arith.addf %44, %51 : vector<16x128xf32>
    %53 = vector.extract_strided_slice %45 {offsets = [1, 0], sizes = [16, 128], strides = [1, 1]} : vector<18x128xf32> to vector<16x128xf32>
    %54 = vector.extract_strided_slice %21 {offsets = [1, 1, 0], sizes = [1, 1, 128], strides = [1, 1, 1]} : vector<3x3x128xf32> to vector<1x1x128xf32>
    %55 = vector.shape_cast %54 : vector<1x1x128xf32> to vector<128xf32>
    %56 = vector.shape_cast %55 : vector<128xf32> to vector<1x128xf32>
    %57 = vector.broadcast %56 : vector<1x128xf32> to vector<16x128xf32>
    %58 = arith.mulf %53, %57 : vector<16x128xf32>
    %59 = arith.addf %52, %58 : vector<16x128xf32>
    %60 = vector.extract_strided_slice %45 {offsets = [2, 0], sizes = [16, 128], strides = [1, 1]} : vector<18x128xf32> to vector<16x128xf32>
    %61 = vector.extract_strided_slice %21 {offsets = [1, 2, 0], sizes = [1, 1, 128], strides = [1, 1, 1]} : vector<3x3x128xf32> to vector<1x1x128xf32>
    %62 = vector.shape_cast %61 : vector<1x1x128xf32> to vector<128xf32>
    %63 = vector.shape_cast %62 : vector<128xf32> to vector<1x128xf32>
    %64 = vector.broadcast %63 : vector<1x128xf32> to vector<16x128xf32>
    %65 = arith.mulf %60, %64 : vector<16x128xf32>
    %66 = arith.addf %59, %65 : vector<16x128xf32>
    %c36 = arith.constant 36 : index
    %c0_19 = arith.constant 0 : index
    %67 = vector.load %arg14[%c36, %c0_19] : memref<180x128xf32, #tpu.memory_space<vmem>>, vector<18x128xf32>
    %68 = vector.extract_strided_slice %67 {offsets = [0, 0], sizes = [16, 128], strides = [1, 1]} : vector<18x128xf32> to vector<16x128xf32>
    %69 = vector.extract_strided_slice %21 {offsets = [2, 0, 0], sizes = [1, 1, 128], strides = [1, 1, 1]} : vector<3x3x128xf32> to vector<1x1x128xf32>
    %70 = vector.shape_cast %69 : vector<1x1x128xf32> to vector<128xf32>
    %71 = vector.shape_cast %70 : vector<128xf32> to vector<1x128xf32>
    %72 = vector.broadcast %71 : vector<1x128xf32> to vector<16x128xf32>
    %73 = arith.mulf %68, %72 : vector<16x128xf32>
    %74 = arith.addf %66, %73 : vector<16x128xf32>
    %75 = vector.extract_strided_slice %67 {offsets = [1, 0], sizes = [16, 128], strides = [1, 1]} : vector<18x128xf32> to vector<16x128xf32>
    %76 = vector.extract_strided_slice %21 {offsets = [2, 1, 0], sizes = [1, 1, 128], strides = [1, 1, 1]} : vector<3x3x128xf32> to vector<1x1x128xf32>
    %77 = vector.shape_cast %76 : vector<1x1x128xf32> to vector<128xf32>
    %78 = vector.shape_cast %77 : vector<128xf32> to vector<1x128xf32>
    %79 = vector.broadcast %78 : vector<1x128xf32> to vector<16x128xf32>
    %80 = arith.mulf %75, %79 : vector<16x128xf32>
    %81 = arith.addf %74, %80 : vector<16x128xf32>
    %82 = vector.extract_strided_slice %67 {offsets = [2, 0], sizes = [16, 128], strides = [1, 1]} : vector<18x128xf32> to vector<16x128xf32>
    %83 = vector.extract_strided_slice %21 {offsets = [2, 2, 0], sizes = [1, 1, 128], strides = [1, 1, 1]} : vector<3x3x128xf32> to vector<1x1x128xf32>
    %84 = vector.shape_cast %83 : vector<1x1x128xf32> to vector<128xf32>
    %85 = vector.shape_cast %84 : vector<128xf32> to vector<1x128xf32>
    %86 = vector.broadcast %85 : vector<1x128xf32> to vector<16x128xf32>
    %87 = arith.mulf %82, %86 : vector<16x128xf32>
    %88 = arith.addf %81, %87 : vector<16x128xf32>
    %c0_20 = arith.constant 0 : index
    %c0_21 = arith.constant 0 : index
    %89 = vector.load %arg8[%c0_20, %c0_21] : memref<1x128xf32, #tpu.memory_space<vmem>>, vector<1x128xf32>
    %90 = vector.broadcast %89 : vector<1x128xf32> to vector<16x128xf32>
    %91 = arith.mulf %88, %90 : vector<16x128xf32>
    %c0_22 = arith.constant 0 : index
    %c0_23 = arith.constant 0 : index
    %92 = vector.load %arg9[%c0_22, %c0_23] : memref<1x128xf32, #tpu.memory_space<vmem>>, vector<1x128xf32>
    %93 = vector.broadcast %92 : vector<1x128xf32> to vector<16x128xf32>
    %94 = arith.addf %91, %93 : vector<16x128xf32>
    %cst_24 = arith.constant 0.000000e+00 : f32
    %cst_25 = arith.constant 6.000000e+00 : f32
    %95 = vector.broadcast %cst_24 : f32 to vector<16x128xf32>
    %96 = arith.maximumf %95, %94 : vector<16x128xf32>
    %97 = vector.broadcast %cst_25 : f32 to vector<16x128xf32>
    %98 = arith.minimumf %97, %96 : vector<16x128xf32>
    %c0_26 = arith.constant 0 : index
    %c0_27 = arith.constant 0 : index
    %99 = vector.load %arg10[%c0_26, %c0_27] : memref<128x128xf32, #tpu.memory_space<vmem>>, vector<128x128xf32>
    %cst_28 = arith.constant dense<0.000000e+00> : vector<16x128xf32>
    %100 = tpu.matmul %98, %99, %cst_28 {dimension_numbers = #tpu.dot_dimension_numbers<[1], [0], [0], [1], [0, 0, 1, 1], [], []>} : vector<16x128xf32>, vector<128x128xf32>, vector<16x128xf32> -> vector<16x128xf32>
    %c0_29 = arith.constant 0 : index
    %c0_30 = arith.constant 0 : index
    %101 = vector.load %arg11[%c0_29, %c0_30] : memref<1x128xf32, #tpu.memory_space<vmem>>, vector<1x128xf32>
    %102 = vector.broadcast %101 : vector<1x128xf32> to vector<16x128xf32>
    %103 = arith.mulf %100, %102 : vector<16x128xf32>
    %c0_31 = arith.constant 0 : index
    %c0_32 = arith.constant 0 : index
    %104 = vector.load %arg12[%c0_31, %c0_32] : memref<1x128xf32, #tpu.memory_space<vmem>>, vector<1x128xf32>
    %105 = vector.broadcast %104 : vector<1x128xf32> to vector<16x128xf32>
    %106 = arith.addf %103, %105 : vector<16x128xf32>
    %c8_i32 = arith.constant 8 : i32
    %107 = arith.muli %arg1, %c8_i32 : i32
    %c0_i32 = arith.constant 0 : i32
    %108 = arith.addi %107, %c0_i32 : i32
    %c1_i32 = arith.constant 1 : i32
    %109 = arith.addi %108, %c1_i32 : i32
    %c18_i32 = arith.constant 18 : i32
    %110 = arith.muli %109, %c18_i32 : i32
    %c1_i32_33 = arith.constant 1 : i32
    %111 = arith.addi %110, %c1_i32_33 : i32
    %c0_34 = arith.constant 0 : index
    %112 = arith.index_cast %111 : i32 to index
    %c0_35 = arith.constant 0 : index
    %113 = vector.load %arg2[%c0_34, %112, %c0_35] : memref<1x324x128xf32, #tpu.memory_space<vmem>>, vector<1x16x128xf32>
    %114 = vector.shape_cast %113 : vector<1x16x128xf32> to vector<16x128xf32>
    %115 = arith.addf %106, %114 : vector<16x128xf32>
    %c0_36 = arith.constant 0 : index
    %c0_37 = arith.constant 0 : index
    %c0_38 = arith.constant 0 : index
    %c0_39 = arith.constant 0 : index
    %116 = vector.load %arg13[%c0_36, %c0_37, %c0_38, %c0_39] : memref<1x8x16x128xf32, #tpu.memory_space<vmem>>, vector<1x1x16x128xf32>
    %117 = vector.shape_cast %116 : vector<1x1x16x128xf32> to vector<16x128xf32>
    %118 = vector.shape_cast %115 : vector<16x128xf32> to vector<1x1x16x128xf32>
    tpu.vector_store %arg13[%c0_36, %c0_37, %c0_38, %c0_39], %118 {strides = array<i32>} : memref<1x8x16x128xf32, #tpu.memory_space<vmem>>, vector<1x1x16x128xf32>,
    %cst_40 = arith.constant 0.000000e+00 : f32
    %119 = vector.broadcast %cst_40 : f32 to vector<16x128xf32>
    %c18_41 = arith.constant 18 : index
    %c0_42 = arith.constant 0 : index
    %120 = vector.load %arg14[%c18_41, %c0_42] : memref<180x128xf32, #tpu.memory_space<vmem>>, vector<18x128xf32>
    %121 = vector.extract_strided_slice %120 {offsets = [0, 0], sizes = [16, 128], strides = [1, 1]} : vector<18x128xf32> to vector<16x128xf32>
    %122 = vector.extract_strided_slice %21 {offsets = [0, 0, 0], sizes = [1, 1, 128], strides = [1, 1, 1]} : vector<3x3x128xf32> to vector<1x1x128xf32>
    %123 = vector.shape_cast %122 : vector<1x1x128xf32> to vector<128xf32>
    %124 = vector.shape_cast %123 : vector<128xf32> to vector<1x128xf32>
    %125 = vector.broadcast %124 : vector<1x128xf32> to vector<16x128xf32>
    %126 = arith.mulf %121, %125 : vector<16x128xf32>
    %127 = arith.addf %119, %126 : vector<16x128xf32>
    %128 = vector.extract_strided_slice %120 {offsets = [1, 0], sizes = [16, 128], strides = [1, 1]} : vector<18x128xf32> to vector<16x128xf32>
    %129 = vector.extract_strided_slice %21 {offsets = [0, 1, 0], sizes = [1, 1, 128], strides = [1, 1, 1]} : vector<3x3x128xf32> to vector<1x1x128xf32>
    %130 = vector.shape_cast %129 : vector<1x1x128xf32> to vector<128xf32>
    %131 = vector.shape_cast %130 : vector<128xf32> to vector<1x128xf32>
    %132 = vector.broadcast %131 : vector<1x128xf32> to vector<16x128xf32>
    %133 = arith.mulf %128, %132 : vector<16x128xf32>
    %134 = arith.addf %127, %133 : vector<16x128xf32>
    %135 = vector.extract_strided_slice %120 {offsets = [2, 0], sizes = [16, 128], strides = [1, 1]} : vector<18x128xf32> to vector<16x128xf32>
    %136 = vector.extract_strided_slice %21 {offsets = [0, 2, 0], sizes = [1, 1, 128], strides = [1, 1, 1]} : vector<3x3x128xf32> to vector<1x1x128xf32>
    %137 = vector.shape_cast %136 : vector<1x1x128xf32> to vector<128xf32>
    %138 = vector.shape_cast %137 : vector<128xf32> to vector<1x128xf32>
    %139 = vector.broadcast %138 : vector<1x128xf32> to vector<16x128xf32>
    %140 = arith.mulf %135, %139 : vector<16x128xf32>
    %141 = arith.addf %134, %140 : vector<16x128xf32>
    %c36_43 = arith.constant 36 : index
    %c0_44 = arith.constant 0 : index
    %142 = vector.load %arg14[%c36_43, %c0_44] : memref<180x128xf32, #tpu.memory_space<vmem>>, vector<18x128xf32>
    %143 = vector.extract_strided_slice %142 {offsets = [0, 0], sizes = [16, 128], strides = [1, 1]} : vector<18x128xf32> to vector<16x128xf32>
    %144 = vector.extract_strided_slice %21 {offsets = [1, 0, 0], sizes = [1, 1, 128], strides = [1, 1, 1]} : vector<3x3x128xf32> to vector<1x1x128xf32>
    %145 = vector.shape_cast %144 : vector<1x1x128xf32> to vector<128xf32>
    %146 = vector.shape_cast %145 : vector<128xf32> to vector<1x128xf32>
    %147 = vector.broadcast %146 : vector<1x128xf32> to vector<16x128xf32>
    %148 = arith.mulf %143, %147 : vector<16x128xf32>
    %149 = arith.addf %141, %148 : vector<16x128xf32>
    %150 = vector.extract_strided_slice %142 {offsets = [1, 0], sizes = [16, 128], strides = [1, 1]} : vector<18x128xf32> to vector<16x128xf32>
    %151 = vector.extract_strided_slice %21 {offsets = [1, 1, 0], sizes = [1, 1, 128], strides = [1, 1, 1]} : vector<3x3x128xf32> to vector<1x1x128xf32>
    %152 = vector.shape_cast %151 : vector<1x1x128xf32> to vector<128xf32>
    %153 = vector.shape_cast %152 : vector<128xf32> to vector<1x128xf32>
    %154 = vector.broadcast %153 : vector<1x128xf32> to vector<16x128xf32>
    %155 = arith.mulf %150, %154 : vector<16x128xf32>
    %156 = arith.addf %149, %155 : vector<16x128xf32>
    %157 = vector.extract_strided_slice %142 {offsets = [2, 0], sizes = [16, 128], strides = [1, 1]} : vector<18x128xf32> to vector<16x128xf32>
    %158 = vector.extract_strided_slice %21 {offsets = [1, 2, 0], sizes = [1, 1, 128], strides = [1, 1, 1]} : vector<3x3x128xf32> to vector<1x1x128xf32>
    %159 = vector.shape_cast %158 : vector<1x1x128xf32> to vector<128xf32>
    %160 = vector.shape_cast %159 : vector<128xf32> to vector<1x128xf32>
    %161 = vector.broadcast %160 : vector<1x128xf32> to vector<16x128xf32>
    %162 = arith.mulf %157, %161 : vector<16x128xf32>
    %163 = arith.addf %156, %162 : vector<16x128xf32>
    %c54 = arith.constant 54 : index
    %c0_45 = arith.constant 0 : index
    %164 = vector.load %arg14[%c54, %c0_45] : memref<180x128xf32, #tpu.memory_space<vmem>>, vector<18x128xf32>
    %165 = vector.extract_strided_slice %164 {offsets = [0, 0], sizes = [16, 128], strides = [1, 1]} : vector<18x128xf32> to vector<16x128xf32>
    %166 = vector.extract_strided_slice %21 {offsets = [2, 0, 0], sizes = [1, 1, 128], strides = [1, 1, 1]} : vector<3x3x128xf32> to vector<1x1x128xf32>
    %167 = vector.shape_cast %166 : vector<1x1x128xf32> to vector<128xf32>
    %168 = vector.shape_cast %167 : vector<128xf32> to vector<1x128xf32>
    %169 = vector.broadcast %168 : vector<1x128xf32> to vector<16x128xf32>
    %170 = arith.mulf %165, %169 : vector<16x128xf32>
    %171 = arith.addf %163, %170 : vector<16x128xf32>
    %172 = vector.extract_strided_slice %164 {offsets = [1, 0], sizes = [16, 128], strides = [1, 1]} : vector<18x128xf32> to vector<16x128xf32>
    %173 = vector.extract_strided_slice %21 {offsets = [2, 1, 0], sizes = [1, 1, 128], strides = [1, 1, 1]} : vector<3x3x128xf32> to vector<1x1x128xf32>
    %174 = vector.shape_cast %173 : vector<1x1x128xf32> to vector<128xf32>
    %175 = vector.shape_cast %174 : vector<128xf32> to vector<1x128xf32>
    %176 = vector.broadcast %175 : vector<1x128xf32> to vector<16x128xf32>
    %177 = arith.mulf %172, %176 : vector<16x128xf32>
    %178 = arith.addf %171, %177 : vector<16x128xf32>
    %179 = vector.extract_strided_slice %164 {offsets = [2, 0], sizes = [16, 128], strides = [1, 1]} : vector<18x128xf32> to vector<16x128xf32>
    %180 = vector.extract_strided_slice %21 {offsets = [2, 2, 0], sizes = [1, 1, 128], strides = [1, 1, 1]} : vector<3x3x128xf32> to vector<1x1x128xf32>
    %181 = vector.shape_cast %180 : vector<1x1x128xf32> to vector<128xf32>
    %182 = vector.shape_cast %181 : vector<128xf32> to vector<1x128xf32>
    %183 = vector.broadcast %182 : vector<1x128xf32> to vector<16x128xf32>
    %184 = arith.mulf %179, %183 : vector<16x128xf32>
    %185 = arith.addf %178, %184 : vector<16x128xf32>
    %c0_46 = arith.constant 0 : index
    %c0_47 = arith.constant 0 : index
    %186 = vector.load %arg8[%c0_46, %c0_47] : memref<1x128xf32, #tpu.memory_space<vmem>>, vector<1x128xf32>
    %187 = vector.broadcast %186 : vector<1x128xf32> to vector<16x128xf32>
    %188 = arith.mulf %185, %187 : vector<16x128xf32>
    %c0_48 = arith.constant 0 : index
    %c0_49 = arith.constant 0 : index
    %189 = vector.load %arg9[%c0_48, %c0_49] : memref<1x128xf32, #tpu.memory_space<vmem>>, vector<1x128xf32>
    %190 = vector.broadcast %189 : vector<1x128xf32> to vector<16x128xf32>
    %191 = arith.addf %188, %190 : vector<16x128xf32>
    %cst_50 = arith.constant 0.000000e+00 : f32
    %cst_51 = arith.constant 6.000000e+00 : f32
    %192 = vector.broadcast %cst_50 : f32 to vector<16x128xf32>
    %193 = arith.maximumf %192, %191 : vector<16x128xf32>
    %194 = vector.broadcast %cst_51 : f32 to vector<16x128xf32>
    %195 = arith.minimumf %194, %193 : vector<16x128xf32>
    %c0_52 = arith.constant 0 : index
    %c0_53 = arith.constant 0 : index
    %196 = vector.load %arg10[%c0_52, %c0_53] : memref<128x128xf32, #tpu.memory_space<vmem>>, vector<128x128xf32>
    %cst_54 = arith.constant dense<0.000000e+00> : vector<16x128xf32>
    %197 = tpu.matmul %195, %196, %cst_54 {dimension_numbers = #tpu.dot_dimension_numbers<[1], [0], [0], [1], [0, 0, 1, 1], [], []>} : vector<16x128xf32>, vector<128x128xf32>, vector<16x128xf32> -> vector<16x128xf32>
    %c0_55 = arith.constant 0 : index
    %c0_56 = arith.constant 0 : index
    %198 = vector.load %arg11[%c0_55, %c0_56] : memref<1x128xf32, #tpu.memory_space<vmem>>, vector<1x128xf32>
    %199 = vector.broadcast %198 : vector<1x128xf32> to vector<16x128xf32>
    %200 = arith.mulf %197, %199 : vector<16x128xf32>
    %c0_57 = arith.constant 0 : index
    %c0_58 = arith.constant 0 : index
    %201 = vector.load %arg12[%c0_57, %c0_58] : memref<1x128xf32, #tpu.memory_space<vmem>>, vector<1x128xf32>
    %202 = vector.broadcast %201 : vector<1x128xf32> to vector<16x128xf32>
    %203 = arith.addf %200, %202 : vector<16x128xf32>
    %c8_i32_59 = arith.constant 8 : i32
    %204 = arith.muli %arg1, %c8_i32_59 : i32
    %c1_i32_60 = arith.constant 1 : i32
    %205 = arith.addi %204, %c1_i32_60 : i32
    %c1_i32_61 = arith.constant 1 : i32
    %206 = arith.addi %205, %c1_i32_61 : i32
    %c18_i32_62 = arith.constant 18 : i32
    %207 = arith.muli %206, %c18_i32_62 : i32
    %c1_i32_63 = arith.constant 1 : i32
    %208 = arith.addi %207, %c1_i32_63 : i32
    %c0_64 = arith.constant 0 : index
    %209 = arith.index_cast %208 : i32 to index
    %c0_65 = arith.constant 0 : index
    %210 = vector.load %arg2[%c0_64, %209, %c0_65] : memref<1x324x128xf32, #tpu.memory_space<vmem>>, vector<1x16x128xf32>
    %211 = vector.shape_cast %210 : vector<1x16x128xf32> to vector<16x128xf32>
    %212 = arith.addf %203, %211 : vector<16x128xf32>
    %c0_66 = arith.constant 0 : index
    %c1 = arith.constant 1 : index
    %c0_67 = arith.constant 0 : index
    %c0_68 = arith.constant 0 : index
    %213 = vector.load %arg13[%c0_66, %c1, %c0_67, %c0_68] : memref<1x8x16x128xf32, #tpu.memory_space<vmem>>, vector<1x1x16x128xf32>
    %214 = vector.shape_cast %213 : vector<1x1x16x128xf32> to vector<16x128xf32>
    %215 = vector.shape_cast %212 : vector<16x128xf32> to vector<1x1x16x128xf32>
    tpu.vector_store %arg13[%c0_66, %c1, %c0_67, %c0_68], %215 {strides = array<i32>} : memref<1x8x16x128xf32, #tpu.memory_space<vmem>>, vector<1x1x16x128xf32>,
    %cst_69 = arith.constant 0.000000e+00 : f32
    %216 = vector.broadcast %cst_69 : f32 to vector<16x128xf32>
    %c36_70 = arith.constant 36 : index
    %c0_71 = arith.constant 0 : index
    %217 = vector.load %arg14[%c36_70, %c0_71] : memref<180x128xf32, #tpu.memory_space<vmem>>, vector<18x128xf32>
    %218 = vector.extract_strided_slice %217 {offsets = [0, 0], sizes = [16, 128], strides = [1, 1]} : vector<18x128xf32> to vector<16x128xf32>
    %219 = vector.extract_strided_slice %21 {offsets = [0, 0, 0], sizes = [1, 1, 128], strides = [1, 1, 1]} : vector<3x3x128xf32> to vector<1x1x128xf32>
    %220 = vector.shape_cast %219 : vector<1x1x128xf32> to vector<128xf32>
    %221 = vector.shape_cast %220 : vector<128xf32> to vector<1x128xf32>
    %222 = vector.broadcast %221 : vector<1x128xf32> to vector<16x128xf32>
    %223 = arith.mulf %218, %222 : vector<16x128xf32>
    %224 = arith.addf %216, %223 : vector<16x128xf32>
    %225 = vector.extract_strided_slice %217 {offsets = [1, 0], sizes = [16, 128], strides = [1, 1]} : vector<18x128xf32> to vector<16x128xf32>
    %226 = vector.extract_strided_slice %21 {offsets = [0, 1, 0], sizes = [1, 1, 128], strides = [1, 1, 1]} : vector<3x3x128xf32> to vector<1x1x128xf32>
    %227 = vector.shape_cast %226 : vector<1x1x128xf32> to vector<128xf32>
    %228 = vector.shape_cast %227 : vector<128xf32> to vector<1x128xf32>
    %229 = vector.broadcast %228 : vector<1x128xf32> to vector<16x128xf32>
    %230 = arith.mulf %225, %229 : vector<16x128xf32>
    %231 = arith.addf %224, %230 : vector<16x128xf32>
    %232 = vector.extract_strided_slice %217 {offsets = [2, 0], sizes = [16, 128], strides = [1, 1]} : vector<18x128xf32> to vector<16x128xf32>
    %233 = vector.extract_strided_slice %21 {offsets = [0, 2, 0], sizes = [1, 1, 128], strides = [1, 1, 1]} : vector<3x3x128xf32> to vector<1x1x128xf32>
    %234 = vector.shape_cast %233 : vector<1x1x128xf32> to vector<128xf32>
    %235 = vector.shape_cast %234 : vector<128xf32> to vector<1x128xf32>
    %236 = vector.broadcast %235 : vector<1x128xf32> to vector<16x128xf32>
    %237 = arith.mulf %232, %236 : vector<16x128xf32>
    %238 = arith.addf %231, %237 : vector<16x128xf32>
    %c54_72 = arith.constant 54 : index
    %c0_73 = arith.constant 0 : index
    %239 = vector.load %arg14[%c54_72, %c0_73] : memref<180x128xf32, #tpu.memory_space<vmem>>, vector<18x128xf32>
    %240 = vector.extract_strided_slice %239 {offsets = [0, 0], sizes = [16, 128], strides = [1, 1]} : vector<18x128xf32> to vector<16x128xf32>
    %241 = vector.extract_strided_slice %21 {offsets = [1, 0, 0], sizes = [1, 1, 128], strides = [1, 1, 1]} : vector<3x3x128xf32> to vector<1x1x128xf32>
    %242 = vector.shape_cast %241 : vector<1x1x128xf32> to vector<128xf32>
    %243 = vector.shape_cast %242 : vector<128xf32> to vector<1x128xf32>
    %244 = vector.broadcast %243 : vector<1x128xf32> to vector<16x128xf32>
    %245 = arith.mulf %240, %244 : vector<16x128xf32>
    %246 = arith.addf %238, %245 : vector<16x128xf32>
    %247 = vector.extract_strided_slice %239 {offsets = [1, 0], sizes = [16, 128], strides = [1, 1]} : vector<18x128xf32> to vector<16x128xf32>
    %248 = vector.extract_strided_slice %21 {offsets = [1, 1, 0], sizes = [1, 1, 128], strides = [1, 1, 1]} : vector<3x3x128xf32> to vector<1x1x128xf32>
    %249 = vector.shape_cast %248 : vector<1x1x128xf32> to vector<128xf32>
    %250 = vector.shape_cast %249 : vector<128xf32> to vector<1x128xf32>
    %251 = vector.broadcast %250 : vector<1x128xf32> to vector<16x128xf32>
    %252 = arith.mulf %247, %251 : vector<16x128xf32>
    %253 = arith.addf %246, %252 : vector<16x128xf32>
    %254 = vector.extract_strided_slice %239 {offsets = [2, 0], sizes = [16, 128], strides = [1, 1]} : vector<18x128xf32> to vector<16x128xf32>
    %255 = vector.extract_strided_slice %21 {offsets = [1, 2, 0], sizes = [1, 1, 128], strides = [1, 1, 1]} : vector<3x3x128xf32> to vector<1x1x128xf32>
    %256 = vector.shape_cast %255 : vector<1x1x128xf32> to vector<128xf32>
    %257 = vector.shape_cast %256 : vector<128xf32> to vector<1x128xf32>
    %258 = vector.broadcast %257 : vector<1x128xf32> to vector<16x128xf32>
    %259 = arith.mulf %254, %258 : vector<16x128xf32>
    %260 = arith.addf %253, %259 : vector<16x128xf32>
    %c72 = arith.constant 72 : index
    %c0_74 = arith.constant 0 : index
    %261 = vector.load %arg14[%c72, %c0_74] : memref<180x128xf32, #tpu.memory_space<vmem>>, vector<18x128xf32>
    %262 = vector.extract_strided_slice %261 {offsets = [0, 0], sizes = [16, 128], strides = [1, 1]} : vector<18x128xf32> to vector<16x128xf32>
    %263 = vector.extract_strided_slice %21 {offsets = [2, 0, 0], sizes = [1, 1, 128], strides = [1, 1, 1]} : vector<3x3x128xf32> to vector<1x1x128xf32>
    %264 = vector.shape_cast %263 : vector<1x1x128xf32> to vector<128xf32>
    %265 = vector.shape_cast %264 : vector<128xf32> to vector<1x128xf32>
    %266 = vector.broadcast %265 : vector<1x128xf32> to vector<16x128xf32>
    %267 = arith.mulf %262, %266 : vector<16x128xf32>
    %268 = arith.addf %260, %267 : vector<16x128xf32>
    %269 = vector.extract_strided_slice %261 {offsets = [1, 0], sizes = [16, 128], strides = [1, 1]} : vector<18x128xf32> to vector<16x128xf32>
    %270 = vector.extract_strided_slice %21 {offsets = [2, 1, 0], sizes = [1, 1, 128], strides = [1, 1, 1]} : vector<3x3x128xf32> to vector<1x1x128xf32>
    %271 = vector.shape_cast %270 : vector<1x1x128xf32> to vector<128xf32>
    %272 = vector.shape_cast %271 : vector<128xf32> to vector<1x128xf32>
    %273 = vector.broadcast %272 : vector<1x128xf32> to vector<16x128xf32>
    %274 = arith.mulf %269, %273 : vector<16x128xf32>
    %275 = arith.addf %268, %274 : vector<16x128xf32>
    %276 = vector.extract_strided_slice %261 {offsets = [2, 0], sizes = [16, 128], strides = [1, 1]} : vector<18x128xf32> to vector<16x128xf32>
    %277 = vector.extract_strided_slice %21 {offsets = [2, 2, 0], sizes = [1, 1, 128], strides = [1, 1, 1]} : vector<3x3x128xf32> to vector<1x1x128xf32>
    %278 = vector.shape_cast %277 : vector<1x1x128xf32> to vector<128xf32>
    %279 = vector.shape_cast %278 : vector<128xf32> to vector<1x128xf32>
    %280 = vector.broadcast %279 : vector<1x128xf32> to vector<16x128xf32>
    %281 = arith.mulf %276, %280 : vector<16x128xf32>
    %282 = arith.addf %275, %281 : vector<16x128xf32>
    %c0_75 = arith.constant 0 : index
    %c0_76 = arith.constant 0 : index
    %283 = vector.load %arg8[%c0_75, %c0_76] : memref<1x128xf32, #tpu.memory_space<vmem>>, vector<1x128xf32>
    %284 = vector.broadcast %283 : vector<1x128xf32> to vector<16x128xf32>
    %285 = arith.mulf %282, %284 : vector<16x128xf32>
    %c0_77 = arith.constant 0 : index
    %c0_78 = arith.constant 0 : index
    %286 = vector.load %arg9[%c0_77, %c0_78] : memref<1x128xf32, #tpu.memory_space<vmem>>, vector<1x128xf32>
    %287 = vector.broadcast %286 : vector<1x128xf32> to vector<16x128xf32>
    %288 = arith.addf %285, %287 : vector<16x128xf32>
    %cst_79 = arith.constant 0.000000e+00 : f32
    %cst_80 = arith.constant 6.000000e+00 : f32
    %289 = vector.broadcast %cst_79 : f32 to vector<16x128xf32>
    %290 = arith.maximumf %289, %288 : vector<16x128xf32>
    %291 = vector.broadcast %cst_80 : f32 to vector<16x128xf32>
    %292 = arith.minimumf %291, %290 : vector<16x128xf32>
    %c0_81 = arith.constant 0 : index
    %c0_82 = arith.constant 0 : index
    %293 = vector.load %arg10[%c0_81, %c0_82] : memref<128x128xf32, #tpu.memory_space<vmem>>, vector<128x128xf32>
    %cst_83 = arith.constant dense<0.000000e+00> : vector<16x128xf32>
    %294 = tpu.matmul %292, %293, %cst_83 {dimension_numbers = #tpu.dot_dimension_numbers<[1], [0], [0], [1], [0, 0, 1, 1], [], []>} : vector<16x128xf32>, vector<128x128xf32>, vector<16x128xf32> -> vector<16x128xf32>
    %c0_84 = arith.constant 0 : index
    %c0_85 = arith.constant 0 : index
    %295 = vector.load %arg11[%c0_84, %c0_85] : memref<1x128xf32, #tpu.memory_space<vmem>>, vector<1x128xf32>
    %296 = vector.broadcast %295 : vector<1x128xf32> to vector<16x128xf32>
    %297 = arith.mulf %294, %296 : vector<16x128xf32>
    %c0_86 = arith.constant 0 : index
    %c0_87 = arith.constant 0 : index
    %298 = vector.load %arg12[%c0_86, %c0_87] : memref<1x128xf32, #tpu.memory_space<vmem>>, vector<1x128xf32>
    %299 = vector.broadcast %298 : vector<1x128xf32> to vector<16x128xf32>
    %300 = arith.addf %297, %299 : vector<16x128xf32>
    %c8_i32_88 = arith.constant 8 : i32
    %301 = arith.muli %arg1, %c8_i32_88 : i32
    %c2_i32 = arith.constant 2 : i32
    %302 = arith.addi %301, %c2_i32 : i32
    %c1_i32_89 = arith.constant 1 : i32
    %303 = arith.addi %302, %c1_i32_89 : i32
    %c18_i32_90 = arith.constant 18 : i32
    %304 = arith.muli %303, %c18_i32_90 : i32
    %c1_i32_91 = arith.constant 1 : i32
    %305 = arith.addi %304, %c1_i32_91 : i32
    %c0_92 = arith.constant 0 : index
    %306 = arith.index_cast %305 : i32 to index
    %c0_93 = arith.constant 0 : index
    %307 = vector.load %arg2[%c0_92, %306, %c0_93] : memref<1x324x128xf32, #tpu.memory_space<vmem>>, vector<1x16x128xf32>
    %308 = vector.shape_cast %307 : vector<1x16x128xf32> to vector<16x128xf32>
    %309 = arith.addf %300, %308 : vector<16x128xf32>
    %c0_94 = arith.constant 0 : index
    %c2 = arith.constant 2 : index
    %c0_95 = arith.constant 0 : index
    %c0_96 = arith.constant 0 : index
    %310 = vector.load %arg13[%c0_94, %c2, %c0_95, %c0_96] : memref<1x8x16x128xf32, #tpu.memory_space<vmem>>, vector<1x1x16x128xf32>
    %311 = vector.shape_cast %310 : vector<1x1x16x128xf32> to vector<16x128xf32>
    %312 = vector.shape_cast %309 : vector<16x128xf32> to vector<1x1x16x128xf32>
    tpu.vector_store %arg13[%c0_94, %c2, %c0_95, %c0_96], %312 {strides = array<i32>} : memref<1x8x16x128xf32, #tpu.memory_space<vmem>>, vector<1x1x16x128xf32>,
    %cst_97 = arith.constant 0.000000e+00 : f32
    %313 = vector.broadcast %cst_97 : f32 to vector<16x128xf32>
    %c54_98 = arith.constant 54 : index
    %c0_99 = arith.constant 0 : index
    %314 = vector.load %arg14[%c54_98, %c0_99] : memref<180x128xf32, #tpu.memory_space<vmem>>, vector<18x128xf32>
    %315 = vector.extract_strided_slice %314 {offsets = [0, 0], sizes = [16, 128], strides = [1, 1]} : vector<18x128xf32> to vector<16x128xf32>
    %316 = vector.extract_strided_slice %21 {offsets = [0, 0, 0], sizes = [1, 1, 128], strides = [1, 1, 1]} : vector<3x3x128xf32> to vector<1x1x128xf32>
    %317 = vector.shape_cast %316 : vector<1x1x128xf32> to vector<128xf32>
    %318 = vector.shape_cast %317 : vector<128xf32> to vector<1x128xf32>
    %319 = vector.broadcast %318 : vector<1x128xf32> to vector<16x128xf32>
    %320 = arith.mulf %315, %319 : vector<16x128xf32>
    %321 = arith.addf %313, %320 : vector<16x128xf32>
    %322 = vector.extract_strided_slice %314 {offsets = [1, 0], sizes = [16, 128], strides = [1, 1]} : vector<18x128xf32> to vector<16x128xf32>
    %323 = vector.extract_strided_slice %21 {offsets = [0, 1, 0], sizes = [1, 1, 128], strides = [1, 1, 1]} : vector<3x3x128xf32> to vector<1x1x128xf32>
    %324 = vector.shape_cast %323 : vector<1x1x128xf32> to vector<128xf32>
    %325 = vector.shape_cast %324 : vector<128xf32> to vector<1x128xf32>
    %326 = vector.broadcast %325 : vector<1x128xf32> to vector<16x128xf32>
    %327 = arith.mulf %322, %326 : vector<16x128xf32>
    %328 = arith.addf %321, %327 : vector<16x128xf32>
    %329 = vector.extract_strided_slice %314 {offsets = [2, 0], sizes = [16, 128], strides = [1, 1]} : vector<18x128xf32> to vector<16x128xf32>
    %330 = vector.extract_strided_slice %21 {offsets = [0, 2, 0], sizes = [1, 1, 128], strides = [1, 1, 1]} : vector<3x3x128xf32> to vector<1x1x128xf32>
    %331 = vector.shape_cast %330 : vector<1x1x128xf32> to vector<128xf32>
    %332 = vector.shape_cast %331 : vector<128xf32> to vector<1x128xf32>
    %333 = vector.broadcast %332 : vector<1x128xf32> to vector<16x128xf32>
    %334 = arith.mulf %329, %333 : vector<16x128xf32>
    %335 = arith.addf %328, %334 : vector<16x128xf32>
    %c72_100 = arith.constant 72 : index
    %c0_101 = arith.constant 0 : index
    %336 = vector.load %arg14[%c72_100, %c0_101] : memref<180x128xf32, #tpu.memory_space<vmem>>, vector<18x128xf32>
    %337 = vector.extract_strided_slice %336 {offsets = [0, 0], sizes = [16, 128], strides = [1, 1]} : vector<18x128xf32> to vector<16x128xf32>
    %338 = vector.extract_strided_slice %21 {offsets = [1, 0, 0], sizes = [1, 1, 128], strides = [1, 1, 1]} : vector<3x3x128xf32> to vector<1x1x128xf32>
    %339 = vector.shape_cast %338 : vector<1x1x128xf32> to vector<128xf32>
    %340 = vector.shape_cast %339 : vector<128xf32> to vector<1x128xf32>
    %341 = vector.broadcast %340 : vector<1x128xf32> to vector<16x128xf32>
    %342 = arith.mulf %337, %341 : vector<16x128xf32>
    %343 = arith.addf %335, %342 : vector<16x128xf32>
    %344 = vector.extract_strided_slice %336 {offsets = [1, 0], sizes = [16, 128], strides = [1, 1]} : vector<18x128xf32> to vector<16x128xf32>
    %345 = vector.extract_strided_slice %21 {offsets = [1, 1, 0], sizes = [1, 1, 128], strides = [1, 1, 1]} : vector<3x3x128xf32> to vector<1x1x128xf32>
    %346 = vector.shape_cast %345 : vector<1x1x128xf32> to vector<128xf32>
    %347 = vector.shape_cast %346 : vector<128xf32> to vector<1x128xf32>
    %348 = vector.broadcast %347 : vector<1x128xf32> to vector<16x128xf32>
    %349 = arith.mulf %344, %348 : vector<16x128xf32>
    %350 = arith.addf %343, %349 : vector<16x128xf32>
    %351 = vector.extract_strided_slice %336 {offsets = [2, 0], sizes = [16, 128], strides = [1, 1]} : vector<18x128xf32> to vector<16x128xf32>
    %352 = vector.extract_strided_slice %21 {offsets = [1, 2, 0], sizes = [1, 1, 128], strides = [1, 1, 1]} : vector<3x3x128xf32> to vector<1x1x128xf32>
    %353 = vector.shape_cast %352 : vector<1x1x128xf32> to vector<128xf32>
    %354 = vector.shape_cast %353 : vector<128xf32> to vector<1x128xf32>
    %355 = vector.broadcast %354 : vector<1x128xf32> to vector<16x128xf32>
    %356 = arith.mulf %351, %355 : vector<16x128xf32>
    %357 = arith.addf %350, %356 : vector<16x128xf32>
    %c90 = arith.constant 90 : index
    %c0_102 = arith.constant 0 : index
    %358 = vector.load %arg14[%c90, %c0_102] : memref<180x128xf32, #tpu.memory_space<vmem>>, vector<18x128xf32>
    %359 = vector.extract_strided_slice %358 {offsets = [0, 0], sizes = [16, 128], strides = [1, 1]} : vector<18x128xf32> to vector<16x128xf32>
    %360 = vector.extract_strided_slice %21 {offsets = [2, 0, 0], sizes = [1, 1, 128], strides = [1, 1, 1]} : vector<3x3x128xf32> to vector<1x1x128xf32>
    %361 = vector.shape_cast %360 : vector<1x1x128xf32> to vector<128xf32>
    %362 = vector.shape_cast %361 : vector<128xf32> to vector<1x128xf32>
    %363 = vector.broadcast %362 : vector<1x128xf32> to vector<16x128xf32>
    %364 = arith.mulf %359, %363 : vector<16x128xf32>
    %365 = arith.addf %357, %364 : vector<16x128xf32>
    %366 = vector.extract_strided_slice %358 {offsets = [1, 0], sizes = [16, 128], strides = [1, 1]} : vector<18x128xf32> to vector<16x128xf32>
    %367 = vector.extract_strided_slice %21 {offsets = [2, 1, 0], sizes = [1, 1, 128], strides = [1, 1, 1]} : vector<3x3x128xf32> to vector<1x1x128xf32>
    %368 = vector.shape_cast %367 : vector<1x1x128xf32> to vector<128xf32>
    %369 = vector.shape_cast %368 : vector<128xf32> to vector<1x128xf32>
    %370 = vector.broadcast %369 : vector<1x128xf32> to vector<16x128xf32>
    %371 = arith.mulf %366, %370 : vector<16x128xf32>
    %372 = arith.addf %365, %371 : vector<16x128xf32>
    %373 = vector.extract_strided_slice %358 {offsets = [2, 0], sizes = [16, 128], strides = [1, 1]} : vector<18x128xf32> to vector<16x128xf32>
    %374 = vector.extract_strided_slice %21 {offsets = [2, 2, 0], sizes = [1, 1, 128], strides = [1, 1, 1]} : vector<3x3x128xf32> to vector<1x1x128xf32>
    %375 = vector.shape_cast %374 : vector<1x1x128xf32> to vector<128xf32>
    %376 = vector.shape_cast %375 : vector<128xf32> to vector<1x128xf32>
    %377 = vector.broadcast %376 : vector<1x128xf32> to vector<16x128xf32>
    %378 = arith.mulf %373, %377 : vector<16x128xf32>
    %379 = arith.addf %372, %378 : vector<16x128xf32>
    %c0_103 = arith.constant 0 : index
    %c0_104 = arith.constant 0 : index
    %380 = vector.load %arg8[%c0_103, %c0_104] : memref<1x128xf32, #tpu.memory_space<vmem>>, vector<1x128xf32>
    %381 = vector.broadcast %380 : vector<1x128xf32> to vector<16x128xf32>
    %382 = arith.mulf %379, %381 : vector<16x128xf32>
    %c0_105 = arith.constant 0 : index
    %c0_106 = arith.constant 0 : index
    %383 = vector.load %arg9[%c0_105, %c0_106] : memref<1x128xf32, #tpu.memory_space<vmem>>, vector<1x128xf32>
    %384 = vector.broadcast %383 : vector<1x128xf32> to vector<16x128xf32>
    %385 = arith.addf %382, %384 : vector<16x128xf32>
    %cst_107 = arith.constant 0.000000e+00 : f32
    %cst_108 = arith.constant 6.000000e+00 : f32
    %386 = vector.broadcast %cst_107 : f32 to vector<16x128xf32>
    %387 = arith.maximumf %386, %385 : vector<16x128xf32>
    %388 = vector.broadcast %cst_108 : f32 to vector<16x128xf32>
    %389 = arith.minimumf %388, %387 : vector<16x128xf32>
    %c0_109 = arith.constant 0 : index
    %c0_110 = arith.constant 0 : index
    %390 = vector.load %arg10[%c0_109, %c0_110] : memref<128x128xf32, #tpu.memory_space<vmem>>, vector<128x128xf32>
    %cst_111 = arith.constant dense<0.000000e+00> : vector<16x128xf32>
    %391 = tpu.matmul %389, %390, %cst_111 {dimension_numbers = #tpu.dot_dimension_numbers<[1], [0], [0], [1], [0, 0, 1, 1], [], []>} : vector<16x128xf32>, vector<128x128xf32>, vector<16x128xf32> -> vector<16x128xf32>
    %c0_112 = arith.constant 0 : index
    %c0_113 = arith.constant 0 : index
    %392 = vector.load %arg11[%c0_112, %c0_113] : memref<1x128xf32, #tpu.memory_space<vmem>>, vector<1x128xf32>
    %393 = vector.broadcast %392 : vector<1x128xf32> to vector<16x128xf32>
    %394 = arith.mulf %391, %393 : vector<16x128xf32>
    %c0_114 = arith.constant 0 : index
    %c0_115 = arith.constant 0 : index
    %395 = vector.load %arg12[%c0_114, %c0_115] : memref<1x128xf32, #tpu.memory_space<vmem>>, vector<1x128xf32>
    %396 = vector.broadcast %395 : vector<1x128xf32> to vector<16x128xf32>
    %397 = arith.addf %394, %396 : vector<16x128xf32>
    %c8_i32_116 = arith.constant 8 : i32
    %398 = arith.muli %arg1, %c8_i32_116 : i32
    %c3_i32 = arith.constant 3 : i32
    %399 = arith.addi %398, %c3_i32 : i32
    %c1_i32_117 = arith.constant 1 : i32
    %400 = arith.addi %399, %c1_i32_117 : i32
    %c18_i32_118 = arith.constant 18 : i32
    %401 = arith.muli %400, %c18_i32_118 : i32
    %c1_i32_119 = arith.constant 1 : i32
    %402 = arith.addi %401, %c1_i32_119 : i32
    %c0_120 = arith.constant 0 : index
    %403 = arith.index_cast %402 : i32 to index
    %c0_121 = arith.constant 0 : index
    %404 = vector.load %arg2[%c0_120, %403, %c0_121] : memref<1x324x128xf32, #tpu.memory_space<vmem>>, vector<1x16x128xf32>
    %405 = vector.shape_cast %404 : vector<1x16x128xf32> to vector<16x128xf32>
    %406 = arith.addf %397, %405 : vector<16x128xf32>
    %c0_122 = arith.constant 0 : index
    %c3 = arith.constant 3 : index
    %c0_123 = arith.constant 0 : index
    %c0_124 = arith.constant 0 : index
    %407 = vector.load %arg13[%c0_122, %c3, %c0_123, %c0_124] : memref<1x8x16x128xf32, #tpu.memory_space<vmem>>, vector<1x1x16x128xf32>
    %408 = vector.shape_cast %407 : vector<1x1x16x128xf32> to vector<16x128xf32>
    %409 = vector.shape_cast %406 : vector<16x128xf32> to vector<1x1x16x128xf32>
    tpu.vector_store %arg13[%c0_122, %c3, %c0_123, %c0_124], %409 {strides = array<i32>} : memref<1x8x16x128xf32, #tpu.memory_space<vmem>>, vector<1x1x16x128xf32>,
    %cst_125 = arith.constant 0.000000e+00 : f32
    %410 = vector.broadcast %cst_125 : f32 to vector<16x128xf32>
    %c72_126 = arith.constant 72 : index
    %c0_127 = arith.constant 0 : index
    %411 = vector.load %arg14[%c72_126, %c0_127] : memref<180x128xf32, #tpu.memory_space<vmem>>, vector<18x128xf32>
    %412 = vector.extract_strided_slice %411 {offsets = [0, 0], sizes = [16, 128], strides = [1, 1]} : vector<18x128xf32> to vector<16x128xf32>
    %413 = vector.extract_strided_slice %21 {offsets = [0, 0, 0], sizes = [1, 1, 128], strides = [1, 1, 1]} : vector<3x3x128xf32> to vector<1x1x128xf32>
    %414 = vector.shape_cast %413 : vector<1x1x128xf32> to vector<128xf32>
    %415 = vector.shape_cast %414 : vector<128xf32> to vector<1x128xf32>
    %416 = vector.broadcast %415 : vector<1x128xf32> to vector<16x128xf32>
    %417 = arith.mulf %412, %416 : vector<16x128xf32>
    %418 = arith.addf %410, %417 : vector<16x128xf32>
    %419 = vector.extract_strided_slice %411 {offsets = [1, 0], sizes = [16, 128], strides = [1, 1]} : vector<18x128xf32> to vector<16x128xf32>
    %420 = vector.extract_strided_slice %21 {offsets = [0, 1, 0], sizes = [1, 1, 128], strides = [1, 1, 1]} : vector<3x3x128xf32> to vector<1x1x128xf32>
    %421 = vector.shape_cast %420 : vector<1x1x128xf32> to vector<128xf32>
    %422 = vector.shape_cast %421 : vector<128xf32> to vector<1x128xf32>
    %423 = vector.broadcast %422 : vector<1x128xf32> to vector<16x128xf32>
    %424 = arith.mulf %419, %423 : vector<16x128xf32>
    %425 = arith.addf %418, %424 : vector<16x128xf32>
    %426 = vector.extract_strided_slice %411 {offsets = [2, 0], sizes = [16, 128], strides = [1, 1]} : vector<18x128xf32> to vector<16x128xf32>
    %427 = vector.extract_strided_slice %21 {offsets = [0, 2, 0], sizes = [1, 1, 128], strides = [1, 1, 1]} : vector<3x3x128xf32> to vector<1x1x128xf32>
    %428 = vector.shape_cast %427 : vector<1x1x128xf32> to vector<128xf32>
    %429 = vector.shape_cast %428 : vector<128xf32> to vector<1x128xf32>
    %430 = vector.broadcast %429 : vector<1x128xf32> to vector<16x128xf32>
    %431 = arith.mulf %426, %430 : vector<16x128xf32>
    %432 = arith.addf %425, %431 : vector<16x128xf32>
    %c90_128 = arith.constant 90 : index
    %c0_129 = arith.constant 0 : index
    %433 = vector.load %arg14[%c90_128, %c0_129] : memref<180x128xf32, #tpu.memory_space<vmem>>, vector<18x128xf32>
    %434 = vector.extract_strided_slice %433 {offsets = [0, 0], sizes = [16, 128], strides = [1, 1]} : vector<18x128xf32> to vector<16x128xf32>
    %435 = vector.extract_strided_slice %21 {offsets = [1, 0, 0], sizes = [1, 1, 128], strides = [1, 1, 1]} : vector<3x3x128xf32> to vector<1x1x128xf32>
    %436 = vector.shape_cast %435 : vector<1x1x128xf32> to vector<128xf32>
    %437 = vector.shape_cast %436 : vector<128xf32> to vector<1x128xf32>
    %438 = vector.broadcast %437 : vector<1x128xf32> to vector<16x128xf32>
    %439 = arith.mulf %434, %438 : vector<16x128xf32>
    %440 = arith.addf %432, %439 : vector<16x128xf32>
    %441 = vector.extract_strided_slice %433 {offsets = [1, 0], sizes = [16, 128], strides = [1, 1]} : vector<18x128xf32> to vector<16x128xf32>
    %442 = vector.extract_strided_slice %21 {offsets = [1, 1, 0], sizes = [1, 1, 128], strides = [1, 1, 1]} : vector<3x3x128xf32> to vector<1x1x128xf32>
    %443 = vector.shape_cast %442 : vector<1x1x128xf32> to vector<128xf32>
    %444 = vector.shape_cast %443 : vector<128xf32> to vector<1x128xf32>
    %445 = vector.broadcast %444 : vector<1x128xf32> to vector<16x128xf32>
    %446 = arith.mulf %441, %445 : vector<16x128xf32>
    %447 = arith.addf %440, %446 : vector<16x128xf32>
    %448 = vector.extract_strided_slice %433 {offsets = [2, 0], sizes = [16, 128], strides = [1, 1]} : vector<18x128xf32> to vector<16x128xf32>
    %449 = vector.extract_strided_slice %21 {offsets = [1, 2, 0], sizes = [1, 1, 128], strides = [1, 1, 1]} : vector<3x3x128xf32> to vector<1x1x128xf32>
    %450 = vector.shape_cast %449 : vector<1x1x128xf32> to vector<128xf32>
    %451 = vector.shape_cast %450 : vector<128xf32> to vector<1x128xf32>
    %452 = vector.broadcast %451 : vector<1x128xf32> to vector<16x128xf32>
    %453 = arith.mulf %448, %452 : vector<16x128xf32>
    %454 = arith.addf %447, %453 : vector<16x128xf32>
    %c108 = arith.constant 108 : index
    %c0_130 = arith.constant 0 : index
    %455 = vector.load %arg14[%c108, %c0_130] : memref<180x128xf32, #tpu.memory_space<vmem>>, vector<18x128xf32>
    %456 = vector.extract_strided_slice %455 {offsets = [0, 0], sizes = [16, 128], strides = [1, 1]} : vector<18x128xf32> to vector<16x128xf32>
    %457 = vector.extract_strided_slice %21 {offsets = [2, 0, 0], sizes = [1, 1, 128], strides = [1, 1, 1]} : vector<3x3x128xf32> to vector<1x1x128xf32>
    %458 = vector.shape_cast %457 : vector<1x1x128xf32> to vector<128xf32>
    %459 = vector.shape_cast %458 : vector<128xf32> to vector<1x128xf32>
    %460 = vector.broadcast %459 : vector<1x128xf32> to vector<16x128xf32>
    %461 = arith.mulf %456, %460 : vector<16x128xf32>
    %462 = arith.addf %454, %461 : vector<16x128xf32>
    %463 = vector.extract_strided_slice %455 {offsets = [1, 0], sizes = [16, 128], strides = [1, 1]} : vector<18x128xf32> to vector<16x128xf32>
    %464 = vector.extract_strided_slice %21 {offsets = [2, 1, 0], sizes = [1, 1, 128], strides = [1, 1, 1]} : vector<3x3x128xf32> to vector<1x1x128xf32>
    %465 = vector.shape_cast %464 : vector<1x1x128xf32> to vector<128xf32>
    %466 = vector.shape_cast %465 : vector<128xf32> to vector<1x128xf32>
    %467 = vector.broadcast %466 : vector<1x128xf32> to vector<16x128xf32>
    %468 = arith.mulf %463, %467 : vector<16x128xf32>
    %469 = arith.addf %462, %468 : vector<16x128xf32>
    %470 = vector.extract_strided_slice %455 {offsets = [2, 0], sizes = [16, 128], strides = [1, 1]} : vector<18x128xf32> to vector<16x128xf32>
    %471 = vector.extract_strided_slice %21 {offsets = [2, 2, 0], sizes = [1, 1, 128], strides = [1, 1, 1]} : vector<3x3x128xf32> to vector<1x1x128xf32>
    %472 = vector.shape_cast %471 : vector<1x1x128xf32> to vector<128xf32>
    %473 = vector.shape_cast %472 : vector<128xf32> to vector<1x128xf32>
    %474 = vector.broadcast %473 : vector<1x128xf32> to vector<16x128xf32>
    %475 = arith.mulf %470, %474 : vector<16x128xf32>
    %476 = arith.addf %469, %475 : vector<16x128xf32>
    %c0_131 = arith.constant 0 : index
    %c0_132 = arith.constant 0 : index
    %477 = vector.load %arg8[%c0_131, %c0_132] : memref<1x128xf32, #tpu.memory_space<vmem>>, vector<1x128xf32>
    %478 = vector.broadcast %477 : vector<1x128xf32> to vector<16x128xf32>
    %479 = arith.mulf %476, %478 : vector<16x128xf32>
    %c0_133 = arith.constant 0 : index
    %c0_134 = arith.constant 0 : index
    %480 = vector.load %arg9[%c0_133, %c0_134] : memref<1x128xf32, #tpu.memory_space<vmem>>, vector<1x128xf32>
    %481 = vector.broadcast %480 : vector<1x128xf32> to vector<16x128xf32>
    %482 = arith.addf %479, %481 : vector<16x128xf32>
    %cst_135 = arith.constant 0.000000e+00 : f32
    %cst_136 = arith.constant 6.000000e+00 : f32
    %483 = vector.broadcast %cst_135 : f32 to vector<16x128xf32>
    %484 = arith.maximumf %483, %482 : vector<16x128xf32>
    %485 = vector.broadcast %cst_136 : f32 to vector<16x128xf32>
    %486 = arith.minimumf %485, %484 : vector<16x128xf32>
    %c0_137 = arith.constant 0 : index
    %c0_138 = arith.constant 0 : index
    %487 = vector.load %arg10[%c0_137, %c0_138] : memref<128x128xf32, #tpu.memory_space<vmem>>, vector<128x128xf32>
    %cst_139 = arith.constant dense<0.000000e+00> : vector<16x128xf32>
    %488 = tpu.matmul %486, %487, %cst_139 {dimension_numbers = #tpu.dot_dimension_numbers<[1], [0], [0], [1], [0, 0, 1, 1], [], []>} : vector<16x128xf32>, vector<128x128xf32>, vector<16x128xf32> -> vector<16x128xf32>
    %c0_140 = arith.constant 0 : index
    %c0_141 = arith.constant 0 : index
    %489 = vector.load %arg11[%c0_140, %c0_141] : memref<1x128xf32, #tpu.memory_space<vmem>>, vector<1x128xf32>
    %490 = vector.broadcast %489 : vector<1x128xf32> to vector<16x128xf32>
    %491 = arith.mulf %488, %490 : vector<16x128xf32>
    %c0_142 = arith.constant 0 : index
    %c0_143 = arith.constant 0 : index
    %492 = vector.load %arg12[%c0_142, %c0_143] : memref<1x128xf32, #tpu.memory_space<vmem>>, vector<1x128xf32>
    %493 = vector.broadcast %492 : vector<1x128xf32> to vector<16x128xf32>
    %494 = arith.addf %491, %493 : vector<16x128xf32>
    %c8_i32_144 = arith.constant 8 : i32
    %495 = arith.muli %arg1, %c8_i32_144 : i32
    %c4_i32 = arith.constant 4 : i32
    %496 = arith.addi %495, %c4_i32 : i32
    %c1_i32_145 = arith.constant 1 : i32
    %497 = arith.addi %496, %c1_i32_145 : i32
    %c18_i32_146 = arith.constant 18 : i32
    %498 = arith.muli %497, %c18_i32_146 : i32
    %c1_i32_147 = arith.constant 1 : i32
    %499 = arith.addi %498, %c1_i32_147 : i32
    %c0_148 = arith.constant 0 : index
    %500 = arith.index_cast %499 : i32 to index
    %c0_149 = arith.constant 0 : index
    %501 = vector.load %arg2[%c0_148, %500, %c0_149] : memref<1x324x128xf32, #tpu.memory_space<vmem>>, vector<1x16x128xf32>
    %502 = vector.shape_cast %501 : vector<1x16x128xf32> to vector<16x128xf32>
    %503 = arith.addf %494, %502 : vector<16x128xf32>
    %c0_150 = arith.constant 0 : index
    %c4 = arith.constant 4 : index
    %c0_151 = arith.constant 0 : index
    %c0_152 = arith.constant 0 : index
    %504 = vector.load %arg13[%c0_150, %c4, %c0_151, %c0_152] : memref<1x8x16x128xf32, #tpu.memory_space<vmem>>, vector<1x1x16x128xf32>
    %505 = vector.shape_cast %504 : vector<1x1x16x128xf32> to vector<16x128xf32>
    %506 = vector.shape_cast %503 : vector<16x128xf32> to vector<1x1x16x128xf32>
    tpu.vector_store %arg13[%c0_150, %c4, %c0_151, %c0_152], %506 {strides = array<i32>} : memref<1x8x16x128xf32, #tpu.memory_space<vmem>>, vector<1x1x16x128xf32>,
    %cst_153 = arith.constant 0.000000e+00 : f32
    %507 = vector.broadcast %cst_153 : f32 to vector<16x128xf32>
    %c90_154 = arith.constant 90 : index
    %c0_155 = arith.constant 0 : index
    %508 = vector.load %arg14[%c90_154, %c0_155] : memref<180x128xf32, #tpu.memory_space<vmem>>, vector<18x128xf32>
    %509 = vector.extract_strided_slice %508 {offsets = [0, 0], sizes = [16, 128], strides = [1, 1]} : vector<18x128xf32> to vector<16x128xf32>
    %510 = vector.extract_strided_slice %21 {offsets = [0, 0, 0], sizes = [1, 1, 128], strides = [1, 1, 1]} : vector<3x3x128xf32> to vector<1x1x128xf32>
    %511 = vector.shape_cast %510 : vector<1x1x128xf32> to vector<128xf32>
    %512 = vector.shape_cast %511 : vector<128xf32> to vector<1x128xf32>
    %513 = vector.broadcast %512 : vector<1x128xf32> to vector<16x128xf32>
    %514 = arith.mulf %509, %513 : vector<16x128xf32>
    %515 = arith.addf %507, %514 : vector<16x128xf32>
    %516 = vector.extract_strided_slice %508 {offsets = [1, 0], sizes = [16, 128], strides = [1, 1]} : vector<18x128xf32> to vector<16x128xf32>
    %517 = vector.extract_strided_slice %21 {offsets = [0, 1, 0], sizes = [1, 1, 128], strides = [1, 1, 1]} : vector<3x3x128xf32> to vector<1x1x128xf32>
    %518 = vector.shape_cast %517 : vector<1x1x128xf32> to vector<128xf32>
    %519 = vector.shape_cast %518 : vector<128xf32> to vector<1x128xf32>
    %520 = vector.broadcast %519 : vector<1x128xf32> to vector<16x128xf32>
    %521 = arith.mulf %516, %520 : vector<16x128xf32>
    %522 = arith.addf %515, %521 : vector<16x128xf32>
    %523 = vector.extract_strided_slice %508 {offsets = [2, 0], sizes = [16, 128], strides = [1, 1]} : vector<18x128xf32> to vector<16x128xf32>
    %524 = vector.extract_strided_slice %21 {offsets = [0, 2, 0], sizes = [1, 1, 128], strides = [1, 1, 1]} : vector<3x3x128xf32> to vector<1x1x128xf32>
    %525 = vector.shape_cast %524 : vector<1x1x128xf32> to vector<128xf32>
    %526 = vector.shape_cast %525 : vector<128xf32> to vector<1x128xf32>
    %527 = vector.broadcast %526 : vector<1x128xf32> to vector<16x128xf32>
    %528 = arith.mulf %523, %527 : vector<16x128xf32>
    %529 = arith.addf %522, %528 : vector<16x128xf32>
    %c108_156 = arith.constant 108 : index
    %c0_157 = arith.constant 0 : index
    %530 = vector.load %arg14[%c108_156, %c0_157] : memref<180x128xf32, #tpu.memory_space<vmem>>, vector<18x128xf32>
    %531 = vector.extract_strided_slice %530 {offsets = [0, 0], sizes = [16, 128], strides = [1, 1]} : vector<18x128xf32> to vector<16x128xf32>
    %532 = vector.extract_strided_slice %21 {offsets = [1, 0, 0], sizes = [1, 1, 128], strides = [1, 1, 1]} : vector<3x3x128xf32> to vector<1x1x128xf32>
    %533 = vector.shape_cast %532 : vector<1x1x128xf32> to vector<128xf32>
    %534 = vector.shape_cast %533 : vector<128xf32> to vector<1x128xf32>
    %535 = vector.broadcast %534 : vector<1x128xf32> to vector<16x128xf32>
    %536 = arith.mulf %531, %535 : vector<16x128xf32>
    %537 = arith.addf %529, %536 : vector<16x128xf32>
    %538 = vector.extract_strided_slice %530 {offsets = [1, 0], sizes = [16, 128], strides = [1, 1]} : vector<18x128xf32> to vector<16x128xf32>
    %539 = vector.extract_strided_slice %21 {offsets = [1, 1, 0], sizes = [1, 1, 128], strides = [1, 1, 1]} : vector<3x3x128xf32> to vector<1x1x128xf32>
    %540 = vector.shape_cast %539 : vector<1x1x128xf32> to vector<128xf32>
    %541 = vector.shape_cast %540 : vector<128xf32> to vector<1x128xf32>
    %542 = vector.broadcast %541 : vector<1x128xf32> to vector<16x128xf32>
    %543 = arith.mulf %538, %542 : vector<16x128xf32>
    %544 = arith.addf %537, %543 : vector<16x128xf32>
    %545 = vector.extract_strided_slice %530 {offsets = [2, 0], sizes = [16, 128], strides = [1, 1]} : vector<18x128xf32> to vector<16x128xf32>
    %546 = vector.extract_strided_slice %21 {offsets = [1, 2, 0], sizes = [1, 1, 128], strides = [1, 1, 1]} : vector<3x3x128xf32> to vector<1x1x128xf32>
    %547 = vector.shape_cast %546 : vector<1x1x128xf32> to vector<128xf32>
    %548 = vector.shape_cast %547 : vector<128xf32> to vector<1x128xf32>
    %549 = vector.broadcast %548 : vector<1x128xf32> to vector<16x128xf32>
    %550 = arith.mulf %545, %549 : vector<16x128xf32>
    %551 = arith.addf %544, %550 : vector<16x128xf32>
    %c126 = arith.constant 126 : index
    %c0_158 = arith.constant 0 : index
    %552 = vector.load %arg14[%c126, %c0_158] : memref<180x128xf32, #tpu.memory_space<vmem>>, vector<18x128xf32>
    %553 = vector.extract_strided_slice %552 {offsets = [0, 0], sizes = [16, 128], strides = [1, 1]} : vector<18x128xf32> to vector<16x128xf32>
    %554 = vector.extract_strided_slice %21 {offsets = [2, 0, 0], sizes = [1, 1, 128], strides = [1, 1, 1]} : vector<3x3x128xf32> to vector<1x1x128xf32>
    %555 = vector.shape_cast %554 : vector<1x1x128xf32> to vector<128xf32>
    %556 = vector.shape_cast %555 : vector<128xf32> to vector<1x128xf32>
    %557 = vector.broadcast %556 : vector<1x128xf32> to vector<16x128xf32>
    %558 = arith.mulf %553, %557 : vector<16x128xf32>
    %559 = arith.addf %551, %558 : vector<16x128xf32>
    %560 = vector.extract_strided_slice %552 {offsets = [1, 0], sizes = [16, 128], strides = [1, 1]} : vector<18x128xf32> to vector<16x128xf32>
    %561 = vector.extract_strided_slice %21 {offsets = [2, 1, 0], sizes = [1, 1, 128], strides = [1, 1, 1]} : vector<3x3x128xf32> to vector<1x1x128xf32>
    %562 = vector.shape_cast %561 : vector<1x1x128xf32> to vector<128xf32>
    %563 = vector.shape_cast %562 : vector<128xf32> to vector<1x128xf32>
    %564 = vector.broadcast %563 : vector<1x128xf32> to vector<16x128xf32>
    %565 = arith.mulf %560, %564 : vector<16x128xf32>
    %566 = arith.addf %559, %565 : vector<16x128xf32>
    %567 = vector.extract_strided_slice %552 {offsets = [2, 0], sizes = [16, 128], strides = [1, 1]} : vector<18x128xf32> to vector<16x128xf32>
    %568 = vector.extract_strided_slice %21 {offsets = [2, 2, 0], sizes = [1, 1, 128], strides = [1, 1, 1]} : vector<3x3x128xf32> to vector<1x1x128xf32>
    %569 = vector.shape_cast %568 : vector<1x1x128xf32> to vector<128xf32>
    %570 = vector.shape_cast %569 : vector<128xf32> to vector<1x128xf32>
    %571 = vector.broadcast %570 : vector<1x128xf32> to vector<16x128xf32>
    %572 = arith.mulf %567, %571 : vector<16x128xf32>
    %573 = arith.addf %566, %572 : vector<16x128xf32>
    %c0_159 = arith.constant 0 : index
    %c0_160 = arith.constant 0 : index
    %574 = vector.load %arg8[%c0_159, %c0_160] : memref<1x128xf32, #tpu.memory_space<vmem>>, vector<1x128xf32>
    %575 = vector.broadcast %574 : vector<1x128xf32> to vector<16x128xf32>
    %576 = arith.mulf %573, %575 : vector<16x128xf32>
    %c0_161 = arith.constant 0 : index
    %c0_162 = arith.constant 0 : index
    %577 = vector.load %arg9[%c0_161, %c0_162] : memref<1x128xf32, #tpu.memory_space<vmem>>, vector<1x128xf32>
    %578 = vector.broadcast %577 : vector<1x128xf32> to vector<16x128xf32>
    %579 = arith.addf %576, %578 : vector<16x128xf32>
    %cst_163 = arith.constant 0.000000e+00 : f32
    %cst_164 = arith.constant 6.000000e+00 : f32
    %580 = vector.broadcast %cst_163 : f32 to vector<16x128xf32>
    %581 = arith.maximumf %580, %579 : vector<16x128xf32>
    %582 = vector.broadcast %cst_164 : f32 to vector<16x128xf32>
    %583 = arith.minimumf %582, %581 : vector<16x128xf32>
    %c0_165 = arith.constant 0 : index
    %c0_166 = arith.constant 0 : index
    %584 = vector.load %arg10[%c0_165, %c0_166] : memref<128x128xf32, #tpu.memory_space<vmem>>, vector<128x128xf32>
    %cst_167 = arith.constant dense<0.000000e+00> : vector<16x128xf32>
    %585 = tpu.matmul %583, %584, %cst_167 {dimension_numbers = #tpu.dot_dimension_numbers<[1], [0], [0], [1], [0, 0, 1, 1], [], []>} : vector<16x128xf32>, vector<128x128xf32>, vector<16x128xf32> -> vector<16x128xf32>
    %c0_168 = arith.constant 0 : index
    %c0_169 = arith.constant 0 : index
    %586 = vector.load %arg11[%c0_168, %c0_169] : memref<1x128xf32, #tpu.memory_space<vmem>>, vector<1x128xf32>
    %587 = vector.broadcast %586 : vector<1x128xf32> to vector<16x128xf32>
    %588 = arith.mulf %585, %587 : vector<16x128xf32>
    %c0_170 = arith.constant 0 : index
    %c0_171 = arith.constant 0 : index
    %589 = vector.load %arg12[%c0_170, %c0_171] : memref<1x128xf32, #tpu.memory_space<vmem>>, vector<1x128xf32>
    %590 = vector.broadcast %589 : vector<1x128xf32> to vector<16x128xf32>
    %591 = arith.addf %588, %590 : vector<16x128xf32>
    %c8_i32_172 = arith.constant 8 : i32
    %592 = arith.muli %arg1, %c8_i32_172 : i32
    %c5_i32 = arith.constant 5 : i32
    %593 = arith.addi %592, %c5_i32 : i32
    %c1_i32_173 = arith.constant 1 : i32
    %594 = arith.addi %593, %c1_i32_173 : i32
    %c18_i32_174 = arith.constant 18 : i32
    %595 = arith.muli %594, %c18_i32_174 : i32
    %c1_i32_175 = arith.constant 1 : i32
    %596 = arith.addi %595, %c1_i32_175 : i32
    %c0_176 = arith.constant 0 : index
    %597 = arith.index_cast %596 : i32 to index
    %c0_177 = arith.constant 0 : index
    %598 = vector.load %arg2[%c0_176, %597, %c0_177] : memref<1x324x128xf32, #tpu.memory_space<vmem>>, vector<1x16x128xf32>
    %599 = vector.shape_cast %598 : vector<1x16x128xf32> to vector<16x128xf32>
    %600 = arith.addf %591, %599 : vector<16x128xf32>
    %c0_178 = arith.constant 0 : index
    %c5 = arith.constant 5 : index
    %c0_179 = arith.constant 0 : index
    %c0_180 = arith.constant 0 : index
    %601 = vector.load %arg13[%c0_178, %c5, %c0_179, %c0_180] : memref<1x8x16x128xf32, #tpu.memory_space<vmem>>, vector<1x1x16x128xf32>
    %602 = vector.shape_cast %601 : vector<1x1x16x128xf32> to vector<16x128xf32>
    %603 = vector.shape_cast %600 : vector<16x128xf32> to vector<1x1x16x128xf32>
    tpu.vector_store %arg13[%c0_178, %c5, %c0_179, %c0_180], %603 {strides = array<i32>} : memref<1x8x16x128xf32, #tpu.memory_space<vmem>>, vector<1x1x16x128xf32>,
    %cst_181 = arith.constant 0.000000e+00 : f32
    %604 = vector.broadcast %cst_181 : f32 to vector<16x128xf32>
    %c108_182 = arith.constant 108 : index
    %c0_183 = arith.constant 0 : index
    %605 = vector.load %arg14[%c108_182, %c0_183] : memref<180x128xf32, #tpu.memory_space<vmem>>, vector<18x128xf32>
    %606 = vector.extract_strided_slice %605 {offsets = [0, 0], sizes = [16, 128], strides = [1, 1]} : vector<18x128xf32> to vector<16x128xf32>
    %607 = vector.extract_strided_slice %21 {offsets = [0, 0, 0], sizes = [1, 1, 128], strides = [1, 1, 1]} : vector<3x3x128xf32> to vector<1x1x128xf32>
    %608 = vector.shape_cast %607 : vector<1x1x128xf32> to vector<128xf32>
    %609 = vector.shape_cast %608 : vector<128xf32> to vector<1x128xf32>
    %610 = vector.broadcast %609 : vector<1x128xf32> to vector<16x128xf32>
    %611 = arith.mulf %606, %610 : vector<16x128xf32>
    %612 = arith.addf %604, %611 : vector<16x128xf32>
    %613 = vector.extract_strided_slice %605 {offsets = [1, 0], sizes = [16, 128], strides = [1, 1]} : vector<18x128xf32> to vector<16x128xf32>
    %614 = vector.extract_strided_slice %21 {offsets = [0, 1, 0], sizes = [1, 1, 128], strides = [1, 1, 1]} : vector<3x3x128xf32> to vector<1x1x128xf32>
    %615 = vector.shape_cast %614 : vector<1x1x128xf32> to vector<128xf32>
    %616 = vector.shape_cast %615 : vector<128xf32> to vector<1x128xf32>
    %617 = vector.broadcast %616 : vector<1x128xf32> to vector<16x128xf32>
    %618 = arith.mulf %613, %617 : vector<16x128xf32>
    %619 = arith.addf %612, %618 : vector<16x128xf32>
    %620 = vector.extract_strided_slice %605 {offsets = [2, 0], sizes = [16, 128], strides = [1, 1]} : vector<18x128xf32> to vector<16x128xf32>
    %621 = vector.extract_strided_slice %21 {offsets = [0, 2, 0], sizes = [1, 1, 128], strides = [1, 1, 1]} : vector<3x3x128xf32> to vector<1x1x128xf32>
    %622 = vector.shape_cast %621 : vector<1x1x128xf32> to vector<128xf32>
    %623 = vector.shape_cast %622 : vector<128xf32> to vector<1x128xf32>
    %624 = vector.broadcast %623 : vector<1x128xf32> to vector<16x128xf32>
    %625 = arith.mulf %620, %624 : vector<16x128xf32>
    %626 = arith.addf %619, %625 : vector<16x128xf32>
    %c126_184 = arith.constant 126 : index
    %c0_185 = arith.constant 0 : index
    %627 = vector.load %arg14[%c126_184, %c0_185] : memref<180x128xf32, #tpu.memory_space<vmem>>, vector<18x128xf32>
    %628 = vector.extract_strided_slice %627 {offsets = [0, 0], sizes = [16, 128], strides = [1, 1]} : vector<18x128xf32> to vector<16x128xf32>
    %629 = vector.extract_strided_slice %21 {offsets = [1, 0, 0], sizes = [1, 1, 128], strides = [1, 1, 1]} : vector<3x3x128xf32> to vector<1x1x128xf32>
    %630 = vector.shape_cast %629 : vector<1x1x128xf32> to vector<128xf32>
    %631 = vector.shape_cast %630 : vector<128xf32> to vector<1x128xf32>
    %632 = vector.broadcast %631 : vector<1x128xf32> to vector<16x128xf32>
    %633 = arith.mulf %628, %632 : vector<16x128xf32>
    %634 = arith.addf %626, %633 : vector<16x128xf32>
    %635 = vector.extract_strided_slice %627 {offsets = [1, 0], sizes = [16, 128], strides = [1, 1]} : vector<18x128xf32> to vector<16x128xf32>
    %636 = vector.extract_strided_slice %21 {offsets = [1, 1, 0], sizes = [1, 1, 128], strides = [1, 1, 1]} : vector<3x3x128xf32> to vector<1x1x128xf32>
    %637 = vector.shape_cast %636 : vector<1x1x128xf32> to vector<128xf32>
    %638 = vector.shape_cast %637 : vector<128xf32> to vector<1x128xf32>
    %639 = vector.broadcast %638 : vector<1x128xf32> to vector<16x128xf32>
    %640 = arith.mulf %635, %639 : vector<16x128xf32>
    %641 = arith.addf %634, %640 : vector<16x128xf32>
    %642 = vector.extract_strided_slice %627 {offsets = [2, 0], sizes = [16, 128], strides = [1, 1]} : vector<18x128xf32> to vector<16x128xf32>
    %643 = vector.extract_strided_slice %21 {offsets = [1, 2, 0], sizes = [1, 1, 128], strides = [1, 1, 1]} : vector<3x3x128xf32> to vector<1x1x128xf32>
    %644 = vector.shape_cast %643 : vector<1x1x128xf32> to vector<128xf32>
    %645 = vector.shape_cast %644 : vector<128xf32> to vector<1x128xf32>
    %646 = vector.broadcast %645 : vector<1x128xf32> to vector<16x128xf32>
    %647 = arith.mulf %642, %646 : vector<16x128xf32>
    %648 = arith.addf %641, %647 : vector<16x128xf32>
    %c144 = arith.constant 144 : index
    %c0_186 = arith.constant 0 : index
    %649 = vector.load %arg14[%c144, %c0_186] : memref<180x128xf32, #tpu.memory_space<vmem>>, vector<18x128xf32>
    %650 = vector.extract_strided_slice %649 {offsets = [0, 0], sizes = [16, 128], strides = [1, 1]} : vector<18x128xf32> to vector<16x128xf32>
    %651 = vector.extract_strided_slice %21 {offsets = [2, 0, 0], sizes = [1, 1, 128], strides = [1, 1, 1]} : vector<3x3x128xf32> to vector<1x1x128xf32>
    %652 = vector.shape_cast %651 : vector<1x1x128xf32> to vector<128xf32>
    %653 = vector.shape_cast %652 : vector<128xf32> to vector<1x128xf32>
    %654 = vector.broadcast %653 : vector<1x128xf32> to vector<16x128xf32>
    %655 = arith.mulf %650, %654 : vector<16x128xf32>
    %656 = arith.addf %648, %655 : vector<16x128xf32>
    %657 = vector.extract_strided_slice %649 {offsets = [1, 0], sizes = [16, 128], strides = [1, 1]} : vector<18x128xf32> to vector<16x128xf32>
    %658 = vector.extract_strided_slice %21 {offsets = [2, 1, 0], sizes = [1, 1, 128], strides = [1, 1, 1]} : vector<3x3x128xf32> to vector<1x1x128xf32>
    %659 = vector.shape_cast %658 : vector<1x1x128xf32> to vector<128xf32>
    %660 = vector.shape_cast %659 : vector<128xf32> to vector<1x128xf32>
    %661 = vector.broadcast %660 : vector<1x128xf32> to vector<16x128xf32>
    %662 = arith.mulf %657, %661 : vector<16x128xf32>
    %663 = arith.addf %656, %662 : vector<16x128xf32>
    %664 = vector.extract_strided_slice %649 {offsets = [2, 0], sizes = [16, 128], strides = [1, 1]} : vector<18x128xf32> to vector<16x128xf32>
    %665 = vector.extract_strided_slice %21 {offsets = [2, 2, 0], sizes = [1, 1, 128], strides = [1, 1, 1]} : vector<3x3x128xf32> to vector<1x1x128xf32>
    %666 = vector.shape_cast %665 : vector<1x1x128xf32> to vector<128xf32>
    %667 = vector.shape_cast %666 : vector<128xf32> to vector<1x128xf32>
    %668 = vector.broadcast %667 : vector<1x128xf32> to vector<16x128xf32>
    %669 = arith.mulf %664, %668 : vector<16x128xf32>
    %670 = arith.addf %663, %669 : vector<16x128xf32>
    %c0_187 = arith.constant 0 : index
    %c0_188 = arith.constant 0 : index
    %671 = vector.load %arg8[%c0_187, %c0_188] : memref<1x128xf32, #tpu.memory_space<vmem>>, vector<1x128xf32>
    %672 = vector.broadcast %671 : vector<1x128xf32> to vector<16x128xf32>
    %673 = arith.mulf %670, %672 : vector<16x128xf32>
    %c0_189 = arith.constant 0 : index
    %c0_190 = arith.constant 0 : index
    %674 = vector.load %arg9[%c0_189, %c0_190] : memref<1x128xf32, #tpu.memory_space<vmem>>, vector<1x128xf32>
    %675 = vector.broadcast %674 : vector<1x128xf32> to vector<16x128xf32>
    %676 = arith.addf %673, %675 : vector<16x128xf32>
    %cst_191 = arith.constant 0.000000e+00 : f32
    %cst_192 = arith.constant 6.000000e+00 : f32
    %677 = vector.broadcast %cst_191 : f32 to vector<16x128xf32>
    %678 = arith.maximumf %677, %676 : vector<16x128xf32>
    %679 = vector.broadcast %cst_192 : f32 to vector<16x128xf32>
    %680 = arith.minimumf %679, %678 : vector<16x128xf32>
    %c0_193 = arith.constant 0 : index
    %c0_194 = arith.constant 0 : index
    %681 = vector.load %arg10[%c0_193, %c0_194] : memref<128x128xf32, #tpu.memory_space<vmem>>, vector<128x128xf32>
    %cst_195 = arith.constant dense<0.000000e+00> : vector<16x128xf32>
    %682 = tpu.matmul %680, %681, %cst_195 {dimension_numbers = #tpu.dot_dimension_numbers<[1], [0], [0], [1], [0, 0, 1, 1], [], []>} : vector<16x128xf32>, vector<128x128xf32>, vector<16x128xf32> -> vector<16x128xf32>
    %c0_196 = arith.constant 0 : index
    %c0_197 = arith.constant 0 : index
    %683 = vector.load %arg11[%c0_196, %c0_197] : memref<1x128xf32, #tpu.memory_space<vmem>>, vector<1x128xf32>
    %684 = vector.broadcast %683 : vector<1x128xf32> to vector<16x128xf32>
    %685 = arith.mulf %682, %684 : vector<16x128xf32>
    %c0_198 = arith.constant 0 : index
    %c0_199 = arith.constant 0 : index
    %686 = vector.load %arg12[%c0_198, %c0_199] : memref<1x128xf32, #tpu.memory_space<vmem>>, vector<1x128xf32>
    %687 = vector.broadcast %686 : vector<1x128xf32> to vector<16x128xf32>
    %688 = arith.addf %685, %687 : vector<16x128xf32>
    %c8_i32_200 = arith.constant 8 : i32
    %689 = arith.muli %arg1, %c8_i32_200 : i32
    %c6_i32 = arith.constant 6 : i32
    %690 = arith.addi %689, %c6_i32 : i32
    %c1_i32_201 = arith.constant 1 : i32
    %691 = arith.addi %690, %c1_i32_201 : i32
    %c18_i32_202 = arith.constant 18 : i32
    %692 = arith.muli %691, %c18_i32_202 : i32
    %c1_i32_203 = arith.constant 1 : i32
    %693 = arith.addi %692, %c1_i32_203 : i32
    %c0_204 = arith.constant 0 : index
    %694 = arith.index_cast %693 : i32 to index
    %c0_205 = arith.constant 0 : index
    %695 = vector.load %arg2[%c0_204, %694, %c0_205] : memref<1x324x128xf32, #tpu.memory_space<vmem>>, vector<1x16x128xf32>
    %696 = vector.shape_cast %695 : vector<1x16x128xf32> to vector<16x128xf32>
    %697 = arith.addf %688, %696 : vector<16x128xf32>
    %c0_206 = arith.constant 0 : index
    %c6 = arith.constant 6 : index
    %c0_207 = arith.constant 0 : index
    %c0_208 = arith.constant 0 : index
    %698 = vector.load %arg13[%c0_206, %c6, %c0_207, %c0_208] : memref<1x8x16x128xf32, #tpu.memory_space<vmem>>, vector<1x1x16x128xf32>
    %699 = vector.shape_cast %698 : vector<1x1x16x128xf32> to vector<16x128xf32>
    %700 = vector.shape_cast %697 : vector<16x128xf32> to vector<1x1x16x128xf32>
    tpu.vector_store %arg13[%c0_206, %c6, %c0_207, %c0_208], %700 {strides = array<i32>} : memref<1x8x16x128xf32, #tpu.memory_space<vmem>>, vector<1x1x16x128xf32>,
    %cst_209 = arith.constant 0.000000e+00 : f32
    %701 = vector.broadcast %cst_209 : f32 to vector<16x128xf32>
    %c126_210 = arith.constant 126 : index
    %c0_211 = arith.constant 0 : index
    %702 = vector.load %arg14[%c126_210, %c0_211] : memref<180x128xf32, #tpu.memory_space<vmem>>, vector<18x128xf32>
    %703 = vector.extract_strided_slice %702 {offsets = [0, 0], sizes = [16, 128], strides = [1, 1]} : vector<18x128xf32> to vector<16x128xf32>
    %704 = vector.extract_strided_slice %21 {offsets = [0, 0, 0], sizes = [1, 1, 128], strides = [1, 1, 1]} : vector<3x3x128xf32> to vector<1x1x128xf32>
    %705 = vector.shape_cast %704 : vector<1x1x128xf32> to vector<128xf32>
    %706 = vector.shape_cast %705 : vector<128xf32> to vector<1x128xf32>
    %707 = vector.broadcast %706 : vector<1x128xf32> to vector<16x128xf32>
    %708 = arith.mulf %703, %707 : vector<16x128xf32>
    %709 = arith.addf %701, %708 : vector<16x128xf32>
    %710 = vector.extract_strided_slice %702 {offsets = [1, 0], sizes = [16, 128], strides = [1, 1]} : vector<18x128xf32> to vector<16x128xf32>
    %711 = vector.extract_strided_slice %21 {offsets = [0, 1, 0], sizes = [1, 1, 128], strides = [1, 1, 1]} : vector<3x3x128xf32> to vector<1x1x128xf32>
    %712 = vector.shape_cast %711 : vector<1x1x128xf32> to vector<128xf32>
    %713 = vector.shape_cast %712 : vector<128xf32> to vector<1x128xf32>
    %714 = vector.broadcast %713 : vector<1x128xf32> to vector<16x128xf32>
    %715 = arith.mulf %710, %714 : vector<16x128xf32>
    %716 = arith.addf %709, %715 : vector<16x128xf32>
    %717 = vector.extract_strided_slice %702 {offsets = [2, 0], sizes = [16, 128], strides = [1, 1]} : vector<18x128xf32> to vector<16x128xf32>
    %718 = vector.extract_strided_slice %21 {offsets = [0, 2, 0], sizes = [1, 1, 128], strides = [1, 1, 1]} : vector<3x3x128xf32> to vector<1x1x128xf32>
    %719 = vector.shape_cast %718 : vector<1x1x128xf32> to vector<128xf32>
    %720 = vector.shape_cast %719 : vector<128xf32> to vector<1x128xf32>
    %721 = vector.broadcast %720 : vector<1x128xf32> to vector<16x128xf32>
    %722 = arith.mulf %717, %721 : vector<16x128xf32>
    %723 = arith.addf %716, %722 : vector<16x128xf32>
    %c144_212 = arith.constant 144 : index
    %c0_213 = arith.constant 0 : index
    %724 = vector.load %arg14[%c144_212, %c0_213] : memref<180x128xf32, #tpu.memory_space<vmem>>, vector<18x128xf32>
    %725 = vector.extract_strided_slice %724 {offsets = [0, 0], sizes = [16, 128], strides = [1, 1]} : vector<18x128xf32> to vector<16x128xf32>
    %726 = vector.extract_strided_slice %21 {offsets = [1, 0, 0], sizes = [1, 1, 128], strides = [1, 1, 1]} : vector<3x3x128xf32> to vector<1x1x128xf32>
    %727 = vector.shape_cast %726 : vector<1x1x128xf32> to vector<128xf32>
    %728 = vector.shape_cast %727 : vector<128xf32> to vector<1x128xf32>
    %729 = vector.broadcast %728 : vector<1x128xf32> to vector<16x128xf32>
    %730 = arith.mulf %725, %729 : vector<16x128xf32>
    %731 = arith.addf %723, %730 : vector<16x128xf32>
    %732 = vector.extract_strided_slice %724 {offsets = [1, 0], sizes = [16, 128], strides = [1, 1]} : vector<18x128xf32> to vector<16x128xf32>
    %733 = vector.extract_strided_slice %21 {offsets = [1, 1, 0], sizes = [1, 1, 128], strides = [1, 1, 1]} : vector<3x3x128xf32> to vector<1x1x128xf32>
    %734 = vector.shape_cast %733 : vector<1x1x128xf32> to vector<128xf32>
    %735 = vector.shape_cast %734 : vector<128xf32> to vector<1x128xf32>
    %736 = vector.broadcast %735 : vector<1x128xf32> to vector<16x128xf32>
    %737 = arith.mulf %732, %736 : vector<16x128xf32>
    %738 = arith.addf %731, %737 : vector<16x128xf32>
    %739 = vector.extract_strided_slice %724 {offsets = [2, 0], sizes = [16, 128], strides = [1, 1]} : vector<18x128xf32> to vector<16x128xf32>
    %740 = vector.extract_strided_slice %21 {offsets = [1, 2, 0], sizes = [1, 1, 128], strides = [1, 1, 1]} : vector<3x3x128xf32> to vector<1x1x128xf32>
    %741 = vector.shape_cast %740 : vector<1x1x128xf32> to vector<128xf32>
    %742 = vector.shape_cast %741 : vector<128xf32> to vector<1x128xf32>
    %743 = vector.broadcast %742 : vector<1x128xf32> to vector<16x128xf32>
    %744 = arith.mulf %739, %743 : vector<16x128xf32>
    %745 = arith.addf %738, %744 : vector<16x128xf32>
    %c162 = arith.constant 162 : index
    %c0_214 = arith.constant 0 : index
    %746 = vector.load %arg14[%c162, %c0_214] : memref<180x128xf32, #tpu.memory_space<vmem>>, vector<18x128xf32>
    %747 = vector.extract_strided_slice %746 {offsets = [0, 0], sizes = [16, 128], strides = [1, 1]} : vector<18x128xf32> to vector<16x128xf32>
    %748 = vector.extract_strided_slice %21 {offsets = [2, 0, 0], sizes = [1, 1, 128], strides = [1, 1, 1]} : vector<3x3x128xf32> to vector<1x1x128xf32>
    %749 = vector.shape_cast %748 : vector<1x1x128xf32> to vector<128xf32>
    %750 = vector.shape_cast %749 : vector<128xf32> to vector<1x128xf32>
    %751 = vector.broadcast %750 : vector<1x128xf32> to vector<16x128xf32>
    %752 = arith.mulf %747, %751 : vector<16x128xf32>
    %753 = arith.addf %745, %752 : vector<16x128xf32>
    %754 = vector.extract_strided_slice %746 {offsets = [1, 0], sizes = [16, 128], strides = [1, 1]} : vector<18x128xf32> to vector<16x128xf32>
    %755 = vector.extract_strided_slice %21 {offsets = [2, 1, 0], sizes = [1, 1, 128], strides = [1, 1, 1]} : vector<3x3x128xf32> to vector<1x1x128xf32>
    %756 = vector.shape_cast %755 : vector<1x1x128xf32> to vector<128xf32>
    %757 = vector.shape_cast %756 : vector<128xf32> to vector<1x128xf32>
    %758 = vector.broadcast %757 : vector<1x128xf32> to vector<16x128xf32>
    %759 = arith.mulf %754, %758 : vector<16x128xf32>
    %760 = arith.addf %753, %759 : vector<16x128xf32>
    %761 = vector.extract_strided_slice %746 {offsets = [2, 0], sizes = [16, 128], strides = [1, 1]} : vector<18x128xf32> to vector<16x128xf32>
    %762 = vector.extract_strided_slice %21 {offsets = [2, 2, 0], sizes = [1, 1, 128], strides = [1, 1, 1]} : vector<3x3x128xf32> to vector<1x1x128xf32>
    %763 = vector.shape_cast %762 : vector<1x1x128xf32> to vector<128xf32>
    %764 = vector.shape_cast %763 : vector<128xf32> to vector<1x128xf32>
    %765 = vector.broadcast %764 : vector<1x128xf32> to vector<16x128xf32>
    %766 = arith.mulf %761, %765 : vector<16x128xf32>
    %767 = arith.addf %760, %766 : vector<16x128xf32>
    %c0_215 = arith.constant 0 : index
    %c0_216 = arith.constant 0 : index
    %768 = vector.load %arg8[%c0_215, %c0_216] : memref<1x128xf32, #tpu.memory_space<vmem>>, vector<1x128xf32>
    %769 = vector.broadcast %768 : vector<1x128xf32> to vector<16x128xf32>
    %770 = arith.mulf %767, %769 : vector<16x128xf32>
    %c0_217 = arith.constant 0 : index
    %c0_218 = arith.constant 0 : index
    %771 = vector.load %arg9[%c0_217, %c0_218] : memref<1x128xf32, #tpu.memory_space<vmem>>, vector<1x128xf32>
    %772 = vector.broadcast %771 : vector<1x128xf32> to vector<16x128xf32>
    %773 = arith.addf %770, %772 : vector<16x128xf32>
    %cst_219 = arith.constant 0.000000e+00 : f32
    %cst_220 = arith.constant 6.000000e+00 : f32
    %774 = vector.broadcast %cst_219 : f32 to vector<16x128xf32>
    %775 = arith.maximumf %774, %773 : vector<16x128xf32>
    %776 = vector.broadcast %cst_220 : f32 to vector<16x128xf32>
    %777 = arith.minimumf %776, %775 : vector<16x128xf32>
    %c0_221 = arith.constant 0 : index
    %c0_222 = arith.constant 0 : index
    %778 = vector.load %arg10[%c0_221, %c0_222] : memref<128x128xf32, #tpu.memory_space<vmem>>, vector<128x128xf32>
    %cst_223 = arith.constant dense<0.000000e+00> : vector<16x128xf32>
    %779 = tpu.matmul %777, %778, %cst_223 {dimension_numbers = #tpu.dot_dimension_numbers<[1], [0], [0], [1], [0, 0, 1, 1], [], []>} : vector<16x128xf32>, vector<128x128xf32>, vector<16x128xf32> -> vector<16x128xf32>
    %c0_224 = arith.constant 0 : index
    %c0_225 = arith.constant 0 : index
    %780 = vector.load %arg11[%c0_224, %c0_225] : memref<1x128xf32, #tpu.memory_space<vmem>>, vector<1x128xf32>
    %781 = vector.broadcast %780 : vector<1x128xf32> to vector<16x128xf32>
    %782 = arith.mulf %779, %781 : vector<16x128xf32>
    %c0_226 = arith.constant 0 : index
    %c0_227 = arith.constant 0 : index
    %783 = vector.load %arg12[%c0_226, %c0_227] : memref<1x128xf32, #tpu.memory_space<vmem>>, vector<1x128xf32>
    %784 = vector.broadcast %783 : vector<1x128xf32> to vector<16x128xf32>
    %785 = arith.addf %782, %784 : vector<16x128xf32>
    %c8_i32_228 = arith.constant 8 : i32
    %786 = arith.muli %arg1, %c8_i32_228 : i32
    %c7_i32 = arith.constant 7 : i32
    %787 = arith.addi %786, %c7_i32 : i32
    %c1_i32_229 = arith.constant 1 : i32
    %788 = arith.addi %787, %c1_i32_229 : i32
    %c18_i32_230 = arith.constant 18 : i32
    %789 = arith.muli %788, %c18_i32_230 : i32
    %c1_i32_231 = arith.constant 1 : i32
    %790 = arith.addi %789, %c1_i32_231 : i32
    %c0_232 = arith.constant 0 : index
    %791 = arith.index_cast %790 : i32 to index
    %c0_233 = arith.constant 0 : index
    %792 = vector.load %arg2[%c0_232, %791, %c0_233] : memref<1x324x128xf32, #tpu.memory_space<vmem>>, vector<1x16x128xf32>
    %793 = vector.shape_cast %792 : vector<1x16x128xf32> to vector<16x128xf32>
    %794 = arith.addf %785, %793 : vector<16x128xf32>
    %c0_234 = arith.constant 0 : index
    %c7 = arith.constant 7 : index
    %c0_235 = arith.constant 0 : index
    %c0_236 = arith.constant 0 : index
    %795 = vector.load %arg13[%c0_234, %c7, %c0_235, %c0_236] : memref<1x8x16x128xf32, #tpu.memory_space<vmem>>, vector<1x1x16x128xf32>
    %796 = vector.shape_cast %795 : vector<1x1x16x128xf32> to vector<16x128xf32>
    %797 = vector.shape_cast %794 : vector<16x128xf32> to vector<1x1x16x128xf32>
    tpu.vector_store %arg13[%c0_234, %c7, %c0_235, %c0_236], %797 {strides = array<i32>} : memref<1x8x16x128xf32, #tpu.memory_space<vmem>>, vector<1x1x16x128xf32>,
    return
  }
  func.func @transform_0(%arg0: i32, %arg1: i32) -> (i32, i32, i32) {
    %c0_i32 = arith.constant 0 : i32
    %c0_i32_0 = arith.constant 0 : i32
    %c0_i32_1 = arith.constant 0 : i32
    return %arg0, %c0_i32, %c0_i32_0 : i32, i32, i32
  }
  func.func @transform_1(%arg0: i32, %arg1: i32) -> (i32, i32) {
    %c0_i32 = arith.constant 0 : i32
    %c0_i32_0 = arith.constant 0 : i32
    %c0_i32_1 = arith.constant 0 : i32
    return %c0_i32, %c0_i32_0 : i32, i32
  }
  func.func @transform_2(%arg0: i32, %arg1: i32) -> (i32, i32) {
    %c0_i32 = arith.constant 0 : i32
    %c0_i32_0 = arith.constant 0 : i32
    %c0_i32_1 = arith.constant 0 : i32
    return %c0_i32, %c0_i32_0 : i32, i32
  }
  func.func @transform_3(%arg0: i32, %arg1: i32) -> (i32, i32) {
    %c0_i32 = arith.constant 0 : i32
    %c0_i32_0 = arith.constant 0 : i32
    %c0_i32_1 = arith.constant 0 : i32
    return %c0_i32, %c0_i32_0 : i32, i32
  }
  func.func @transform_4(%arg0: i32, %arg1: i32) -> (i32, i32) {
    %c0_i32 = arith.constant 0 : i32
    %c0_i32_0 = arith.constant 0 : i32
    %c0_i32_1 = arith.constant 0 : i32
    return %c0_i32, %c0_i32_0 : i32, i32
  }
  func.func @transform_5(%arg0: i32, %arg1: i32) -> (i32, i32, i32) {
    %c0_i32 = arith.constant 0 : i32
    %c0_i32_0 = arith.constant 0 : i32
    %c0_i32_1 = arith.constant 0 : i32
    %c0_i32_2 = arith.constant 0 : i32
    return %c0_i32, %c0_i32_0, %c0_i32_1 : i32, i32, i32
  }
  func.func @transform_6(%arg0: i32, %arg1: i32) -> (i32, i32) {
    %c0_i32 = arith.constant 0 : i32
    %c0_i32_0 = arith.constant 0 : i32
    %c0_i32_1 = arith.constant 0 : i32
    return %c0_i32, %c0_i32_0 : i32, i32
  }
  func.func @transform_7(%arg0: i32, %arg1: i32) -> (i32, i32) {
    %c0_i32 = arith.constant 0 : i32
    %c0_i32_0 = arith.constant 0 : i32
    %c0_i32_1 = arith.constant 0 : i32
    return %c0_i32, %c0_i32_0 : i32, i32
  }
  func.func @transform_8(%arg0: i32, %arg1: i32) -> (i32, i32) {
    %c0_i32 = arith.constant 0 : i32
    %c0_i32_0 = arith.constant 0 : i32
    %c0_i32_1 = arith.constant 0 : i32
    return %c0_i32, %c0_i32_0 : i32, i32
  }
  func.func @transform_9(%arg0: i32, %arg1: i32) -> (i32, i32) {
    %c0_i32 = arith.constant 0 : i32
    %c0_i32_0 = arith.constant 0 : i32
    %c0_i32_1 = arith.constant 0 : i32
    return %c0_i32, %c0_i32_0 : i32, i32
  }
  func.func @transform_10(%arg0: i32, %arg1: i32) -> (i32, i32) {
    %c0_i32 = arith.constant 0 : i32
    %c0_i32_0 = arith.constant 0 : i32
    %c0_i32_1 = arith.constant 0 : i32
    return %c0_i32, %c0_i32_0 : i32, i32
  }
  func.func @transform_11(%arg0: i32, %arg1: i32) -> (i32, i32, i32, i32) {
    %c0_i32 = arith.constant 0 : i32
    %c0_i32_0 = arith.constant 0 : i32
    %c0_i32_1 = arith.constant 0 : i32
    return %arg0, %arg1, %c0_i32, %c0_i32_0 : i32, i32, i32, i32
  }
}

</mosaic_0001>

<llo_original>
// kernel: tpu_custom_call.1
$region0: #{tpu_custom_call.1}
  #allocation0 [shape = 'u32[]', space=smem, size = 0x4, offset = 0x4, fixed_abs, tag = 'smem constant byte address 0x4 - core index']
  #allocation1 [shape = 'u32[72,128]{1,0:T(1,128)}', space=vmem, size = 0x9000, scoped, tag = 'internal scratch']
  #allocation2 [shape = 'f32[180,128]{1,0:T(8,128)}', space=vmem, size = 0x17000, scoped, tag = 'scratch operand']
  %s0 = inlined_call_operand.vmem [shape: f32[2,324,128], index: 0, kind: input, shape index: {}]
  %s1 = inlined_call_operand.vmem [shape: f32[324,1], index: 1, kind: input, shape index: {}]
  %s2 = inlined_call_operand.vmem [shape: f32[128,128], index: 2, kind: input, shape index: {}]
  %s3 = inlined_call_operand.vmem [shape: f32[1,128], index: 3, kind: input, shape index: {}]
  %s4 = inlined_call_operand.vmem [shape: f32[1,128], index: 4, kind: input, shape index: {}]
  %s5 = inlined_call_operand.vmem [shape: f32[3,3,128], index: 5, kind: input, shape index: {}]
  %s6 = inlined_call_operand.vmem [shape: f32[1,128], index: 6, kind: input, shape index: {}]
  %s7 = inlined_call_operand.vmem [shape: f32[1,128], index: 7, kind: input, shape index: {}]
  %s8 = inlined_call_operand.vmem [shape: f32[128,128], index: 8, kind: input, shape index: {}]
  %s9 = inlined_call_operand.vmem [shape: f32[1,128], index: 9, kind: input, shape index: {}]
  %s10 = inlined_call_operand.vmem [shape: f32[1,128], index: 10, kind: input, shape index: {}]
  %s11 = inlined_call_operand.hbm [shape: f32[2,16,16,128], index: 11, kind: output, shape index: {}]
  %s12 = sld [smem:[#allocation0]]
  $region77: #{tpu_custom_call.1} parent=0
    _
  %s14 = ssub.s32 1, %s12
  %s15 = scalar_select 0, %s14, %s12
  $region1: #{tpu_custom_call.1} parent=0
    #allocation3 [shape = 'u8[131072]{0}', space=vmem, size = 0x20000, scoped, tag = 'output window, operand 0']
    #allocation4 [shape = 's32[2]{0}', space=sflag, size = 0x8, scoped, tag = 'scoped memory for tpu_custom_call.1']
    %16 = vsyncpa [#allocation4], 0
    %s17 = scalar_lea.sflag [#allocation4], 1
    %18 = vsyncpa %s17, 0
    loop: start=0, step=1, limit=6
    $region2: #{tpu_custom_call.1} parent=1 // loop_pre_header
      _
    $region3: #{tpu_custom_call.1} parent=1 // loop_header
      %s20 = sphi 0, %s24
      %p21 = scmp.ge.s32.totalorder %s20, 6
      %s27 = sphi 0, %s39
      %s28 = sphi 0, %s35
      %s29 = sphi 0, %s27
      %s30 = sphi 0, %s28
      %s31 = sphi 0, %s29
      %s32 = sphi 0, %s30
      %s42 = sphi 0, %s44
      %s45 = sphi 0, %s42
      %s46 = sphi 0, %s45
      %s62 = sphi 0, %s46
      %s66 = sphi 0, %s66
      %s68 = sphi 0, %s66
      %s69 = sphi 0, %s68
      %s83 = sphi 0, %s69
      %s87 = sphi 0, %s87
      %s89 = sphi 0, %s87
      %s90 = sphi 0, %s89
      %s104 = sphi 0, %s90
      %s108 = sphi 0, %s108
      %s110 = sphi 0, %s108
      %s111 = sphi 0, %s110
      %s125 = sphi 0, %s111
      %s129 = sphi 0, %s129
      %s131 = sphi 0, %s129
      %s132 = sphi 0, %s131
      %s146 = sphi 0, %s132
      %s150 = sphi 0, %s150
      %s152 = sphi 0, %s150
      %s153 = sphi 0, %s152
      %s167 = sphi 0, %s153
      %s171 = sphi 0, %s171
      %s173 = sphi 0, %s171
      %s174 = sphi 0, %s173
      %s188 = sphi 0, %s174
      %s192 = sphi 0, %s192
      %s194 = sphi 0, %s192
      %s195 = sphi 0, %s194
      %s209 = sphi 0, %s195
      %s213 = sphi 0, %s213
      %s215 = sphi 0, %s213
      %s216 = sphi 0, %s215
      %s230 = sphi 0, %s216
      %s234 = sphi 0, %s234
      %s236 = sphi 0, %s234
      %s237 = sphi 0, %s236
      %s251 = sphi 0, %s237
      %s255 = sphi 0, %s255
      %s257 = sphi 0, %s255
      %s258 = sphi 0, %s257
      %s272 = sphi 0, %s258
      %s280 = sphi 0, %s282
      %s283 = sphi 0, %s280
      %s284 = sphi 0, %s283
      %s300 = sphi 0, %s284
    $region4: #{tpu_custom_call.1} parent=1 // loop_header_branch
      %23 = sbr.rel (%p21) target = $region8
    $region5: #{tpu_custom_call.1} parent=1 // loop_body
      %s25 = ssub.s32 %s20, 1
      %s26 = ssub.s32 %s20, 2
      %s33 = sadd.s32 1, %s28
      %p34 = scmp.ge.s32.totalorder %s33, 2
      %s35 = scalar_select %p34, 0, %s33
      %s36 = sadd.s32 1, %s27
      %s37 = scalar_select %p34, %s36, %s27
      %p38 = scmp.ge.s32.totalorder %s37, 2
      %s39 = scalar_select %p38, 0, %s37
      %s40 = ssub.s32 %s27, %s39
      %p41 = scmp.eq.s32.totalorder %s40, 0
      %s43 = sadd.s32 %s42, 1
      %s44 = scalar_select %p41, %s42, %s43
      %p47 = pneg %p41
      %p48 = scmp.eq.s32.totalorder %s20, 3
      %p49 = por %p47, %p48
      %p50 = scmp.ne.s32.totalorder %s42, %s45
      %p51 = scmp.eq.s32.totalorder %s20, 0
      %p52 = por %p50, %p51
      %p53 = scmp.ne.s32.totalorder %s42, %s45
      %p54 = scmp.eq.s32.totalorder %s25, 3
      %p55 = por %p53, %p54
      %p56 = scmp.ne.s32.totalorder %s45, %s46
      %p57 = scmp.eq.s32.totalorder %s25, 0
      %p58 = por %p56, %p57
      %p59 = scmp.ne.s32.totalorder %s45, %s46
      %p60 = scmp.eq.s32.totalorder %s26, 3
      %p61 = por %p59, %p60
      %p63 = scmp.ne.s32.totalorder %s46, %s62
      %p64 = scmp.eq.s32.totalorder %s26, 0
      %p65 = por %p63, %p64
      %s67 = sadd.s32 %s66, 1
      %p70 = scmp.eq.s32.totalorder %s20, 3
      %p71 = scmp.ne.s32.totalorder %s66, %s68
      %p72 = scmp.eq.s32.totalorder %s20, 0
      %p73 = por %p71, %p72
      %p74 = scmp.ne.s32.totalorder %s66, %s68
      %p75 = scmp.eq.s32.totalorder %s25, 3
      %p76 = por %p74, %p75
      %p77 = scmp.ne.s32.totalorder %s68, %s69
      %p78 = scmp.eq.s32.totalorder %s25, 0
      %p79 = por %p77, %p78
      %p80 = scmp.ne.s32.totalorder %s68, %s69
      %p81 = scmp.eq.s32.totalorder %s26, 3
      %p82 = por %p80, %p81
      %p84 = scmp.ne.s32.totalorder %s69, %s83
      %p85 = scmp.eq.s32.totalorder %s26, 0
      %p86 = por %p84, %p85
      %s88 = sadd.s32 %s87, 1
      %p91 = scmp.eq.s32.totalorder %s20, 3
      %p92 = scmp.ne.s32.totalorder %s87, %s89
      %p93 = scmp.eq.s32.totalorder %s20, 0
      %p94 = por %p92, %p93
      %p95 = scmp.ne.s32.totalorder %s87, %s89
      %p96 = scmp.eq.s32.totalorder %s25, 3
      %p97 = por %p95, %p96
      %p98 = scmp.ne.s32.totalorder %s89, %s90
      %p99 = scmp.eq.s32.totalorder %s25, 0
      %p100 = por %p98, %p99
      %p101 = scmp.ne.s32.totalorder %s89, %s90
      %p102 = scmp.eq.s32.totalorder %s26, 3
      %p103 = por %p101, %p102
      %p105 = scmp.ne.s32.totalorder %s90, %s104
      %p106 = scmp.eq.s32.totalorder %s26, 0
      %p107 = por %p105, %p106
      %s109 = sadd.s32 %s108, 1
      %p112 = scmp.eq.s32.totalorder %s20, 3
      %p113 = scmp.ne.s32.totalorder %s108, %s110
      %p114 = scmp.eq.s32.totalorder %s20, 0
      %p115 = por %p113, %p114
      %p116 = scmp.ne.s32.totalorder %s108, %s110
      %p117 = scmp.eq.s32.totalorder %s25, 3
      %p118 = por %p116, %p117
      %p119 = scmp.ne.s32.totalorder %s110, %s111
      %p120 = scmp.eq.s32.totalorder %s25, 0
      %p121 = por %p119, %p120
      %p122 = scmp.ne.s32.totalorder %s110, %s111
      %p123 = scmp.eq.s32.totalorder %s26, 3
      %p124 = por %p122, %p123
      %p126 = scmp.ne.s32.totalorder %s111, %s125
      %p127 = scmp.eq.s32.totalorder %s26, 0
      %p128 = por %p126, %p127
      %s130 = sadd.s32 %s129, 1
      %p133 = scmp.eq.s32.totalorder %s20, 3
      %p134 = scmp.ne.s32.totalorder %s129, %s131
      %p135 = scmp.eq.s32.totalorder %s20, 0
      %p136 = por %p134, %p135
      %p137 = scmp.ne.s32.totalorder %s129, %s131
      %p138 = scmp.eq.s32.totalorder %s25, 3
      %p139 = por %p137, %p138
      %p140 = scmp.ne.s32.totalorder %s131, %s132
      %p141 = scmp.eq.s32.totalorder %s25, 0
      %p142 = por %p140, %p141
      %p143 = scmp.ne.s32.totalorder %s131, %s132
      %p144 = scmp.eq.s32.totalorder %s26, 3
      %p145 = por %p143, %p144
      %p147 = scmp.ne.s32.totalorder %s132, %s146
      %p148 = scmp.eq.s32.totalorder %s26, 0
      %p149 = por %p147, %p148
      %s151 = sadd.s32 %s150, 1
      %p154 = scmp.eq.s32.totalorder %s20, 3
      %p155 = scmp.ne.s32.totalorder %s150, %s152
      %p156 = scmp.eq.s32.totalorder %s20, 0
      %p157 = por %p155, %p156
      %p158 = scmp.ne.s32.totalorder %s150, %s152
      %p159 = scmp.eq.s32.totalorder %s25, 3
      %p160 = por %p158, %p159
      %p161 = scmp.ne.s32.totalorder %s152, %s153
      %p162 = scmp.eq.s32.totalorder %s25, 0
      %p163 = por %p161, %p162
      %p164 = scmp.ne.s32.totalorder %s152, %s153
      %p165 = scmp.eq.s32.totalorder %s26, 3
      %p166 = por %p164, %p165
      %p168 = scmp.ne.s32.totalorder %s153, %s167
      %p169 = scmp.eq.s32.totalorder %s26, 0
      %p170 = por %p168, %p169
      %s172 = sadd.s32 %s171, 1
      %p175 = scmp.eq.s32.totalorder %s20, 3
      %p176 = scmp.ne.s32.totalorder %s171, %s173
      %p177 = scmp.eq.s32.totalorder %s20, 0
      %p178 = por %p176, %p177
      %p179 = scmp.ne.s32.totalorder %s171, %s173
      %p180 = scmp.eq.s32.totalorder %s25, 3
      %p181 = por %p179, %p180
      %p182 = scmp.ne.s32.totalorder %s173, %s174
      %p183 = scmp.eq.s32.totalorder %s25, 0
      %p184 = por %p182, %p183
      %p185 = scmp.ne.s32.totalorder %s173, %s174
      %p186 = scmp.eq.s32.totalorder %s26, 3
      %p187 = por %p185, %p186
      %p189 = scmp.ne.s32.totalorder %s174, %s188
      %p190 = scmp.eq.s32.totalorder %s26, 0
      %p191 = por %p189, %p190
      %s193 = sadd.s32 %s192, 1
      %p196 = scmp.eq.s32.totalorder %s20, 3
      %p197 = scmp.ne.s32.totalorder %s192, %s194
      %p198 = scmp.eq.s32.totalorder %s20, 0
      %p199 = por %p197, %p198
      %p200 = scmp.ne.s32.totalorder %s192, %s194
      %p201 = scmp.eq.s32.totalorder %s25, 3
      %p202 = por %p200, %p201
      %p203 = scmp.ne.s32.totalorder %s194, %s195
      %p204 = scmp.eq.s32.totalorder %s25, 0
      %p205 = por %p203, %p204
      %p206 = scmp.ne.s32.totalorder %s194, %s195
      %p207 = scmp.eq.s32.totalorder %s26, 3
      %p208 = por %p206, %p207
      %p210 = scmp.ne.s32.totalorder %s195, %s209
      %p211 = scmp.eq.s32.totalorder %s26, 0
      %p212 = por %p210, %p211
      %s214 = sadd.s32 %s213, 1
      %p217 = scmp.eq.s32.totalorder %s20, 3
      %p218 = scmp.ne.s32.totalorder %s213, %s215
      %p219 = scmp.eq.s32.totalorder %s20, 0
      %p220 = por %p218, %p219
      %p221 = scmp.ne.s32.totalorder %s213, %s215
      %p222 = scmp.eq.s32.totalorder %s25, 3
      %p223 = por %p221, %p222
      %p224 = scmp.ne.s32.totalorder %s215, %s216
      %p225 = scmp.eq.s32.totalorder %s25, 0
      %p226 = por %p224, %p225
      %p227 = scmp.ne.s32.totalorder %s215, %s216
      %p228 = scmp.eq.s32.totalorder %s26, 3
      %p229 = por %p227, %p228
      %p231 = scmp.ne.s32.totalorder %s216, %s230
      %p232 = scmp.eq.s32.totalorder %s26, 0
      %p233 = por %p231, %p232
      %s235 = sadd.s32 %s234, 1
      %p238 = scmp.eq.s32.totalorder %s20, 3
      %p239 = scmp.ne.s32.totalorder %s234, %s236
      %p240 = scmp.eq.s32.totalorder %s20, 0
      %p241 = por %p239, %p240
      %p242 = scmp.ne.s32.totalorder %s234, %s236
      %p243 = scmp.eq.s32.totalorder %s25, 3
      %p244 = por %p242, %p243
      %p245 = scmp.ne.s32.totalorder %s236, %s237
      %p246 = scmp.eq.s32.totalorder %s25, 0
      %p247 = por %p245, %p246
      %p248 = scmp.ne.s32.totalorder %s236, %s237
      %p249 = scmp.eq.s32.totalorder %s26, 3
      %p250 = por %p248, %p249
      %p252 = scmp.ne.s32.totalorder %s237, %s251
      %p253 = scmp.eq.s32.totalorder %s26, 0
      %p254 = por %p252, %p253
      %s256 = sadd.s32 %s255, 1
      %p259 = scmp.eq.s32.totalorder %s20, 3
      %p260 = scmp.ne.s32.totalorder %s255, %s257
      %p261 = scmp.eq.s32.totalorder %s20, 0
      %p262 = por %p260, %p261
      %p263 = scmp.ne.s32.totalorder %s255, %s257
      %p264 = scmp.eq.s32.totalorder %s25, 3
      %p265 = por %p263, %p264
      %p266 = scmp.ne.s32.totalorder %s257, %s258
      %p267 = scmp.eq.s32.totalorder %s25, 0
      %p268 = por %p266, %p267
      %p269 = scmp.ne.s32.totalorder %s257, %s258
      %p270 = scmp.eq.s32.totalorder %s26, 3
      %p271 = por %p269, %p270
      %p273 = scmp.ne.s32.totalorder %s258, %s272
      %p274 = scmp.eq.s32.totalorder %s26, 0
      %p275 = por %p273, %p274
      %s276 = ssub.s32 %s27, %s39
      %s277 = ssub.s32 %s28, %s35
      %s278 = sor.u32 %s276, %s277
      %p279 = scmp.eq.s32.totalorder %s278, 0
      %s281 = sadd.s32 %s280, 1
      %s282 = scalar_select %p279, %s280, %s281
      %p285 = pneg %p279
      %p286 = scmp.eq.s32.totalorder %s20, 3
      %p287 = por %p285, %p286
      %p288 = scmp.ne.s32.totalorder %s280, %s283
      %p289 = scmp.eq.s32.totalorder %s20, 0
      %p290 = por %p288, %p289
      %p291 = scmp.ne.s32.totalorder %s280, %s283
      %p292 = scmp.eq.s32.totalorder %s25, 3
      %p293 = por %p291, %p292
      %p294 = scmp.ne.s32.totalorder %s283, %s284
      %p295 = scmp.eq.s32.totalorder %s25, 0
      %p296 = por %p294, %p295
      %p297 = scmp.ne.s32.totalorder %s283, %s284
      %p298 = scmp.eq.s32.totalorder %s26, 3
      %p299 = por %p297, %p298
      %p301 = scmp.ne.s32.totalorder %s284, %s300
      %p302 = scmp.eq.s32.totalorder %s26, 0
      %p303 = por %p301, %p302
      %p304 = scmp.le.s32.totalorder 1, %s20
      %p305 = scmp.lt.s32.totalorder %s20, 5
      %p306 = pnand %p304, %p305
      %p307 = pneg %p306
      // Predicated region
      $region9: #{tpu_custom_call.1} parent=5 // pred_check
        _
      $region10: #{tpu_custom_call.1} parent=5 // pred_check_branch
        %309 = sbr.rel (%p306) target = $region12
      $region11: #{tpu_custom_call.1} parent=5 // pred_region
        %s310 = ssub.s32 %s20, 1
        // Predicated region
        $region13: #{tpu_custom_call.1} parent=11 // pred_check
          %p311 = pneg %p79
        $region14: #{tpu_custom_call.1} parent=11 // pred_check_branch
          %313 = sbr.rel (%p311) target = $region16
        $region15: #{tpu_custom_call.1} parent=11 // pred_region
          _
        $region16: #{tpu_custom_call.1} parent=11 // pred_fallthru
          _
        // Predicated region
        $region17: #{tpu_custom_call.1} parent=11 // pred_check
          %p314 = pneg %p100
        $region18: #{tpu_custom_call.1} parent=11 // pred_check_branch
          %316 = sbr.rel (%p314) target = $region20
        $region19: #{tpu_custom_call.1} parent=11 // pred_region
          _
        $region20: #{tpu_custom_call.1} parent=11 // pred_fallthru
          _
        // Predicated region
        $region21: #{tpu_custom_call.1} parent=11 // pred_check
          %p317 = pneg %p121
        $region22: #{tpu_custom_call.1} parent=11 // pred_check_branch
          %319 = sbr.rel (%p317) target = $region24
        $region23: #{tpu_custom_call.1} parent=11 // pred_region
          _
        $region24: #{tpu_custom_call.1} parent=11 // pred_fallthru
          _
        // Predicated region
        $region25: #{tpu_custom_call.1} parent=11 // pred_check
          %p320 = pneg %p142
        $region26: #{tpu_custom_call.1} parent=11 // pred_check_branch
          %322 = sbr.rel (%p320) target = $region28
        $region27: #{tpu_custom_call.1} parent=11 // pred_region
          _
        $region28: #{tpu_custom_call.1} parent=11 // pred_fallthru
          _
        // Predicated region
        $region29: #{tpu_custom_call.1} parent=11 // pred_check
          %p323 = pneg %p163
        $region30: #{tpu_custom_call.1} parent=11 // pred_check_branch
          %325 = sbr.rel (%p323) target = $region32
        $region31: #{tpu_custom_call.1} parent=11 // pred_region
          _
        $region32: #{tpu_custom_call.1} parent=11 // pred_fallthru
          _
        // Predicated region
        $region33: #{tpu_custom_call.1} parent=11 // pred_check
          %p326 = pneg %p184
        $region34: #{tpu_custom_call.1} parent=11 // pred_check_branch
          %328 = sbr.rel (%p326) target = $region36
        $region35: #{tpu_custom_call.1} parent=11 // pred_region
          _
        $region36: #{tpu_custom_call.1} parent=11 // pred_fallthru
          _
        // Predicated region
        $region37: #{tpu_custom_call.1} parent=11 // pred_check
          %p329 = pneg %p205
        $region38: #{tpu_custom_call.1} parent=11 // pred_check_branch
          %331 = sbr.rel (%p329) target = $region40
        $region39: #{tpu_custom_call.1} parent=11 // pred_region
          _
        $region40: #{tpu_custom_call.1} parent=11 // pred_fallthru
          _
        // Predicated region
        $region41: #{tpu_custom_call.1} parent=11 // pred_check
          %p332 = pneg %p226
        $region42: #{tpu_custom_call.1} parent=11 // pred_check_branch
          %334 = sbr.rel (%p332) target = $region44
        $region43: #{tpu_custom_call.1} parent=11 // pred_region
          _
        $region44: #{tpu_custom_call.1} parent=11 // pred_fallthru
          _
        // Predicated region
        $region45: #{tpu_custom_call.1} parent=11 // pred_check
          %p335 = pneg %p247
        $region46: #{tpu_custom_call.1} parent=11 // pred_check_branch
          %337 = sbr.rel (%p335) target = $region48
        $region47: #{tpu_custom_call.1} parent=11 // pred_region
          _
        $region48: #{tpu_custom_call.1} parent=11 // pred_fallthru
          _
        // Predicated region
        $region49: #{tpu_custom_call.1} parent=11 // pred_check
          %p338 = pneg %p268
        $region50: #{tpu_custom_call.1} parent=11 // pred_check_branch
          %340 = sbr.rel (%p338) target = $region52
        $region51: #{tpu_custom_call.1} parent=11 // pred_region
          _
        $region52: #{tpu_custom_call.1} parent=11 // pred_fallthru
          _
      $region12: #{tpu_custom_call.1} parent=5 // pred_fallthru
        _
      %p341 = scmp.lt.s32.totalorder %s20, 4
      // Predicated region
      $region53: #{tpu_custom_call.1} parent=5 // pred_check
        %p342 = pneg %p341
      $region54: #{tpu_custom_call.1} parent=5 // pred_check_branch
        %344 = sbr.rel (%p342) target = $region56
      $region55: #{tpu_custom_call.1} parent=5 // pred_region
        // Predicated region
        $region57: #{tpu_custom_call.1} parent=55 // pred_check
          %p345 = pneg %p52
        $region58: #{tpu_custom_call.1} parent=55 // pred_check_branch
          %347 = sbr.rel (%p345) target = $region60
        $region59: #{tpu_custom_call.1} parent=55 // pred_region
          %p348 = scmp.lt.s32.totalorder %s27, 1
          %s349 = scalar_select %p348, %s27, 1
          %s350 = smul.addr %s349, 41
          %s351 = smul.addr %s350, 8
          %s352 = scalar_lea.vmem %s0, %s351
        $region60: #{tpu_custom_call.1} parent=55 // pred_fallthru
          _
      $region56: #{tpu_custom_call.1} parent=5 // pred_fallthru
        _
      %p353 = scmp.le.s32.totalorder 1, %s20
      %p354 = scmp.lt.s32.totalorder %s20, 5
      %p355 = pnand %p353, %p354
      %p356 = pneg %p355
      // Predicated region
      $region61: #{tpu_custom_call.1} parent=5 // pred_check
        _
      $region62: #{tpu_custom_call.1} parent=5 // pred_check_branch
        %358 = sbr.rel (%p355) target = $region64
      $region63: #{tpu_custom_call.1} parent=5 // pred_region
        %s359 = ssub.s32 %s20, 1
        %p360 = scmp.lt.s32.totalorder %s29, 1
        %s361 = scalar_select %p360, %s29, 1
        %s362 = smul.addr %s361, 41
        %s363 = smul.addr %s362, 8
        %s364 = scalar_lea.vmem %s0, %s363
        %p365 = pneg %p58
        %p366 = pneg %p55
        %p367 = pneg %p79
        %p368 = pneg %p76
        %p369 = pneg %p100
        %p370 = pneg %p97
        %p371 = pneg %p121
        %p372 = pneg %p118
        %p373 = pneg %p142
        %p374 = pneg %p139
        %p375 = pneg %p163
        %p376 = pneg %p160
        %p377 = pneg %p184
        %p378 = pneg %p181
        %p379 = pneg %p205
        %p380 = pneg %p202
        %p381 = pneg %p226
        %p382 = pneg %p223
        %p383 = pneg %p247
        %p384 = pneg %p244
        %p385 = pneg %p268
        %p386 = pneg %p265
        %p387 = pneg %p296
        %p388 = pneg %p293
        %s389 = sand.u32 %s283, 1
        %s390 = scalar_lea.sflag [#allocation4], %s389
        %s391 = sand.u32 %s283, 1
        %s392 = smul.addr %s391, 128
        %s393 = scalar_lea.vmem [#allocation3], %s392
        %p394 = scmp.lt.s32.totalorder %s29, 1
        %s395 = scalar_select %p394, %s29, 1
        %s396 = smul.addr %s395, 41
        %s397 = smul.addr %s396, 8
        %s398 = scalar_lea.vmem %s0, %s397
        %s399 = smul.u32 8, %s30
        %s400 = smul.u32 %s30, 144
        %s401 = scalar_lea.vmem %s398, %s400
        %v402 = vld [vmem:[%s401] sm:$0xff]
        %v403 = vld [vmem:[%s401 + $0x8] sm:$0xff]
        %v404 = vld [vmem:[%s401 + $0x10] sm:$0xff]
        %v405 = vld [vmem:[%s401 + $0x18] sm:$0xff]
        %v406 = vld [vmem:[%s401 + $0x20] sm:$0xff]
        %v407 = vld [vmem:[%s401 + $0x28] sm:$0xff]
        %v408 = vld [vmem:[%s401 + $0x30] sm:$0xff]
        %v409 = vld [vmem:[%s401 + $0x38] sm:$0xff]
        %v410 = vld [vmem:[%s401 + $0x40] sm:$0xff]
        %v411 = vld [vmem:[%s401 + $0x48] sm:$0xff]
        %v412 = vld [vmem:[%s401 + $0x50] sm:$0xff]
        %v413 = vld [vmem:[%s401 + $0x58] sm:$0xff]
        %v414 = vld [vmem:[%s401 + $0x60] sm:$0xff]
        %v415 = vld [vmem:[%s401 + $0x68] sm:$0xff]
        %v416 = vld [vmem:[%s401 + $0x70] sm:$0xff]
        %v417 = vld [vmem:[%s401 + $0x78] sm:$0xff]
        %v418 = vld [vmem:[%s401 + $0x80] sm:$0xff]
        %v419 = vld [vmem:[%s401 + $0x88] sm:$0xff]
        %v420 = vld [vmem:[%s401 + $0x90] sm:$0xff]
        %v421 = vld [vmem:[%s401 + $0x98] sm:$0xff]
        %v422 = vld [vmem:[%s401 + $0xa0] sm:$0xff]
        %v423 = vld [vmem:[%s401 + $0xa8] sm:$0xff]
        %v424 = vld [vmem:[%s401 + $0xb0] sm:$0xf]
        %v425 = vld [vmem:[%s2] sm:$0xff]
        %v426 = vld [vmem:[%s2 + $0x8] sm:$0xff]
        %v427 = vld [vmem:[%s2 + $0x10] sm:$0xff]
        %v428 = vld [vmem:[%s2 + $0x18] sm:$0xff]
        %v429 = vld [vmem:[%s2 + $0x20] sm:$0xff]
        %v430 = vld [vmem:[%s2 + $0x28] sm:$0xff]
        %v431 = vld [vmem:[%s2 + $0x30] sm:$0xff]
        %v432 = vld [vmem:[%s2 + $0x38] sm:$0xff]
        %v433 = vld [vmem:[%s2 + $0x40] sm:$0xff]
        %v434 = vld [vmem:[%s2 + $0x48] sm:$0xff]
        %v435 = vld [vmem:[%s2 + $0x50] sm:$0xff]
        %v436 = vld [vmem:[%s2 + $0x58] sm:$0xff]
        %v437 = vld [vmem:[%s2 + $0x60] sm:$0xff]
        %v438 = vld [vmem:[%s2 + $0x68] sm:$0xff]
        %v439 = vld [vmem:[%s2 + $0x70] sm:$0xff]
        %v440 = vld [vmem:[%s2 + $0x78] sm:$0xff]
        %441 = vmatpush.msra.mxu0 %v440
        %442 = vmatpush.msra.mxu0 %v439
        %443 = vmatpush.msra.mxu0 %v438
        %444 = vmatpush.msra.mxu0 %v437
        %445 = vmatpush.msra.mxu0 %v436
        %446 = vmatpush.msra.mxu0 %v435
        %447 = vmatpush.msra.mxu0 %v434
        %448 = vmatpush.msra.mxu0 %v433
        %449 = vmatpush.msra.mxu0 %v432
        %450 = vmatpush.msra.mxu0 %v431
        %451 = vmatpush.msra.mxu0 %v430
        %452 = vmatpush.msra.mxu0 %v429
        %453 = vmatpush.msra.mxu0 %v428
        %454 = vmatpush.msra.mxu0 %v427
        %455 = vmatpush.msra.mxu0 %v426
        %456 = vmatpush.msra.mxu0 %v425
        %457 = vmatmul.f32.gmra.mxu0 %v402
        %v458 = vpop.f32.mrf.mxu0
        %v459 = vadd.f32 0.0, %v458
        %460 = vmatmul.f32.gmra.mxu0 %v403
        %v461 = vpop.f32.mrf.mxu0
        %v462 = vadd.f32 0.0, %v461
        %463 = vmatmul.f32.gmra.mxu0 %v404
        %v464 = vpop.f32.mrf.mxu0
        %v465 = vadd.f32 0.0, %v464
        %466 = vmatmul.f32.gmra.mxu0 %v405
        %v467 = vpop.f32.mrf.mxu0
        %v468 = vadd.f32 0.0, %v467
        %469 = vmatmul.f32.gmra.mxu0 %v406
        %v470 = vpop.f32.mrf.mxu0
        %v471 = vadd.f32 0.0, %v470
        %472 = vmatmul.f32.gmra.mxu0 %v407
        %v473 = vpop.f32.mrf.mxu0
        %v474 = vadd.f32 0.0, %v473
        %475 = vmatmul.f32.gmra.mxu0 %v408
        %v476 = vpop.f32.mrf.mxu0
        %v477 = vadd.f32 0.0, %v476
        %478 = vmatmul.f32.gmra.mxu0 %v409
        %v479 = vpop.f32.mrf.mxu0
        %v480 = vadd.f32 0.0, %v479
        %481 = vmatmul.f32.gmra.mxu0 %v410
        %v482 = vpop.f32.mrf.mxu0
        %v483 = vadd.f32 0.0, %v482
        %484 = vmatmul.f32.gmra.mxu0 %v411
        %v485 = vpop.f32.mrf.mxu0
        %v486 = vadd.f32 0.0, %v485
        %487 = vmatmul.f32.gmra.mxu0 %v412
        %v488 = vpop.f32.mrf.mxu0
        %v489 = vadd.f32 0.0, %v488
        %490 = vmatmul.f32.gmra.mxu0 %v413
        %v491 = vpop.f32.mrf.mxu0
        %v492 = vadd.f32 0.0, %v491
        %493 = vmatmul.f32.gmra.mxu0 %v414
        %v494 = vpop.f32.mrf.mxu0
        %v495 = vadd.f32 0.0, %v494
        %496 = vmatmul.f32.gmra.mxu0 %v415
        %v497 = vpop.f32.mrf.mxu0
        %v498 = vadd.f32 0.0, %v497
        %499 = vmatmul.f32.gmra.mxu0 %v416
        %v500 = vpop.f32.mrf.mxu0
        %v501 = vadd.f32 0.0, %v500
        %502 = vmatmul.f32.gmra.mxu0 %v417
        %v503 = vpop.f32.mrf.mxu0
        %v504 = vadd.f32 0.0, %v503
        %505 = vmatmul.f32.gmra.mxu0 %v418
        %v506 = vpop.f32.mrf.mxu0
        %v507 = vadd.f32 0.0, %v506
        %508 = vmatmul.f32.gmra.mxu0 %v419
        %v509 = vpop.f32.mrf.mxu0
        %v510 = vadd.f32 0.0, %v509
        %511 = vmatmul.f32.gmra.mxu0 %v420
        %v512 = vpop.f32.mrf.mxu0
        %v513 = vadd.f32 0.0, %v512
        %514 = vmatmul.f32.gmra.mxu0 %v421
        %v515 = vpop.f32.mrf.mxu0
        %v516 = vadd.f32 0.0, %v515
        %517 = vmatmul.f32.gmra.mxu0 %v422
        %v518 = vpop.f32.mrf.mxu0
        %v519 = vadd.f32 0.0, %v518
        %520 = vmatmul.f32.gmra.mxu0 %v423
        %v521 = vpop.f32.mrf.mxu0
        %v522 = vadd.f32 0.0, %v521
        %523 = vmatmul.f32.gmra.mxu0 %v424
        %v524 = vpop.f32.mrf.mxu0
        %v525 = vadd.f32 0.0, %v524
        %526 = vdwg.mxu0
        %v527 = vld [vmem:[%s3] sm:$0x1]
        %v529 = vperm.slane %v527, 0
        %v531 = vmul.f32 %v459, %v529
        %v532 = vmul.f32 %v462, %v529
        %v533 = vmul.f32 %v465, %v529
        %v534 = vmul.f32 %v468, %v529
        %v535 = vmul.f32 %v471, %v529
        %v536 = vmul.f32 %v474, %v529
        %v537 = vmul.f32 %v477, %v529
        %v538 = vmul.f32 %v480, %v529
        %v539 = vmul.f32 %v483, %v529
        %v540 = vmul.f32 %v486, %v529
        %v541 = vmul.f32 %v489, %v529
        %v542 = vmul.f32 %v492, %v529
        %v543 = vmul.f32 %v495, %v529
        %v544 = vmul.f32 %v498, %v529
        %v545 = vmul.f32 %v501, %v529
        %v546 = vmul.f32 %v504, %v529
        %v547 = vmul.f32 %v507, %v529
        %v548 = vmul.f32 %v510, %v529
        %v549 = vmul.f32 %v513, %v529
        %v550 = vmul.f32 %v516, %v529
        %v551 = vmul.f32 %v519, %v529
        %v552 = vmul.f32 %v522, %v529
        %v553 = vmul.f32 %v525, %v529
        %v554 = vld [vmem:[%s4] sm:$0x1]
        %v556 = vperm.slane %v554, 0
        %v558 = vadd.f32 %v531, %v556
        %v559 = vadd.f32 %v532, %v556
        %v560 = vadd.f32 %v533, %v556
        %v561 = vadd.f32 %v534, %v556
        %v562 = vadd.f32 %v535, %v556
        %v563 = vadd.f32 %v536, %v556
        %v564 = vadd.f32 %v537, %v556
        %v565 = vadd.f32 %v538, %v556
        %v566 = vadd.f32 %v539, %v556
        %v567 = vadd.f32 %v540, %v556
        %v568 = vadd.f32 %v541, %v556
        %v569 = vadd.f32 %v542, %v556
        %v570 = vadd.f32 %v543, %v556
        %v571 = vadd.f32 %v544, %v556
        %v572 = vadd.f32 %v545, %v556
        %v573 = vadd.f32 %v546, %v556
        %v574 = vadd.f32 %v547, %v556
        %v575 = vadd.f32 %v548, %v556
        %v576 = vadd.f32 %v549, %v556
        %v577 = vadd.f32 %v550, %v556
        %v578 = vadd.f32 %v551, %v556
        %v579 = vadd.f32 %v552, %v556
        %v580 = vadd.f32 %v553, %v556
        %v581 = vmax.f32 %v558, 0.0
        %v582 = vmax.f32 %v559, 0.0
        %v583 = vmax.f32 %v560, 0.0
        %v584 = vmax.f32 %v561, 0.0
        %v585 = vmax.f32 %v562, 0.0
        %v586 = vmax.f32 %v563, 0.0
        %v587 = vmax.f32 %v564, 0.0
        %v588 = vmax.f32 %v565, 0.0
        %v589 = vmax.f32 %v566, 0.0
        %v590 = vmax.f32 %v567, 0.0
        %v591 = vmax.f32 %v568, 0.0
        %v592 = vmax.f32 %v569, 0.0
        %v593 = vmax.f32 %v570, 0.0
        %v594 = vmax.f32 %v571, 0.0
        %v595 = vmax.f32 %v572, 0.0
        %v596 = vmax.f32 %v573, 0.0
        %v597 = vmax.f32 %v574, 0.0
        %v598 = vmax.f32 %v575, 0.0
        %v599 = vmax.f32 %v576, 0.0
        %v600 = vmax.f32 %v577, 0.0
        %v601 = vmax.f32 %v578, 0.0
        %v602 = vmax.f32 %v579, 0.0
        %v603 = vmax.f32 %v580, 0.0
        %v604 = vmin.f32 %v581, 6.0
        %v605 = vmin.f32 %v582, 6.0
        %v606 = vmin.f32 %v583, 6.0
        %v607 = vmin.f32 %v584, 6.0
        %v608 = vmin.f32 %v585, 6.0
        %v609 = vmin.f32 %v586, 6.0
        %v610 = vmin.f32 %v587, 6.0
        %v611 = vmin.f32 %v588, 6.0
        %v612 = vmin.f32 %v589, 6.0
        %v613 = vmin.f32 %v590, 6.0
        %v614 = vmin.f32 %v591, 6.0
        %v615 = vmin.f32 %v592, 6.0
        %v616 = vmin.f32 %v593, 6.0
        %v617 = vmin.f32 %v594, 6.0
        %v618 = vmin.f32 %v595, 6.0
        %v619 = vmin.f32 %v596, 6.0
        %v620 = vmin.f32 %v597, 6.0
        %v621 = vmin.f32 %v598, 6.0
        %v622 = vmin.f32 %v599, 6.0
        %v623 = vmin.f32 %v600, 6.0
        %v624 = vmin.f32 %v601, 6.0
        %v625 = vmin.f32 %v602, 6.0
        %v626 = vmin.f32 %v603, 6.0
        %s627 = scalar_lea.vmem %s1, %s400
        %v628 = vld [vmem:[%s627] sm:$0xff]
        %v629 = vld [vmem:[%s627 + $0x8] sm:$0xff]
        %v630 = vld [vmem:[%s627 + $0x10] sm:$0xff]
        %v631 = vld [vmem:[%s627 + $0x18] sm:$0xff]
        %v632 = vld [vmem:[%s627 + $0x20] sm:$0xff]
        %v633 = vld [vmem:[%s627 + $0x28] sm:$0xff]
        %v634 = vld [vmem:[%s627 + $0x30] sm:$0xff]
        %v635 = vld [vmem:[%s627 + $0x38] sm:$0xff]
        %v636 = vld [vmem:[%s627 + $0x40] sm:$0xff]
        %v637 = vld [vmem:[%s627 + $0x48] sm:$0xff]
        %v638 = vld [vmem:[%s627 + $0x50] sm:$0xff]
        %v639 = vld [vmem:[%s627 + $0x58] sm:$0xff]
        %v640 = vld [vmem:[%s627 + $0x60] sm:$0xff]
        %v641 = vld [vmem:[%s627 + $0x68] sm:$0xff]
        %v642 = vld [vmem:[%s627 + $0x70] sm:$0xff]
        %v643 = vld [vmem:[%s627 + $0x78] sm:$0xff]
        %v644 = vld [vmem:[%s627 + $0x80] sm:$0xff]
        %v645 = vld [vmem:[%s627 + $0x88] sm:$0xff]
        %v646 = vld [vmem:[%s627 + $0x90] sm:$0xff]
        %v647 = vld [vmem:[%s627 + $0x98] sm:$0xff]
        %v648 = vld [vmem:[%s627 + $0xa0] sm:$0xff]
        %v649 = vld [vmem:[%s627 + $0xa8] sm:$0xff]
        %v650 = vld [vmem:[%s627 + $0xb0] sm:$0xf]
        %652 = vset.pattern.permute.xlu0 0
        %653 = vperm.xlu0 %652, %v628
        %v654 = vpop.permute.xlu0 %653
        %657 = vset.pattern.permute.xlu0 0
        %658 = vperm.xlu0 %657, %v629
        %v659 = vpop.permute.xlu0 %658
        %662 = vset.pattern.permute.xlu0 0
        %663 = vperm.xlu0 %662, %v630
        %v664 = vpop.permute.xlu0 %663
        %667 = vset.pattern.permute.xlu0 0
        %668 = vperm.xlu0 %667, %v631
        %v669 = vpop.permute.xlu0 %668
        %672 = vset.pattern.permute.xlu0 0
        %673 = vperm.xlu0 %672, %v632
        %v674 = vpop.permute.xlu0 %673
        %677 = vset.pattern.permute.xlu0 0
        %678 = vperm.xlu0 %677, %v633
        %v679 = vpop.permute.xlu0 %678
        %682 = vset.pattern.permute.xlu0 0
        %683 = vperm.xlu0 %682, %v634
        %v684 = vpop.permute.xlu0 %683
        %687 = vset.pattern.permute.xlu0 0
        %688 = vperm.xlu0 %687, %v635
        %v689 = vpop.permute.xlu0 %688
        %692 = vset.pattern.permute.xlu0 0
        %693 = vperm.xlu0 %692, %v636
        %v694 = vpop.permute.xlu0 %693
        %697 = vset.pattern.permute.xlu0 0
        %698 = vperm.xlu0 %697, %v637
        %v699 = vpop.permute.xlu0 %698
        %702 = vset.pattern.permute.xlu0 0
        %703 = vperm.xlu0 %702, %v638
        %v704 = vpop.permute.xlu0 %703
        %707 = vset.pattern.permute.xlu0 0
        %708 = vperm.xlu0 %707, %v639
        %v709 = vpop.permute.xlu0 %708
        %712 = vset.pattern.permute.xlu0 0
        %713 = vperm.xlu0 %712, %v640
        %v714 = vpop.permute.xlu0 %713
        %717 = vset.pattern.permute.xlu0 0
        %718 = vperm.xlu0 %717, %v641
        %v719 = vpop.permute.xlu0 %718
        %722 = vset.pattern.permute.xlu0 0
        %723 = vperm.xlu0 %722, %v642
        %v724 = vpop.permute.xlu0 %723
        %727 = vset.pattern.permute.xlu0 0
        %728 = vperm.xlu0 %727, %v643
        %v729 = vpop.permute.xlu0 %728
        %732 = vset.pattern.permute.xlu0 0
        %733 = vperm.xlu0 %732, %v644
        %v734 = vpop.permute.xlu0 %733
        %737 = vset.pattern.permute.xlu0 0
        %738 = vperm.xlu0 %737, %v645
        %v739 = vpop.permute.xlu0 %738
        %742 = vset.pattern.permute.xlu0 0
        %743 = vperm.xlu0 %742, %v646
        %v744 = vpop.permute.xlu0 %743
        %747 = vset.pattern.permute.xlu0 0
        %748 = vperm.xlu0 %747, %v647
        %v749 = vpop.permute.xlu0 %748
        %752 = vset.pattern.permute.xlu0 0
        %753 = vperm.xlu0 %752, %v648
        %v754 = vpop.permute.xlu0 %753
        %757 = vset.pattern.permute.xlu0 0
        %758 = vperm.xlu0 %757, %v649
        %v759 = vpop.permute.xlu0 %758
        %762 = vset.pattern.permute.xlu0 0
        %763 = vperm.xlu0 %762, %v650
        %v764 = vpop.permute.xlu0 %763
        %v766 = vmul.f32 %v604, %v654
        %v767 = vmul.f32 %v605, %v659
        %v768 = vmul.f32 %v606, %v664
        %v769 = vmul.f32 %v607, %v669
        %v770 = vmul.f32 %v608, %v674
        %v771 = vmul.f32 %v609, %v679
        %v772 = vmul.f32 %v610, %v684
        %v773 = vmul.f32 %v611, %v689
        %v774 = vmul.f32 %v612, %v694
        %v775 = vmul.f32 %v613, %v699
        %v776 = vmul.f32 %v614, %v704
        %v777 = vmul.f32 %v615, %v709
        %v778 = vmul.f32 %v616, %v714
        %v779 = vmul.f32 %v617, %v719
        %v780 = vmul.f32 %v618, %v724
        %v781 = vmul.f32 %v619, %v729
        %v782 = vmul.f32 %v620, %v734
        %v783 = vmul.f32 %v621, %v739
        %v784 = vmul.f32 %v622, %v744
        %v785 = vmul.f32 %v623, %v749
        %v786 = vmul.f32 %v624, %v754
        %v787 = vmul.f32 %v625, %v759
        %v788 = vmul.f32 %v626, %v764
        %789 = vst [vmem:[#allocation2] sm:$0xff] %v766
        %790 = vst [vmem:[#allocation2 + $0x8] sm:$0xff] %v767
        %791 = vst [vmem:[#allocation2 + $0x10] sm:$0xff] %v768
        %792 = vst [vmem:[#allocation2 + $0x18] sm:$0xff] %v769
        %793 = vst [vmem:[#allocation2 + $0x20] sm:$0xff] %v770
        %794 = vst [vmem:[#allocation2 + $0x28] sm:$0xff] %v771
        %795 = vst [vmem:[#allocation2 + $0x30] sm:$0xff] %v772
        %796 = vst [vmem:[#allocation2 + $0x38] sm:$0xff] %v773
        %797 = vst [vmem:[#allocation2 + $0x40] sm:$0xff] %v774
        %798 = vst [vmem:[#allocation2 + $0x48] sm:$0xff] %v775
        %799 = vst [vmem:[#allocation2 + $0x50] sm:$0xff] %v776
        %800 = vst [vmem:[#allocation2 + $0x58] sm:$0xff] %v777
        %801 = vst [vmem:[#allocation2 + $0x60] sm:$0xff] %v778
        %802 = vst [vmem:[#allocation2 + $0x68] sm:$0xff] %v779
        %803 = vst [vmem:[#allocation2 + $0x70] sm:$0xff] %v780
        %804 = vst [vmem:[#allocation2 + $0x78] sm:$0xff] %v781
        %805 = vst [vmem:[#allocation2 + $0x80] sm:$0xff] %v782
        %806 = vst [vmem:[#allocation2 + $0x88] sm:$0xff] %v783
        %807 = vst [vmem:[#allocation2 + $0x90] sm:$0xff] %v784
        %808 = vst [vmem:[#allocation2 + $0x98] sm:$0xff] %v785
        %809 = vst [vmem:[#allocation2 + $0xa0] sm:$0xff] %v786
        %810 = vst [vmem:[#allocation2 + $0xa8] sm:$0xff] %v787
        %811 = vst [vmem:[#allocation2 + $0xb0] sm:$0xf] %v788
        %v812 = vld [vmem:[%s5] sm:$0x7]
        %v813 = vld [vmem:[%s5 + $0x4] sm:$0x7]
        %v814 = vld [vmem:[%s5 + $0x8] sm:$0x7]
        %v815 = vld [vmem:[#allocation2] sm:$0xff]
        %v816 = vld [vmem:[#allocation2 + $0x8] sm:$0xff]
        %v817 = vld [vmem:[#allocation2 + $0x10] sm:$0x3]
        %v818 = vperm.slane %v812, 0
        %v819 = vmul.f32 %v815, %v818
        %v820 = vmul.f32 %v816, %v818
        %v821 = vadd.f32 %v819, 0.0
        %v822 = vadd.f32 %v820, 0.0
        %v823 = vperm.slane %v812, 1
        %v824 = vmul.f32 %v815, %v823
        %v825 = vmul.f32 %v816, %v823
        %v826 = vmul.f32 %v817, %v823
        %vm830 = vcmask 1046528
        %v831 = vrot.slane %v824, 1
        %v832 = vrot.slane %v825, 1
        %v833 = vsel %vm830, %v831, %v832
        %v834 = vrot.slane %v826, 1
        %v835 = vsel %vm830, %v832, %v834
        %v838 = vadd.f32 %v821, %v833
        %v839 = vadd.f32 %v822, %v835
        %v840 = vperm.slane %v812, 2
        %v841 = vmul.f32 %v815, %v840
        %v842 = vmul.f32 %v816, %v840
        %v843 = vmul.f32 %v817, %v840
        %vm847 = vcmask 1045504
        %v848 = vrot.slane %v841, 2
        %v849 = vrot.slane %v842, 2
        %v850 = vsel %vm847, %v848, %v849
        %v851 = vrot.slane %v843, 2
        %v852 = vsel %vm847, %v849, %v851
        %v855 = vadd.f32 %v838, %v850
        %v856 = vadd.f32 %v839, %v852
        %v857 = vld [vmem:[#allocation2 + $0x12] sm:$0xff]
        %v858 = vld [vmem:[#allocation2 + $0x1a] sm:$0xff]
        %v859 = vld [vmem:[#allocation2 + $0x22] sm:$0x3]
        %v860 = vperm.slane %v813, 0
        %v861 = vmul.f32 %v857, %v860
        %v862 = vmul.f32 %v858, %v860
        %v863 = vadd.f32 %v855, %v861
        %v864 = vadd.f32 %v856, %v862
        %v865 = vperm.slane %v813, 1
        %v866 = vmul.f32 %v857, %v865
        %v867 = vmul.f32 %v858, %v865
        %v868 = vmul.f32 %v859, %v865
        %v872 = vrot.slane %v866, 1
        %v873 = vrot.slane %v867, 1
        %v874 = vsel %vm830, %v872, %v873
        %v875 = vrot.slane %v868, 1
        %v876 = vsel %vm830, %v873, %v875
        %v879 = vadd.f32 %v863, %v874
        %v880 = vadd.f32 %v864, %v876
        %v881 = vperm.slane %v813, 2
        %v882 = vmul.f32 %v857, %v881
        %v883 = vmul.f32 %v858, %v881
        %v884 = vmul.f32 %v859, %v881
        %v888 = vrot.slane %v882, 2
        %v889 = vrot.slane %v883, 2
        %v890 = vsel %vm847, %v888, %v889
        %v891 = vrot.slane %v884, 2
        %v892 = vsel %vm847, %v889, %v891
        %v895 = vadd.f32 %v879, %v890
        %v896 = vadd.f32 %v880, %v892
        %v897 = vld [vmem:[#allocation2 + $0x24] sm:$0xff]
        %v898 = vld [vmem:[#allocation2 + $0x2c] sm:$0xff]
        %v899 = vld [vmem:[#allocation2 + $0x34] sm:$0x3]
        %v900 = vperm.slane %v814, 0
        %v901 = vmul.f32 %v897, %v900
        %v902 = vmul.f32 %v898, %v900
        %v903 = vadd.f32 %v895, %v901
        %v904 = vadd.f32 %v896, %v902
        %v905 = vperm.slane %v814, 1
        %v906 = vmul.f32 %v897, %v905
        %v907 = vmul.f32 %v898, %v905
        %v908 = vmul.f32 %v899, %v905
        %v912 = vrot.slane %v906, 1
        %v913 = vrot.slane %v907, 1
        %v914 = vsel %vm830, %v912, %v913
        %v915 = vrot.slane %v908, 1
        %v916 = vsel %vm830, %v913, %v915
        %v919 = vadd.f32 %v903, %v914
        %v920 = vadd.f32 %v904, %v916
        %v921 = vperm.slane %v814, 2
        %v922 = vmul.f32 %v897, %v921
        %v923 = vmul.f32 %v898, %v921
        %v924 = vmul.f32 %v899, %v921
        %v928 = vrot.slane %v922, 2
        %v929 = vrot.slane %v923, 2
        %v930 = vsel %vm847, %v928, %v929
        %v931 = vrot.slane %v924, 2
        %v932 = vsel %vm847, %v929, %v931
        %v935 = vadd.f32 %v919, %v930
        %v936 = vadd.f32 %v920, %v932
        %v937 = vld [vmem:[%s6] sm:$0x1]
        %v939 = vperm.slane %v937, 0
        %v941 = vmul.f32 %v935, %v939
        %v942 = vmul.f32 %v936, %v939
        %v943 = vld [vmem:[%s7] sm:$0x1]
        %v945 = vperm.slane %v943, 0
        %v947 = vadd.f32 %v941, %v945
        %v948 = vadd.f32 %v942, %v945
        %v949 = vmax.f32 %v947, 0.0
        %v950 = vmax.f32 %v948, 0.0
        %v951 = vmin.f32 %v949, 6.0
        %v952 = vmin.f32 %v950, 6.0
        %v953 = vld [vmem:[%s8] sm:$0xff]
        %v954 = vld [vmem:[%s8 + $0x8] sm:$0xff]
        %v955 = vld [vmem:[%s8 + $0x10] sm:$0xff]
        %v956 = vld [vmem:[%s8 + $0x18] sm:$0xff]
        %v957 = vld [vmem:[%s8 + $0x20] sm:$0xff]
        %v958 = vld [vmem:[%s8 + $0x28] sm:$0xff]
        %v959 = vld [vmem:[%s8 + $0x30] sm:$0xff]
        %v960 = vld [vmem:[%s8 + $0x38] sm:$0xff]
        %v961 = vld [vmem:[%s8 + $0x40] sm:$0xff]
        %v962 = vld [vmem:[%s8 + $0x48] sm:$0xff]
        %v963 = vld [vmem:[%s8 + $0x50] sm:$0xff]
        %v964 = vld [vmem:[%s8 + $0x58] sm:$0xff]
        %v965 = vld [vmem:[%s8 + $0x60] sm:$0xff]
        %v966 = vld [vmem:[%s8 + $0x68] sm:$0xff]
        %v967 = vld [vmem:[%s8 + $0x70] sm:$0xff]
        %v968 = vld [vmem:[%s8 + $0x78] sm:$0xff]
        %969 = vmatpush.msra.mxu0 %v968
        %970 = vmatpush.msra.mxu0 %v967
        %971 = vmatpush.msra.mxu0 %v966
        %972 = vmatpush.msra.mxu0 %v965
        %973 = vmatpush.msra.mxu0 %v964
        %974 = vmatpush.msra.mxu0 %v963
        %975 = vmatpush.msra.mxu0 %v962
        %976 = vmatpush.msra.mxu0 %v961
        %977 = vmatpush.msra.mxu0 %v960
        %978 = vmatpush.msra.mxu0 %v959
        %979 = vmatpush.msra.mxu0 %v958
        %980 = vmatpush.msra.mxu0 %v957
        %981 = vmatpush.msra.mxu0 %v956
        %982 = vmatpush.msra.mxu0 %v955
        %983 = vmatpush.msra.mxu0 %v954
        %984 = vmatpush.msra.mxu0 %v953
        %985 = vmatmul.f32.gmra.mxu0 %v951
        %v986 = vpop.f32.mrf.mxu0
        %v987 = vadd.f32 0.0, %v986
        %988 = vmatmul.f32.gmra.mxu0 %v952
        %v989 = vpop.f32.mrf.mxu0
        %v990 = vadd.f32 0.0, %v989
        %991 = vdwg.mxu0
        %v992 = vld [vmem:[%s9] sm:$0x1]
        %v994 = vperm.slane %v992, 0
        %v996 = vmul.f32 %v987, %v994
        %v997 = vmul.f32 %v990, %v994
        %v998 = vld [vmem:[%s10] sm:$0x1]
        %v1000 = vperm.slane %v998, 0
        %v1002 = vadd.f32 %v996, %v1000
        %v1003 = vadd.f32 %v997, %v1000
        %s1004 = smul.u32 %s30, 8
        %s1005 = sadd.s32 %s1004, 1
        %s1006 = smul.u32 %s1005, 18
        %s1007 = sadd.s32 %s1006, 1
        %s1008 = scalar_lea.vmem %s398, %s1007
        %v1009 = vld [vmem:[%s1008] sm:$0xff]
        %v1010 = vld [vmem:[%s1008 + $0x8] sm:$0xff]
        %v1011 = vadd.f32 %v1002, %v1009
        %v1012 = vadd.f32 %v1003, %v1010
        %1013 = vst [vmem:[%s393] sm:$0xff] %v1011
        %1014 = vst [vmem:[%s393 + $0x8] sm:$0xff] %v1012
        %v1015 = vld [vmem:[#allocation2 + $0x12] sm:$0xff]
        %v1016 = vld [vmem:[#allocation2 + $0x1a] sm:$0xff]
        %v1017 = vld [vmem:[#allocation2 + $0x22] sm:$0x3]
        %v1018 = vmul.f32 %v1015, %v818
        %v1019 = vmul.f32 %v1016, %v818
        %v1020 = vadd.f32 %v1018, 0.0
        %v1021 = vadd.f32 %v1019, 0.0
        %v1022 = vmul.f32 %v1015, %v823
        %v1023 = vmul.f32 %v1016, %v823
        %v1024 = vmul.f32 %v1017, %v823
        %v1028 = vrot.slane %v1022, 1
        %v1029 = vrot.slane %v1023, 1
        %v1030 = vsel %vm830, %v1028, %v1029
        %v1031 = vrot.slane %v1024, 1
        %v1032 = vsel %vm830, %v1029, %v1031
        %v1035 = vadd.f32 %v1020, %v1030
        %v1036 = vadd.f32 %v1021, %v1032
        %v1037 = vmul.f32 %v1015, %v840
        %v1038 = vmul.f32 %v1016, %v840
        %v1039 = vmul.f32 %v1017, %v840
        %v1043 = vrot.slane %v1037, 2
        %v1044 = vrot.slane %v1038, 2
        %v1045 = vsel %vm847, %v1043, %v1044
        %v1046 = vrot.slane %v1039, 2
        %v1047 = vsel %vm847, %v1044, %v1046
        %v1050 = vadd.f32 %v1035, %v1045
        %v1051 = vadd.f32 %v1036, %v1047
        %v1052 = vld [vmem:[#allocation2 + $0x24] sm:$0xff]
        %v1053 = vld [vmem:[#allocation2 + $0x2c] sm:$0xff]
        %v1054 = vld [vmem:[#allocation2 + $0x34] sm:$0x3]
        %v1055 = vmul.f32 %v1052, %v860
        %v1056 = vmul.f32 %v1053, %v860
        %v1057 = vadd.f32 %v1050, %v1055
        %v1058 = vadd.f32 %v1051, %v1056
        %v1059 = vmul.f32 %v1052, %v865
        %v1060 = vmul.f32 %v1053, %v865
        %v1061 = vmul.f32 %v1054, %v865
        %v1065 = vrot.slane %v1059, 1
        %v1066 = vrot.slane %v1060, 1
        %v1067 = vsel %vm830, %v1065, %v1066
        %v1068 = vrot.slane %v1061, 1
        %v1069 = vsel %vm830, %v1066, %v1068
        %v1072 = vadd.f32 %v1057, %v1067
        %v1073 = vadd.f32 %v1058, %v1069
        %v1074 = vmul.f32 %v1052, %v881
        %v1075 = vmul.f32 %v1053, %v881
        %v1076 = vmul.f32 %v1054, %v881
        %v1080 = vrot.slane %v1074, 2
        %v1081 = vrot.slane %v1075, 2
        %v1082 = vsel %vm847, %v1080, %v1081
        %v1083 = vrot.slane %v1076, 2
        %v1084 = vsel %vm847, %v1081, %v1083
        %v1087 = vadd.f32 %v1072, %v1082
        %v1088 = vadd.f32 %v1073, %v1084
        %v1089 = vld [vmem:[#allocation2 + $0x36] sm:$0xff]
        %v1090 = vld [vmem:[#allocation2 + $0x3e] sm:$0xff]
        %v1091 = vld [vmem:[#allocation2 + $0x46] sm:$0x3]
        %v1092 = vmul.f32 %v1089, %v900
        %v1093 = vmul.f32 %v1090, %v900
        %v1094 = vadd.f32 %v1087, %v1092
        %v1095 = vadd.f32 %v1088, %v1093
        %v1096 = vmul.f32 %v1089, %v905
        %v1097 = vmul.f32 %v1090, %v905
        %v1098 = vmul.f32 %v1091, %v905
        %v1102 = vrot.slane %v1096, 1
        %v1103 = vrot.slane %v1097, 1
        %v1104 = vsel %vm830, %v1102, %v1103
        %v1105 = vrot.slane %v1098, 1
        %v1106 = vsel %vm830, %v1103, %v1105
        %v1109 = vadd.f32 %v1094, %v1104
        %v1110 = vadd.f32 %v1095, %v1106
        %v1111 = vmul.f32 %v1089, %v921
        %v1112 = vmul.f32 %v1090, %v921
        %v1113 = vmul.f32 %v1091, %v921
        %v1117 = vrot.slane %v1111, 2
        %v1118 = vrot.slane %v1112, 2
        %v1119 = vsel %vm847, %v1117, %v1118
        %v1120 = vrot.slane %v1113, 2
        %v1121 = vsel %vm847, %v1118, %v1120
        %v1124 = vadd.f32 %v1109, %v1119
        %v1125 = vadd.f32 %v1110, %v1121
        %v1126 = vld [vmem:[%s6] sm:$0x1]
        %v1128 = vperm.slane %v1126, 0
        %v1130 = vmul.f32 %v1124, %v1128
        %v1131 = vmul.f32 %v1125, %v1128
        %v1132 = vld [vmem:[%s7] sm:$0x1]
        %v1134 = vperm.slane %v1132, 0
        %v1136 = vadd.f32 %v1130, %v1134
        %v1137 = vadd.f32 %v1131, %v1134
        %v1138 = vmax.f32 %v1136, 0.0
        %v1139 = vmax.f32 %v1137, 0.0
        %v1140 = vmin.f32 %v1138, 6.0
        %v1141 = vmin.f32 %v1139, 6.0
        %v1142 = vld [vmem:[%s8] sm:$0xff]
        %v1143 = vld [vmem:[%s8 + $0x8] sm:$0xff]
        %v1144 = vld [vmem:[%s8 + $0x10] sm:$0xff]
        %v1145 = vld [vmem:[%s8 + $0x18] sm:$0xff]
        %v1146 = vld [vmem:[%s8 + $0x20] sm:$0xff]
        %v1147 = vld [vmem:[%s8 + $0x28] sm:$0xff]
        %v1148 = vld [vmem:[%s8 + $0x30] sm:$0xff]
        %v1149 = vld [vmem:[%s8 + $0x38] sm:$0xff]
        %v1150 = vld [vmem:[%s8 + $0x40] sm:$0xff]
        %v1151 = vld [vmem:[%s8 + $0x48] sm:$0xff]
        %v1152 = vld [vmem:[%s8 + $0x50] sm:$0xff]
        %v1153 = vld [vmem:[%s8 + $0x58] sm:$0xff]
        %v1154 = vld [vmem:[%s8 + $0x60] sm:$0xff]
        %v1155 = vld [vmem:[%s8 + $0x68] sm:$0xff]
        %v1156 = vld [vmem:[%s8 + $0x70] sm:$0xff]
        %v1157 = vld [vmem:[%s8 + $0x78] sm:$0xff]
        %1158 = vmatpush.msra.mxu0 %v1157
        %1159 = vmatpush.msra.mxu0 %v1156
        %1160 = vmatpush.msra.mxu0 %v1155
        %1161 = vmatpush.msra.mxu0 %v1154
        %1162 = vmatpush.msra.mxu0 %v1153
        %1163 = vmatpush.msra.mxu0 %v1152
        %1164 = vmatpush.msra.mxu0 %v1151
        %1165 = vmatpush.msra.mxu0 %v1150
        %1166 = vmatpush.msra.mxu0 %v1149
        %1167 = vmatpush.msra.mxu0 %v1148
        %1168 = vmatpush.msra.mxu0 %v1147
        %1169 = vmatpush.msra.mxu0 %v1146
        %1170 = vmatpush.msra.mxu0 %v1145
        %1171 = vmatpush.msra.mxu0 %v1144
        %1172 = vmatpush.msra.mxu0 %v1143
        %1173 = vmatpush.msra.mxu0 %v1142
        %1174 = vmatmul.f32.gmra.mxu0 %v1140
        %v1175 = vpop.f32.mrf.mxu0
        %v1176 = vadd.f32 0.0, %v1175
        %1177 = vmatmul.f32.gmra.mxu0 %v1141
        %v1178 = vpop.f32.mrf.mxu0
        %v1179 = vadd.f32 0.0, %v1178
        %1180 = vdwg.mxu0
        %v1181 = vld [vmem:[%s9] sm:$0x1]
        %v1183 = vperm.slane %v1181, 0
        %v1185 = vmul.f32 %v1176, %v1183
        %v1186 = vmul.f32 %v1179, %v1183
        %v1187 = vld [vmem:[%s10] sm:$0x1]
        %v1189 = vperm.slane %v1187, 0
        %v1191 = vadd.f32 %v1185, %v1189
        %v1192 = vadd.f32 %v1186, %v1189
        %s1193 = sadd.s32 %s1004, 2
        %s1194 = smul.u32 %s1193, 18
        %s1195 = sadd.s32 %s1194, 1
        %s1196 = scalar_lea.vmem %s398, %s1195
        %v1197 = vld [vmem:[%s1196] sm:$0xff]
        %v1198 = vld [vmem:[%s1196 + $0x8] sm:$0xff]
        %v1199 = vadd.f32 %v1191, %v1197
        %v1200 = vadd.f32 %v1192, %v1198
        %s1201 = scalar_lea.vmem %s393, 16 [#allocation3]
        %1202 = vst [vmem:[%s1201] sm:$0xff] %v1199
        %1203 = vst [vmem:[%s1201 + $0x8] sm:$0xff] %v1200
        %v1204 = vld [vmem:[#allocation2 + $0x24] sm:$0xff]
        %v1205 = vld [vmem:[#allocation2 + $0x2c] sm:$0xff]
        %v1206 = vld [vmem:[#allocation2 + $0x34] sm:$0x3]
        %v1207 = vmul.f32 %v1204, %v818
        %v1208 = vmul.f32 %v1205, %v818
        %v1209 = vadd.f32 %v1207, 0.0
        %v1210 = vadd.f32 %v1208, 0.0
        %v1211 = vmul.f32 %v1204, %v823
        %v1212 = vmul.f32 %v1205, %v823
        %v1213 = vmul.f32 %v1206, %v823
        %v1217 = vrot.slane %v1211, 1
        %v1218 = vrot.slane %v1212, 1
        %v1219 = vsel %vm830, %v1217, %v1218
        %v1220 = vrot.slane %v1213, 1
        %v1221 = vsel %vm830, %v1218, %v1220
        %v1224 = vadd.f32 %v1209, %v1219
        %v1225 = vadd.f32 %v1210, %v1221
        %v1226 = vmul.f32 %v1204, %v840
        %v1227 = vmul.f32 %v1205, %v840
        %v1228 = vmul.f32 %v1206, %v840
        %v1232 = vrot.slane %v1226, 2
        %v1233 = vrot.slane %v1227, 2
        %v1234 = vsel %vm847, %v1232, %v1233
        %v1235 = vrot.slane %v1228, 2
        %v1236 = vsel %vm847, %v1233, %v1235
        %v1239 = vadd.f32 %v1224, %v1234
        %v1240 = vadd.f32 %v1225, %v1236
        %v1241 = vld [vmem:[#allocation2 + $0x36] sm:$0xff]
        %v1242 = vld [vmem:[#allocation2 + $0x3e] sm:$0xff]
        %v1243 = vld [vmem:[#allocation2 + $0x46] sm:$0x3]
        %v1244 = vmul.f32 %v1241, %v860
        %v1245 = vmul.f32 %v1242, %v860
        %v1246 = vadd.f32 %v1239, %v1244
        %v1247 = vadd.f32 %v1240, %v1245
        %v1248 = vmul.f32 %v1241, %v865
        %v1249 = vmul.f32 %v1242, %v865
        %v1250 = vmul.f32 %v1243, %v865
        %v1254 = vrot.slane %v1248, 1
        %v1255 = vrot.slane %v1249, 1
        %v1256 = vsel %vm830, %v1254, %v1255
        %v1257 = vrot.slane %v1250, 1
        %v1258 = vsel %vm830, %v1255, %v1257
        %v1261 = vadd.f32 %v1246, %v1256
        %v1262 = vadd.f32 %v1247, %v1258
        %v1263 = vmul.f32 %v1241, %v881
        %v1264 = vmul.f32 %v1242, %v881
        %v1265 = vmul.f32 %v1243, %v881
        %v1269 = vrot.slane %v1263, 2
        %v1270 = vrot.slane %v1264, 2
        %v1271 = vsel %vm847, %v1269, %v1270
        %v1272 = vrot.slane %v1265, 2
        %v1273 = vsel %vm847, %v1270, %v1272
        %v1276 = vadd.f32 %v1261, %v1271
        %v1277 = vadd.f32 %v1262, %v1273
        %v1278 = vld [vmem:[#allocation2 + $0x48] sm:$0xff]
        %v1279 = vld [vmem:[#allocation2 + $0x50] sm:$0xff]
        %v1280 = vld [vmem:[#allocation2 + $0x58] sm:$0x3]
        %v1281 = vmul.f32 %v1278, %v900
        %v1282 = vmul.f32 %v1279, %v900
        %v1283 = vadd.f32 %v1276, %v1281
        %v1284 = vadd.f32 %v1277, %v1282
        %v1285 = vmul.f32 %v1278, %v905
        %v1286 = vmul.f32 %v1279, %v905
        %v1287 = vmul.f32 %v1280, %v905
        %v1291 = vrot.slane %v1285, 1
        %v1292 = vrot.slane %v1286, 1
        %v1293 = vsel %vm830, %v1291, %v1292
        %v1294 = vrot.slane %v1287, 1
        %v1295 = vsel %vm830, %v1292, %v1294
        %v1298 = vadd.f32 %v1283, %v1293
        %v1299 = vadd.f32 %v1284, %v1295
        %v1300 = vmul.f32 %v1278, %v921
        %v1301 = vmul.f32 %v1279, %v921
        %v1302 = vmul.f32 %v1280, %v921
        %v1306 = vrot.slane %v1300, 2
        %v1307 = vrot.slane %v1301, 2
        %v1308 = vsel %vm847, %v1306, %v1307
        %v1309 = vrot.slane %v1302, 2
        %v1310 = vsel %vm847, %v1307, %v1309
        %v1313 = vadd.f32 %v1298, %v1308
        %v1314 = vadd.f32 %v1299, %v1310
        %v1315 = vld [vmem:[%s6] sm:$0x1]
        %v1317 = vperm.slane %v1315, 0
        %v1319 = vmul.f32 %v1313, %v1317
        %v1320 = vmul.f32 %v1314, %v1317
        %v1321 = vld [vmem:[%s7] sm:$0x1]
        %v1323 = vperm.slane %v1321, 0
        %v1325 = vadd.f32 %v1319, %v1323
        %v1326 = vadd.f32 %v1320, %v1323
        %v1327 = vmax.f32 %v1325, 0.0
        %v1328 = vmax.f32 %v1326, 0.0
        %v1329 = vmin.f32 %v1327, 6.0
        %v1330 = vmin.f32 %v1328, 6.0
        %v1331 = vld [vmem:[%s8] sm:$0xff]
        %v1332 = vld [vmem:[%s8 + $0x8] sm:$0xff]
        %v1333 = vld [vmem:[%s8 + $0x10] sm:$0xff]
        %v1334 = vld [vmem:[%s8 + $0x18] sm:$0xff]
        %v1335 = vld [vmem:[%s8 + $0x20] sm:$0xff]
        %v1336 = vld [vmem:[%s8 + $0x28] sm:$0xff]
        %v1337 = vld [vmem:[%s8 + $0x30] sm:$0xff]
        %v1338 = vld [vmem:[%s8 + $0x38] sm:$0xff]
        %v1339 = vld [vmem:[%s8 + $0x40] sm:$0xff]
        %v1340 = vld [vmem:[%s8 + $0x48] sm:$0xff]
        %v1341 = vld [vmem:[%s8 + $0x50] sm:$0xff]
        %v1342 = vld [vmem:[%s8 + $0x58] sm:$0xff]
        %v1343 = vld [vmem:[%s8 + $0x60] sm:$0xff]
        %v1344 = vld [vmem:[%s8 + $0x68] sm:$0xff]
        %v1345 = vld [vmem:[%s8 + $0x70] sm:$0xff]
        %v1346 = vld [vmem:[%s8 + $0x78] sm:$0xff]
        %1347 = vmatpush.msra.mxu0 %v1346
        %1348 = vmatpush.msra.mxu0 %v1345
        %1349 = vmatpush.msra.mxu0 %v1344
        %1350 = vmatpush.msra.mxu0 %v1343
        %1351 = vmatpush.msra.mxu0 %v1342
        %1352 = vmatpush.msra.mxu0 %v1341
        %1353 = vmatpush.msra.mxu0 %v1340
        %1354 = vmatpush.msra.mxu0 %v1339
        %1355 = vmatpush.msra.mxu0 %v1338
        %1356 = vmatpush.msra.mxu0 %v1337
        %1357 = vmatpush.msra.mxu0 %v1336
        %1358 = vmatpush.msra.mxu0 %v1335
        %1359 = vmatpush.msra.mxu0 %v1334
        %1360 = vmatpush.msra.mxu0 %v1333
        %1361 = vmatpush.msra.mxu0 %v1332
        %1362 = vmatpush.msra.mxu0 %v1331
        %1363 = vmatmul.f32.gmra.mxu0 %v1329
        %v1364 = vpop.f32.mrf.mxu0
        %v1365 = vadd.f32 0.0, %v1364
        %1366 = vmatmul.f32.gmra.mxu0 %v1330
        %v1367 = vpop.f32.mrf.mxu0
        %v1368 = vadd.f32 0.0, %v1367
        %1369 = vdwg.mxu0
        %v1370 = vld [vmem:[%s9] sm:$0x1]
        %v1372 = vperm.slane %v1370, 0
        %v1374 = vmul.f32 %v1365, %v1372
        %v1375 = vmul.f32 %v1368, %v1372
        %v1376 = vld [vmem:[%s10] sm:$0x1]
        %v1378 = vperm.slane %v1376, 0
        %v1380 = vadd.f32 %v1374, %v1378
        %v1381 = vadd.f32 %v1375, %v1378
        %s1382 = sadd.s32 %s1004, 3
        %s1383 = smul.u32 %s1382, 18
        %s1384 = sadd.s32 %s1383, 1
        %s1385 = scalar_lea.vmem %s398, %s1384
        %v1386 = vld [vmem:[%s1385] sm:$0xff]
        %v1387 = vld [vmem:[%s1385 + $0x8] sm:$0xff]
        %v1388 = vadd.f32 %v1380, %v1386
        %v1389 = vadd.f32 %v1381, %v1387
        %s1390 = scalar_lea.vmem %s393, 32 [#allocation3]
        %1391 = vst [vmem:[%s1390] sm:$0xff] %v1388
        %1392 = vst [vmem:[%s1390 + $0x8] sm:$0xff] %v1389
        %v1393 = vld [vmem:[#allocation2 + $0x36] sm:$0xff]
        %v1394 = vld [vmem:[#allocation2 + $0x3e] sm:$0xff]
        %v1395 = vld [vmem:[#allocation2 + $0x46] sm:$0x3]
        %v1396 = vmul.f32 %v1393, %v818
        %v1397 = vmul.f32 %v1394, %v818
        %v1398 = vadd.f32 %v1396, 0.0
        %v1399 = vadd.f32 %v1397, 0.0
        %v1400 = vmul.f32 %v1393, %v823
        %v1401 = vmul.f32 %v1394, %v823
        %v1402 = vmul.f32 %v1395, %v823
        %v1406 = vrot.slane %v1400, 1
        %v1407 = vrot.slane %v1401, 1
        %v1408 = vsel %vm830, %v1406, %v1407
        %v1409 = vrot.slane %v1402, 1
        %v1410 = vsel %vm830, %v1407, %v1409
        %v1413 = vadd.f32 %v1398, %v1408
        %v1414 = vadd.f32 %v1399, %v1410
        %v1415 = vmul.f32 %v1393, %v840
        %v1416 = vmul.f32 %v1394, %v840
        %v1417 = vmul.f32 %v1395, %v840
        %v1421 = vrot.slane %v1415, 2
        %v1422 = vrot.slane %v1416, 2
        %v1423 = vsel %vm847, %v1421, %v1422
        %v1424 = vrot.slane %v1417, 2
        %v1425 = vsel %vm847, %v1422, %v1424
        %v1428 = vadd.f32 %v1413, %v1423
        %v1429 = vadd.f32 %v1414, %v1425
        %v1430 = vld [vmem:[#allocation2 + $0x48] sm:$0xff]
        %v1431 = vld [vmem:[#allocation2 + $0x50] sm:$0xff]
        %v1432 = vld [vmem:[#allocation2 + $0x58] sm:$0x3]
        %v1433 = vmul.f32 %v1430, %v860
        %v1434 = vmul.f32 %v1431, %v860
        %v1435 = vadd.f32 %v1428, %v1433
        %v1436 = vadd.f32 %v1429, %v1434
        %v1437 = vmul.f32 %v1430, %v865
        %v1438 = vmul.f32 %v1431, %v865
        %v1439 = vmul.f32 %v1432, %v865
        %v1443 = vrot.slane %v1437, 1
        %v1444 = vrot.slane %v1438, 1
        %v1445 = vsel %vm830, %v1443, %v1444
        %v1446 = vrot.slane %v1439, 1
        %v1447 = vsel %vm830, %v1444, %v1446
        %v1450 = vadd.f32 %v1435, %v1445
        %v1451 = vadd.f32 %v1436, %v1447
        %v1452 = vmul.f32 %v1430, %v881
        %v1453 = vmul.f32 %v1431, %v881
        %v1454 = vmul.f32 %v1432, %v881
        %v1458 = vrot.slane %v1452, 2
        %v1459 = vrot.slane %v1453, 2
        %v1460 = vsel %vm847, %v1458, %v1459
        %v1461 = vrot.slane %v1454, 2
        %v1462 = vsel %vm847, %v1459, %v1461
        %v1465 = vadd.f32 %v1450, %v1460
        %v1466 = vadd.f32 %v1451, %v1462
        %v1467 = vld [vmem:[#allocation2 + $0x5a] sm:$0xff]
        %v1468 = vld [vmem:[#allocation2 + $0x62] sm:$0xff]
        %v1469 = vld [vmem:[#allocation2 + $0x6a] sm:$0x3]
        %v1470 = vmul.f32 %v1467, %v900
        %v1471 = vmul.f32 %v1468, %v900
        %v1472 = vadd.f32 %v1465, %v1470
        %v1473 = vadd.f32 %v1466, %v1471
        %v1474 = vmul.f32 %v1467, %v905
        %v1475 = vmul.f32 %v1468, %v905
        %v1476 = vmul.f32 %v1469, %v905
        %v1480 = vrot.slane %v1474, 1
        %v1481 = vrot.slane %v1475, 1
        %v1482 = vsel %vm830, %v1480, %v1481
        %v1483 = vrot.slane %v1476, 1
        %v1484 = vsel %vm830, %v1481, %v1483
        %v1487 = vadd.f32 %v1472, %v1482
        %v1488 = vadd.f32 %v1473, %v1484
        %v1489 = vmul.f32 %v1467, %v921
        %v1490 = vmul.f32 %v1468, %v921
        %v1491 = vmul.f32 %v1469, %v921
        %v1495 = vrot.slane %v1489, 2
        %v1496 = vrot.slane %v1490, 2
        %v1497 = vsel %vm847, %v1495, %v1496
        %v1498 = vrot.slane %v1491, 2
        %v1499 = vsel %vm847, %v1496, %v1498
        %v1502 = vadd.f32 %v1487, %v1497
        %v1503 = vadd.f32 %v1488, %v1499
        %v1504 = vld [vmem:[%s6] sm:$0x1]
        %v1506 = vperm.slane %v1504, 0
        %v1508 = vmul.f32 %v1502, %v1506
        %v1509 = vmul.f32 %v1503, %v1506
        %v1510 = vld [vmem:[%s7] sm:$0x1]
        %v1512 = vperm.slane %v1510, 0
        %v1514 = vadd.f32 %v1508, %v1512
        %v1515 = vadd.f32 %v1509, %v1512
        %v1516 = vmax.f32 %v1514, 0.0
        %v1517 = vmax.f32 %v1515, 0.0
        %v1518 = vmin.f32 %v1516, 6.0
        %v1519 = vmin.f32 %v1517, 6.0
        %v1520 = vld [vmem:[%s8] sm:$0xff]
        %v1521 = vld [vmem:[%s8 + $0x8] sm:$0xff]
        %v1522 = vld [vmem:[%s8 + $0x10] sm:$0xff]
        %v1523 = vld [vmem:[%s8 + $0x18] sm:$0xff]
        %v1524 = vld [vmem:[%s8 + $0x20] sm:$0xff]
        %v1525 = vld [vmem:[%s8 + $0x28] sm:$0xff]
        %v1526 = vld [vmem:[%s8 + $0x30] sm:$0xff]
        %v1527 = vld [vmem:[%s8 + $0x38] sm:$0xff]
        %v1528 = vld [vmem:[%s8 + $0x40] sm:$0xff]
        %v1529 = vld [vmem:[%s8 + $0x48] sm:$0xff]
        %v1530 = vld [vmem:[%s8 + $0x50] sm:$0xff]
        %v1531 = vld [vmem:[%s8 + $0x58] sm:$0xff]
        %v1532 = vld [vmem:[%s8 + $0x60] sm:$0xff]
        %v1533 = vld [vmem:[%s8 + $0x68] sm:$0xff]
        %v1534 = vld [vmem:[%s8 + $0x70] sm:$0xff]
        %v1535 = vld [vmem:[%s8 + $0x78] sm:$0xff]
        %1536 = vmatpush.msra.mxu0 %v1535
        %1537 = vmatpush.msra.mxu0 %v1534
        %1538 = vmatpush.msra.mxu0 %v1533
        %1539 = vmatpush.msra.mxu0 %v1532
        %1540 = vmatpush.msra.mxu0 %v1531
        %1541 = vmatpush.msra.mxu0 %v1530
        %1542 = vmatpush.msra.mxu0 %v1529
        %1543 = vmatpush.msra.mxu0 %v1528
        %1544 = vmatpush.msra.mxu0 %v1527
        %1545 = vmatpush.msra.mxu0 %v1526
        %1546 = vmatpush.msra.mxu0 %v1525
        %1547 = vmatpush.msra.mxu0 %v1524
        %1548 = vmatpush.msra.mxu0 %v1523
        %1549 = vmatpush.msra.mxu0 %v1522
        %1550 = vmatpush.msra.mxu0 %v1521
        %1551 = vmatpush.msra.mxu0 %v1520
        %1552 = vmatmul.f32.gmra.mxu0 %v1518
        %v1553 = vpop.f32.mrf.mxu0
        %v1554 = vadd.f32 0.0, %v1553
        %1555 = vmatmul.f32.gmra.mxu0 %v1519
        %v1556 = vpop.f32.mrf.mxu0
        %v1557 = vadd.f32 0.0, %v1556
        %1558 = vdwg.mxu0
        %v1559 = vld [vmem:[%s9] sm:$0x1]
        %v1561 = vperm.slane %v1559, 0
        %v1563 = vmul.f32 %v1554, %v1561
        %v1564 = vmul.f32 %v1557, %v1561
        %v1565 = vld [vmem:[%s10] sm:$0x1]
        %v1567 = vperm.slane %v1565, 0
        %v1569 = vadd.f32 %v1563, %v1567
        %v1570 = vadd.f32 %v1564, %v1567
        %s1571 = sadd.s32 %s1004, 4
        %s1572 = smul.u32 %s1571, 18
        %s1573 = sadd.s32 %s1572, 1
        %s1574 = scalar_lea.vmem %s398, %s1573
        %v1575 = vld [vmem:[%s1574] sm:$0xff]
        %v1576 = vld [vmem:[%s1574 + $0x8] sm:$0xff]
        %v1577 = vadd.f32 %v1569, %v1575
        %v1578 = vadd.f32 %v1570, %v1576
        %s1579 = scalar_lea.vmem %s393, 48 [#allocation3]
        %1580 = vst [vmem:[%s1579] sm:$0xff] %v1577
        %1581 = vst [vmem:[%s1579 + $0x8] sm:$0xff] %v1578
        %v1582 = vld [vmem:[#allocation2 + $0x48] sm:$0xff]
        %v1583 = vld [vmem:[#allocation2 + $0x50] sm:$0xff]
        %v1584 = vld [vmem:[#allocation2 + $0x58] sm:$0x3]
        %v1585 = vmul.f32 %v1582, %v818
        %v1586 = vmul.f32 %v1583, %v818
        %v1587 = vadd.f32 %v1585, 0.0
        %v1588 = vadd.f32 %v1586, 0.0
        %v1589 = vmul.f32 %v1582, %v823
        %v1590 = vmul.f32 %v1583, %v823
        %v1591 = vmul.f32 %v1584, %v823
        %v1595 = vrot.slane %v1589, 1
        %v1596 = vrot.slane %v1590, 1
        %v1597 = vsel %vm830, %v1595, %v1596
        %v1598 = vrot.slane %v1591, 1
        %v1599 = vsel %vm830, %v1596, %v1598
        %v1602 = vadd.f32 %v1587, %v1597
        %v1603 = vadd.f32 %v1588, %v1599
        %v1604 = vmul.f32 %v1582, %v840
        %v1605 = vmul.f32 %v1583, %v840
        %v1606 = vmul.f32 %v1584, %v840
        %v1610 = vrot.slane %v1604, 2
        %v1611 = vrot.slane %v1605, 2
        %v1612 = vsel %vm847, %v1610, %v1611
        %v1613 = vrot.slane %v1606, 2
        %v1614 = vsel %vm847, %v1611, %v1613
        %v1617 = vadd.f32 %v1602, %v1612
        %v1618 = vadd.f32 %v1603, %v1614
        %v1619 = vld [vmem:[#allocation2 + $0x5a] sm:$0xff]
        %v1620 = vld [vmem:[#allocation2 + $0x62] sm:$0xff]
        %v1621 = vld [vmem:[#allocation2 + $0x6a] sm:$0x3]
        %v1622 = vmul.f32 %v1619, %v860
        %v1623 = vmul.f32 %v1620, %v860
        %v1624 = vadd.f32 %v1617, %v1622
        %v1625 = vadd.f32 %v1618, %v1623
        %v1626 = vmul.f32 %v1619, %v865
        %v1627 = vmul.f32 %v1620, %v865
        %v1628 = vmul.f32 %v1621, %v865
        %v1632 = vrot.slane %v1626, 1
        %v1633 = vrot.slane %v1627, 1
        %v1634 = vsel %vm830, %v1632, %v1633
        %v1635 = vrot.slane %v1628, 1
        %v1636 = vsel %vm830, %v1633, %v1635
        %v1639 = vadd.f32 %v1624, %v1634
        %v1640 = vadd.f32 %v1625, %v1636
        %v1641 = vmul.f32 %v1619, %v881
        %v1642 = vmul.f32 %v1620, %v881
        %v1643 = vmul.f32 %v1621, %v881
        %v1647 = vrot.slane %v1641, 2
        %v1648 = vrot.slane %v1642, 2
        %v1649 = vsel %vm847, %v1647, %v1648
        %v1650 = vrot.slane %v1643, 2
        %v1651 = vsel %vm847, %v1648, %v1650
        %v1654 = vadd.f32 %v1639, %v1649
        %v1655 = vadd.f32 %v1640, %v1651
        %v1656 = vld [vmem:[#allocation2 + $0x6c] sm:$0xff]
        %v1657 = vld [vmem:[#allocation2 + $0x74] sm:$0xff]
        %v1658 = vld [vmem:[#allocation2 + $0x7c] sm:$0x3]
        %v1659 = vmul.f32 %v1656, %v900
        %v1660 = vmul.f32 %v1657, %v900
        %v1661 = vadd.f32 %v1654, %v1659
        %v1662 = vadd.f32 %v1655, %v1660
        %v1663 = vmul.f32 %v1656, %v905
        %v1664 = vmul.f32 %v1657, %v905
        %v1665 = vmul.f32 %v1658, %v905
        %v1669 = vrot.slane %v1663, 1
        %v1670 = vrot.slane %v1664, 1
        %v1671 = vsel %vm830, %v1669, %v1670
        %v1672 = vrot.slane %v1665, 1
        %v1673 = vsel %vm830, %v1670, %v1672
        %v1676 = vadd.f32 %v1661, %v1671
        %v1677 = vadd.f32 %v1662, %v1673
        %v1678 = vmul.f32 %v1656, %v921
        %v1679 = vmul.f32 %v1657, %v921
        %v1680 = vmul.f32 %v1658, %v921
        %v1684 = vrot.slane %v1678, 2
        %v1685 = vrot.slane %v1679, 2
        %v1686 = vsel %vm847, %v1684, %v1685
        %v1687 = vrot.slane %v1680, 2
        %v1688 = vsel %vm847, %v1685, %v1687
        %v1691 = vadd.f32 %v1676, %v1686
        %v1692 = vadd.f32 %v1677, %v1688
        %v1693 = vld [vmem:[%s6] sm:$0x1]
        %v1695 = vperm.slane %v1693, 0
        %v1697 = vmul.f32 %v1691, %v1695
        %v1698 = vmul.f32 %v1692, %v1695
        %v1699 = vld [vmem:[%s7] sm:$0x1]
        %v1701 = vperm.slane %v1699, 0
        %v1703 = vadd.f32 %v1697, %v1701
        %v1704 = vadd.f32 %v1698, %v1701
        %v1705 = vmax.f32 %v1703, 0.0
        %v1706 = vmax.f32 %v1704, 0.0
        %v1707 = vmin.f32 %v1705, 6.0
        %v1708 = vmin.f32 %v1706, 6.0
        %v1709 = vld [vmem:[%s8] sm:$0xff]
        %v1710 = vld [vmem:[%s8 + $0x8] sm:$0xff]
        %v1711 = vld [vmem:[%s8 + $0x10] sm:$0xff]
        %v1712 = vld [vmem:[%s8 + $0x18] sm:$0xff]
        %v1713 = vld [vmem:[%s8 + $0x20] sm:$0xff]
        %v1714 = vld [vmem:[%s8 + $0x28] sm:$0xff]
        %v1715 = vld [vmem:[%s8 + $0x30] sm:$0xff]
        %v1716 = vld [vmem:[%s8 + $0x38] sm:$0xff]
        %v1717 = vld [vmem:[%s8 + $0x40] sm:$0xff]
        %v1718 = vld [vmem:[%s8 + $0x48] sm:$0xff]
        %v1719 = vld [vmem:[%s8 + $0x50] sm:$0xff]
        %v1720 = vld [vmem:[%s8 + $0x58] sm:$0xff]
        %v1721 = vld [vmem:[%s8 + $0x60] sm:$0xff]
        %v1722 = vld [vmem:[%s8 + $0x68] sm:$0xff]
        %v1723 = vld [vmem:[%s8 + $0x70] sm:$0xff]
        %v1724 = vld [vmem:[%s8 + $0x78] sm:$0xff]
        %1725 = vmatpush.msra.mxu0 %v1724
        %1726 = vmatpush.msra.mxu0 %v1723
        %1727 = vmatpush.msra.mxu0 %v1722
        %1728 = vmatpush.msra.mxu0 %v1721
        %1729 = vmatpush.msra.mxu0 %v1720
        %1730 = vmatpush.msra.mxu0 %v1719
        %1731 = vmatpush.msra.mxu0 %v1718
        %1732 = vmatpush.msra.mxu0 %v1717
        %1733 = vmatpush.msra.mxu0 %v1716
        %1734 = vmatpush.msra.mxu0 %v1715
        %1735 = vmatpush.msra.mxu0 %v1714
        %1736 = vmatpush.msra.mxu0 %v1713
        %1737 = vmatpush.msra.mxu0 %v1712
        %1738 = vmatpush.msra.mxu0 %v1711
        %1739 = vmatpush.msra.mxu0 %v1710
        %1740 = vmatpush.msra.mxu0 %v1709
        %1741 = vmatmul.f32.gmra.mxu0 %v1707
        %v1742 = vpop.f32.mrf.mxu0
        %v1743 = vadd.f32 0.0, %v1742
        %1744 = vmatmul.f32.gmra.mxu0 %v1708
        %v1745 = vpop.f32.mrf.mxu0
        %v1746 = vadd.f32 0.0, %v1745
        %1747 = vdwg.mxu0
        %v1748 = vld [vmem:[%s9] sm:$0x1]
        %v1750 = vperm.slane %v1748, 0
        %v1752 = vmul.f32 %v1743, %v1750
        %v1753 = vmul.f32 %v1746, %v1750
        %v1754 = vld [vmem:[%s10] sm:$0x1]
        %v1756 = vperm.slane %v1754, 0
        %v1758 = vadd.f32 %v1752, %v1756
        %v1759 = vadd.f32 %v1753, %v1756
        %s1760 = sadd.s32 %s1004, 5
        %s1761 = smul.u32 %s1760, 18
        %s1762 = sadd.s32 %s1761, 1
        %s1763 = scalar_lea.vmem %s398, %s1762
        %v1764 = vld [vmem:[%s1763] sm:$0xff]
        %v1765 = vld [vmem:[%s1763 + $0x8] sm:$0xff]
        %v1766 = vadd.f32 %v1758, %v1764
        %v1767 = vadd.f32 %v1759, %v1765
        %s1768 = scalar_lea.vmem %s393, 64 [#allocation3]
        %1769 = vst [vmem:[%s1768] sm:$0xff] %v1766
        %1770 = vst [vmem:[%s1768 + $0x8] sm:$0xff] %v1767
        %v1771 = vld [vmem:[#allocation2 + $0x5a] sm:$0xff]
        %v1772 = vld [vmem:[#allocation2 + $0x62] sm:$0xff]
        %v1773 = vld [vmem:[#allocation2 + $0x6a] sm:$0x3]
        %v1774 = vmul.f32 %v1771, %v818
        %v1775 = vmul.f32 %v1772, %v818
        %v1776 = vadd.f32 %v1774, 0.0
        %v1777 = vadd.f32 %v1775, 0.0
        %v1778 = vmul.f32 %v1771, %v823
        %v1779 = vmul.f32 %v1772, %v823
        %v1780 = vmul.f32 %v1773, %v823
        %v1784 = vrot.slane %v1778, 1
        %v1785 = vrot.slane %v1779, 1
        %v1786 = vsel %vm830, %v1784, %v1785
        %v1787 = vrot.slane %v1780, 1
        %v1788 = vsel %vm830, %v1785, %v1787
        %v1791 = vadd.f32 %v1776, %v1786
        %v1792 = vadd.f32 %v1777, %v1788
        %v1793 = vmul.f32 %v1771, %v840
        %v1794 = vmul.f32 %v1772, %v840
        %v1795 = vmul.f32 %v1773, %v840
        %v1799 = vrot.slane %v1793, 2
        %v1800 = vrot.slane %v1794, 2
        %v1801 = vsel %vm847, %v1799, %v1800
        %v1802 = vrot.slane %v1795, 2
        %v1803 = vsel %vm847, %v1800, %v1802
        %v1806 = vadd.f32 %v1791, %v1801
        %v1807 = vadd.f32 %v1792, %v1803
        %v1808 = vld [vmem:[#allocation2 + $0x6c] sm:$0xff]
        %v1809 = vld [vmem:[#allocation2 + $0x74] sm:$0xff]
        %v1810 = vld [vmem:[#allocation2 + $0x7c] sm:$0x3]
        %v1811 = vmul.f32 %v1808, %v860
        %v1812 = vmul.f32 %v1809, %v860
        %v1813 = vadd.f32 %v1806, %v1811
        %v1814 = vadd.f32 %v1807, %v1812
        %v1815 = vmul.f32 %v1808, %v865
        %v1816 = vmul.f32 %v1809, %v865
        %v1817 = vmul.f32 %v1810, %v865
        %v1821 = vrot.slane %v1815, 1
        %v1822 = vrot.slane %v1816, 1
        %v1823 = vsel %vm830, %v1821, %v1822
        %v1824 = vrot.slane %v1817, 1
        %v1825 = vsel %vm830, %v1822, %v1824
        %v1828 = vadd.f32 %v1813, %v1823
        %v1829 = vadd.f32 %v1814, %v1825
        %v1830 = vmul.f32 %v1808, %v881
        %v1831 = vmul.f32 %v1809, %v881
        %v1832 = vmul.f32 %v1810, %v881
        %v1836 = vrot.slane %v1830, 2
        %v1837 = vrot.slane %v1831, 2
        %v1838 = vsel %vm847, %v1836, %v1837
        %v1839 = vrot.slane %v1832, 2
        %v1840 = vsel %vm847, %v1837, %v1839
        %v1843 = vadd.f32 %v1828, %v1838
        %v1844 = vadd.f32 %v1829, %v1840
        %v1845 = vld [vmem:[#allocation2 + $0x7e] sm:$0xff]
        %v1846 = vld [vmem:[#allocation2 + $0x86] sm:$0xff]
        %v1847 = vld [vmem:[#allocation2 + $0x8e] sm:$0x3]
        %v1848 = vmul.f32 %v1845, %v900
        %v1849 = vmul.f32 %v1846, %v900
        %v1850 = vadd.f32 %v1843, %v1848
        %v1851 = vadd.f32 %v1844, %v1849
        %v1852 = vmul.f32 %v1845, %v905
        %v1853 = vmul.f32 %v1846, %v905
        %v1854 = vmul.f32 %v1847, %v905
        %v1858 = vrot.slane %v1852, 1
        %v1859 = vrot.slane %v1853, 1
        %v1860 = vsel %vm830, %v1858, %v1859
        %v1861 = vrot.slane %v1854, 1
        %v1862 = vsel %vm830, %v1859, %v1861
        %v1865 = vadd.f32 %v1850, %v1860
        %v1866 = vadd.f32 %v1851, %v1862
        %v1867 = vmul.f32 %v1845, %v921
        %v1868 = vmul.f32 %v1846, %v921
        %v1869 = vmul.f32 %v1847, %v921
        %v1873 = vrot.slane %v1867, 2
        %v1874 = vrot.slane %v1868, 2
        %v1875 = vsel %vm847, %v1873, %v1874
        %v1876 = vrot.slane %v1869, 2
        %v1877 = vsel %vm847, %v1874, %v1876
        %v1880 = vadd.f32 %v1865, %v1875
        %v1881 = vadd.f32 %v1866, %v1877
        %v1882 = vld [vmem:[%s6] sm:$0x1]
        %v1884 = vperm.slane %v1882, 0
        %v1886 = vmul.f32 %v1880, %v1884
        %v1887 = vmul.f32 %v1881, %v1884
        %v1888 = vld [vmem:[%s7] sm:$0x1]
        %v1890 = vperm.slane %v1888, 0
        %v1892 = vadd.f32 %v1886, %v1890
        %v1893 = vadd.f32 %v1887, %v1890
        %v1894 = vmax.f32 %v1892, 0.0
        %v1895 = vmax.f32 %v1893, 0.0
        %v1896 = vmin.f32 %v1894, 6.0
        %v1897 = vmin.f32 %v1895, 6.0
        %v1898 = vld [vmem:[%s8] sm:$0xff]
        %v1899 = vld [vmem:[%s8 + $0x8] sm:$0xff]
        %v1900 = vld [vmem:[%s8 + $0x10] sm:$0xff]
        %v1901 = vld [vmem:[%s8 + $0x18] sm:$0xff]
        %v1902 = vld [vmem:[%s8 + $0x20] sm:$0xff]
        %v1903 = vld [vmem:[%s8 + $0x28] sm:$0xff]
        %v1904 = vld [vmem:[%s8 + $0x30] sm:$0xff]
        %v1905 = vld [vmem:[%s8 + $0x38] sm:$0xff]
        %v1906 = vld [vmem:[%s8 + $0x40] sm:$0xff]
        %v1907 = vld [vmem:[%s8 + $0x48] sm:$0xff]
        %v1908 = vld [vmem:[%s8 + $0x50] sm:$0xff]
        %v1909 = vld [vmem:[%s8 + $0x58] sm:$0xff]
        %v1910 = vld [vmem:[%s8 + $0x60] sm:$0xff]
        %v1911 = vld [vmem:[%s8 + $0x68] sm:$0xff]
        %v1912 = vld [vmem:[%s8 + $0x70] sm:$0xff]
        %v1913 = vld [vmem:[%s8 + $0x78] sm:$0xff]
        %1914 = vmatpush.msra.mxu0 %v1913
        %1915 = vmatpush.msra.mxu0 %v1912
        %1916 = vmatpush.msra.mxu0 %v1911
        %1917 = vmatpush.msra.mxu0 %v1910
        %1918 = vmatpush.msra.mxu0 %v1909
        %1919 = vmatpush.msra.mxu0 %v1908
        %1920 = vmatpush.msra.mxu0 %v1907
        %1921 = vmatpush.msra.mxu0 %v1906
        %1922 = vmatpush.msra.mxu0 %v1905
        %1923 = vmatpush.msra.mxu0 %v1904
        %1924 = vmatpush.msra.mxu0 %v1903
        %1925 = vmatpush.msra.mxu0 %v1902
        %1926 = vmatpush.msra.mxu0 %v1901
        %1927 = vmatpush.msra.mxu0 %v1900
        %1928 = vmatpush.msra.mxu0 %v1899
        %1929 = vmatpush.msra.mxu0 %v1898
        %1930 = vmatmul.f32.gmra.mxu0 %v1896
        %v1931 = vpop.f32.mrf.mxu0
        %v1932 = vadd.f32 0.0, %v1931
        %1933 = vmatmul.f32.gmra.mxu0 %v1897
        %v1934 = vpop.f32.mrf.mxu0
        %v1935 = vadd.f32 0.0, %v1934
        %1936 = vdwg.mxu0
        %v1937 = vld [vmem:[%s9] sm:$0x1]
        %v1939 = vperm.slane %v1937, 0
        %v1941 = vmul.f32 %v1932, %v1939
        %v1942 = vmul.f32 %v1935, %v1939
        %v1943 = vld [vmem:[%s10] sm:$0x1]
        %v1945 = vperm.slane %v1943, 0
        %v1947 = vadd.f32 %v1941, %v1945
        %v1948 = vadd.f32 %v1942, %v1945
        %s1949 = sadd.s32 %s1004, 6
        %s1950 = smul.u32 %s1949, 18
        %s1951 = sadd.s32 %s1950, 1
        %s1952 = scalar_lea.vmem %s398, %s1951
        %v1953 = vld [vmem:[%s1952] sm:$0xff]
        %v1954 = vld [vmem:[%s1952 + $0x8] sm:$0xff]
        %v1955 = vadd.f32 %v1947, %v1953
        %v1956 = vadd.f32 %v1948, %v1954
        %s1957 = scalar_lea.vmem %s393, 80 [#allocation3]
        %1958 = vst [vmem:[%s1957] sm:$0xff] %v1955
        %1959 = vst [vmem:[%s1957 + $0x8] sm:$0xff] %v1956
        %v1960 = vld [vmem:[#allocation2 + $0x6c] sm:$0xff]
        %v1961 = vld [vmem:[#allocation2 + $0x74] sm:$0xff]
        %v1962 = vld [vmem:[#allocation2 + $0x7c] sm:$0x3]
        %v1963 = vmul.f32 %v1960, %v818
        %v1964 = vmul.f32 %v1961, %v818
        %v1965 = vadd.f32 %v1963, 0.0
        %v1966 = vadd.f32 %v1964, 0.0
        %v1967 = vmul.f32 %v1960, %v823
        %v1968 = vmul.f32 %v1961, %v823
        %v1969 = vmul.f32 %v1962, %v823
        %v1973 = vrot.slane %v1967, 1
        %v1974 = vrot.slane %v1968, 1
        %v1975 = vsel %vm830, %v1973, %v1974
        %v1976 = vrot.slane %v1969, 1
        %v1977 = vsel %vm830, %v1974, %v1976
        %v1980 = vadd.f32 %v1965, %v1975
        %v1981 = vadd.f32 %v1966, %v1977
        %v1982 = vmul.f32 %v1960, %v840
        %v1983 = vmul.f32 %v1961, %v840
        %v1984 = vmul.f32 %v1962, %v840
        %v1988 = vrot.slane %v1982, 2
        %v1989 = vrot.slane %v1983, 2
        %v1990 = vsel %vm847, %v1988, %v1989
        %v1991 = vrot.slane %v1984, 2
        %v1992 = vsel %vm847, %v1989, %v1991
        %v1995 = vadd.f32 %v1980, %v1990
        %v1996 = vadd.f32 %v1981, %v1992
        %v1997 = vld [vmem:[#allocation2 + $0x7e] sm:$0xff]
        %v1998 = vld [vmem:[#allocation2 + $0x86] sm:$0xff]
        %v1999 = vld [vmem:[#allocation2 + $0x8e] sm:$0x3]
        %v2000 = vmul.f32 %v1997, %v860
        %v2001 = vmul.f32 %v1998, %v860
        %v2002 = vadd.f32 %v1995, %v2000
        %v2003 = vadd.f32 %v1996, %v2001
        %v2004 = vmul.f32 %v1997, %v865
        %v2005 = vmul.f32 %v1998, %v865
        %v2006 = vmul.f32 %v1999, %v865
        %v2010 = vrot.slane %v2004, 1
        %v2011 = vrot.slane %v2005, 1
        %v2012 = vsel %vm830, %v2010, %v2011
        %v2013 = vrot.slane %v2006, 1
        %v2014 = vsel %vm830, %v2011, %v2013
        %v2017 = vadd.f32 %v2002, %v2012
        %v2018 = vadd.f32 %v2003, %v2014
        %v2019 = vmul.f32 %v1997, %v881
        %v2020 = vmul.f32 %v1998, %v881
        %v2021 = vmul.f32 %v1999, %v881
        %v2025 = vrot.slane %v2019, 2
        %v2026 = vrot.slane %v2020, 2
        %v2027 = vsel %vm847, %v2025, %v2026
        %v2028 = vrot.slane %v2021, 2
        %v2029 = vsel %vm847, %v2026, %v2028
        %v2032 = vadd.f32 %v2017, %v2027
        %v2033 = vadd.f32 %v2018, %v2029
        %v2034 = vld [vmem:[#allocation2 + $0x90] sm:$0xff]
        %v2035 = vld [vmem:[#allocation2 + $0x98] sm:$0xff]
        %v2036 = vld [vmem:[#allocation2 + $0xa0] sm:$0x3]
        %v2037 = vmul.f32 %v2034, %v900
        %v2038 = vmul.f32 %v2035, %v900
        %v2039 = vadd.f32 %v2032, %v2037
        %v2040 = vadd.f32 %v2033, %v2038
        %v2041 = vmul.f32 %v2034, %v905
        %v2042 = vmul.f32 %v2035, %v905
        %v2043 = vmul.f32 %v2036, %v905
        %v2047 = vrot.slane %v2041, 1
        %v2048 = vrot.slane %v2042, 1
        %v2049 = vsel %vm830, %v2047, %v2048
        %v2050 = vrot.slane %v2043, 1
        %v2051 = vsel %vm830, %v2048, %v2050
        %v2054 = vadd.f32 %v2039, %v2049
        %v2055 = vadd.f32 %v2040, %v2051
        %v2056 = vmul.f32 %v2034, %v921
        %v2057 = vmul.f32 %v2035, %v921
        %v2058 = vmul.f32 %v2036, %v921
        %v2062 = vrot.slane %v2056, 2
        %v2063 = vrot.slane %v2057, 2
        %v2064 = vsel %vm847, %v2062, %v2063
        %v2065 = vrot.slane %v2058, 2
        %v2066 = vsel %vm847, %v2063, %v2065
        %v2069 = vadd.f32 %v2054, %v2064
        %v2070 = vadd.f32 %v2055, %v2066
        %v2071 = vld [vmem:[%s6] sm:$0x1]
        %v2073 = vperm.slane %v2071, 0
        %v2075 = vmul.f32 %v2069, %v2073
        %v2076 = vmul.f32 %v2070, %v2073
        %v2077 = vld [vmem:[%s7] sm:$0x1]
        %v2079 = vperm.slane %v2077, 0
        %v2081 = vadd.f32 %v2075, %v2079
        %v2082 = vadd.f32 %v2076, %v2079
        %v2083 = vmax.f32 %v2081, 0.0
        %v2084 = vmax.f32 %v2082, 0.0
        %v2085 = vmin.f32 %v2083, 6.0
        %v2086 = vmin.f32 %v2084, 6.0
        %v2087 = vld [vmem:[%s8] sm:$0xff]
        %v2088 = vld [vmem:[%s8 + $0x8] sm:$0xff]
        %v2089 = vld [vmem:[%s8 + $0x10] sm:$0xff]
        %v2090 = vld [vmem:[%s8 + $0x18] sm:$0xff]
        %v2091 = vld [vmem:[%s8 + $0x20] sm:$0xff]
        %v2092 = vld [vmem:[%s8 + $0x28] sm:$0xff]
        %v2093 = vld [vmem:[%s8 + $0x30] sm:$0xff]
        %v2094 = vld [vmem:[%s8 + $0x38] sm:$0xff]
        %v2095 = vld [vmem:[%s8 + $0x40] sm:$0xff]
        %v2096 = vld [vmem:[%s8 + $0x48] sm:$0xff]
        %v2097 = vld [vmem:[%s8 + $0x50] sm:$0xff]
        %v2098 = vld [vmem:[%s8 + $0x58] sm:$0xff]
        %v2099 = vld [vmem:[%s8 + $0x60] sm:$0xff]
        %v2100 = vld [vmem:[%s8 + $0x68] sm:$0xff]
        %v2101 = vld [vmem:[%s8 + $0x70] sm:$0xff]
        %v2102 = vld [vmem:[%s8 + $0x78] sm:$0xff]
        %2103 = vmatpush.msra.mxu0 %v2102
        %2104 = vmatpush.msra.mxu0 %v2101
        %2105 = vmatpush.msra.mxu0 %v2100
        %2106 = vmatpush.msra.mxu0 %v2099
        %2107 = vmatpush.msra.mxu0 %v2098
        %2108 = vmatpush.msra.mxu0 %v2097
        %2109 = vmatpush.msra.mxu0 %v2096
        %2110 = vmatpush.msra.mxu0 %v2095
        %2111 = vmatpush.msra.mxu0 %v2094
        %2112 = vmatpush.msra.mxu0 %v2093
        %2113 = vmatpush.msra.mxu0 %v2092
        %2114 = vmatpush.msra.mxu0 %v2091
        %2115 = vmatpush.msra.mxu0 %v2090
        %2116 = vmatpush.msra.mxu0 %v2089
        %2117 = vmatpush.msra.mxu0 %v2088
        %2118 = vmatpush.msra.mxu0 %v2087
        %2119 = vmatmul.f32.gmra.mxu0 %v2085
        %v2120 = vpop.f32.mrf.mxu0
        %v2121 = vadd.f32 0.0, %v2120
        %2122 = vmatmul.f32.gmra.mxu0 %v2086
        %v2123 = vpop.f32.mrf.mxu0
        %v2124 = vadd.f32 0.0, %v2123
        %2125 = vdwg.mxu0
        %v2126 = vld [vmem:[%s9] sm:$0x1]
        %v2128 = vperm.slane %v2126, 0
        %v2130 = vmul.f32 %v2121, %v2128
        %v2131 = vmul.f32 %v2124, %v2128
        %v2132 = vld [vmem:[%s10] sm:$0x1]
        %v2134 = vperm.slane %v2132, 0
        %v2136 = vadd.f32 %v2130, %v2134
        %v2137 = vadd.f32 %v2131, %v2134
        %s2138 = sadd.s32 %s1004, 7
        %s2139 = smul.u32 %s2138, 18
        %s2140 = sadd.s32 %s2139, 1
        %s2141 = scalar_lea.vmem %s398, %s2140
        %v2142 = vld [vmem:[%s2141] sm:$0xff]
        %v2143 = vld [vmem:[%s2141 + $0x8] sm:$0xff]
        %v2144 = vadd.f32 %v2136, %v2142
        %v2145 = vadd.f32 %v2137, %v2143
        %s2146 = scalar_lea.vmem %s393, 96 [#allocation3]
        %2147 = vst [vmem:[%s2146] sm:$0xff] %v2144
        %2148 = vst [vmem:[%s2146 + $0x8] sm:$0xff] %v2145
        %v2149 = vld [vmem:[#allocation2 + $0x7e] sm:$0xff]
        %v2150 = vld [vmem:[#allocation2 + $0x86] sm:$0xff]
        %v2151 = vld [vmem:[#allocation2 + $0x8e] sm:$0x3]
        %v2152 = vmul.f32 %v2149, %v818
        %v2153 = vmul.f32 %v2150, %v818
        %v2154 = vadd.f32 %v2152, 0.0
        %v2155 = vadd.f32 %v2153, 0.0
        %v2156 = vmul.f32 %v2149, %v823
        %v2157 = vmul.f32 %v2150, %v823
        %v2158 = vmul.f32 %v2151, %v823
        %v2162 = vrot.slane %v2156, 1
        %v2163 = vrot.slane %v2157, 1
        %v2164 = vsel %vm830, %v2162, %v2163
        %v2165 = vrot.slane %v2158, 1
        %v2166 = vsel %vm830, %v2163, %v2165
        %v2169 = vadd.f32 %v2154, %v2164
        %v2170 = vadd.f32 %v2155, %v2166
        %v2171 = vmul.f32 %v2149, %v840
        %v2172 = vmul.f32 %v2150, %v840
        %v2173 = vmul.f32 %v2151, %v840
        %v2177 = vrot.slane %v2171, 2
        %v2178 = vrot.slane %v2172, 2
        %v2179 = vsel %vm847, %v2177, %v2178
        %v2180 = vrot.slane %v2173, 2
        %v2181 = vsel %vm847, %v2178, %v2180
        %v2184 = vadd.f32 %v2169, %v2179
        %v2185 = vadd.f32 %v2170, %v2181
        %v2186 = vld [vmem:[#allocation2 + $0x90] sm:$0xff]
        %v2187 = vld [vmem:[#allocation2 + $0x98] sm:$0xff]
        %v2188 = vld [vmem:[#allocation2 + $0xa0] sm:$0x3]
        %v2189 = vmul.f32 %v2186, %v860
        %v2190 = vmul.f32 %v2187, %v860
        %v2191 = vadd.f32 %v2184, %v2189
        %v2192 = vadd.f32 %v2185, %v2190
        %v2193 = vmul.f32 %v2186, %v865
        %v2194 = vmul.f32 %v2187, %v865
        %v2195 = vmul.f32 %v2188, %v865
        %v2199 = vrot.slane %v2193, 1
        %v2200 = vrot.slane %v2194, 1
        %v2201 = vsel %vm830, %v2199, %v2200
        %v2202 = vrot.slane %v2195, 1
        %v2203 = vsel %vm830, %v2200, %v2202
        %v2206 = vadd.f32 %v2191, %v2201
        %v2207 = vadd.f32 %v2192, %v2203
        %v2208 = vmul.f32 %v2186, %v881
        %v2209 = vmul.f32 %v2187, %v881
        %v2210 = vmul.f32 %v2188, %v881
        %v2214 = vrot.slane %v2208, 2
        %v2215 = vrot.slane %v2209, 2
        %v2216 = vsel %vm847, %v2214, %v2215
        %v2217 = vrot.slane %v2210, 2
        %v2218 = vsel %vm847, %v2215, %v2217
        %v2221 = vadd.f32 %v2206, %v2216
        %v2222 = vadd.f32 %v2207, %v2218
        %v2223 = vld [vmem:[#allocation2 + $0xa2] sm:$0xff]
        %v2224 = vld [vmem:[#allocation2 + $0xaa] sm:$0xff]
        %v2225 = vld [vmem:[#allocation2 + $0xb2] sm:$0x3]
        %v2226 = vmul.f32 %v2223, %v900
        %v2227 = vmul.f32 %v2224, %v900
        %v2228 = vadd.f32 %v2221, %v2226
        %v2229 = vadd.f32 %v2222, %v2227
        %v2230 = vmul.f32 %v2223, %v905
        %v2231 = vmul.f32 %v2224, %v905
        %v2232 = vmul.f32 %v2225, %v905
        %v2236 = vrot.slane %v2230, 1
        %v2237 = vrot.slane %v2231, 1
        %v2238 = vsel %vm830, %v2236, %v2237
        %v2239 = vrot.slane %v2232, 1
        %v2240 = vsel %vm830, %v2237, %v2239
        %v2243 = vadd.f32 %v2228, %v2238
        %v2244 = vadd.f32 %v2229, %v2240
        %v2245 = vmul.f32 %v2223, %v921
        %v2246 = vmul.f32 %v2224, %v921
        %v2247 = vmul.f32 %v2225, %v921
        %v2251 = vrot.slane %v2245, 2
        %v2252 = vrot.slane %v2246, 2
        %v2253 = vsel %vm847, %v2251, %v2252
        %v2254 = vrot.slane %v2247, 2
        %v2255 = vsel %vm847, %v2252, %v2254
        %v2258 = vadd.f32 %v2243, %v2253
        %v2259 = vadd.f32 %v2244, %v2255
        %v2260 = vld [vmem:[%s6] sm:$0x1]
        %v2262 = vperm.slane %v2260, 0
        %v2264 = vmul.f32 %v2258, %v2262
        %v2265 = vmul.f32 %v2259, %v2262
        %v2266 = vld [vmem:[%s7] sm:$0x1]
        %v2268 = vperm.slane %v2266, 0
        %v2270 = vadd.f32 %v2264, %v2268
        %v2271 = vadd.f32 %v2265, %v2268
        %v2272 = vmax.f32 %v2270, 0.0
        %v2273 = vmax.f32 %v2271, 0.0
        %v2274 = vmin.f32 %v2272, 6.0
        %v2275 = vmin.f32 %v2273, 6.0
        %v2276 = vld [vmem:[%s8] sm:$0xff]
        %v2277 = vld [vmem:[%s8 + $0x8] sm:$0xff]
        %v2278 = vld [vmem:[%s8 + $0x10] sm:$0xff]
        %v2279 = vld [vmem:[%s8 + $0x18] sm:$0xff]
        %v2280 = vld [vmem:[%s8 + $0x20] sm:$0xff]
        %v2281 = vld [vmem:[%s8 + $0x28] sm:$0xff]
        %v2282 = vld [vmem:[%s8 + $0x30] sm:$0xff]
        %v2283 = vld [vmem:[%s8 + $0x38] sm:$0xff]
        %v2284 = vld [vmem:[%s8 + $0x40] sm:$0xff]
        %v2285 = vld [vmem:[%s8 + $0x48] sm:$0xff]
        %v2286 = vld [vmem:[%s8 + $0x50] sm:$0xff]
        %v2287 = vld [vmem:[%s8 + $0x58] sm:$0xff]
        %v2288 = vld [vmem:[%s8 + $0x60] sm:$0xff]
        %v2289 = vld [vmem:[%s8 + $0x68] sm:$0xff]
        %v2290 = vld [vmem:[%s8 + $0x70] sm:$0xff]
        %v2291 = vld [vmem:[%s8 + $0x78] sm:$0xff]
        %2292 = vmatpush.msra.mxu0 %v2291
        %2293 = vmatpush.msra.mxu0 %v2290
        %2294 = vmatpush.msra.mxu0 %v2289
        %2295 = vmatpush.msra.mxu0 %v2288
        %2296 = vmatpush.msra.mxu0 %v2287
        %2297 = vmatpush.msra.mxu0 %v2286
        %2298 = vmatpush.msra.mxu0 %v2285
        %2299 = vmatpush.msra.mxu0 %v2284
        %2300 = vmatpush.msra.mxu0 %v2283
        %2301 = vmatpush.msra.mxu0 %v2282
        %2302 = vmatpush.msra.mxu0 %v2281
        %2303 = vmatpush.msra.mxu0 %v2280
        %2304 = vmatpush.msra.mxu0 %v2279
        %2305 = vmatpush.msra.mxu0 %v2278
        %2306 = vmatpush.msra.mxu0 %v2277
        %2307 = vmatpush.msra.mxu0 %v2276
        %2308 = vmatmul.f32.gmra.mxu0 %v2274
        %v2309 = vpop.f32.mrf.mxu0
        %v2310 = vadd.f32 0.0, %v2309
        %2311 = vmatmul.f32.gmra.mxu0 %v2275
        %v2312 = vpop.f32.mrf.mxu0
        %v2313 = vadd.f32 0.0, %v2312
        %2314 = vdwg.mxu0
        %v2315 = vld [vmem:[%s9] sm:$0x1]
        %v2317 = vperm.slane %v2315, 0
        %v2319 = vmul.f32 %v2310, %v2317
        %v2320 = vmul.f32 %v2313, %v2317
        %v2321 = vld [vmem:[%s10] sm:$0x1]
        %v2323 = vperm.slane %v2321, 0
        %v2325 = vadd.f32 %v2319, %v2323
        %v2326 = vadd.f32 %v2320, %v2323
        %s2327 = sadd.s32 %s1004, 8
        %s2328 = smul.u32 %s2327, 18
        %s2329 = sadd.s32 %s2328, 1
        %s2330 = scalar_lea.vmem %s398, %s2329
        %v2331 = vld [vmem:[%s2330] sm:$0xff]
        %v2332 = vld [vmem:[%s2330 + $0x8] sm:$0xff]
        %v2333 = vadd.f32 %v2325, %v2331
        %v2334 = vadd.f32 %v2326, %v2332
        %s2335 = scalar_lea.vmem %s393, 112 [#allocation3]
        %2336 = vst [vmem:[%s2335] sm:$0xff] %v2333
        %2337 = vst [vmem:[%s2335 + $0x8] sm:$0xff] %v2334
        %s2338 = sand.u32 %s283, 1
        %s2339 = scalar_lea.sflag [#allocation4], %s2338
        %s2340 = sand.u32 %s283, 1
        %s2341 = smul.addr %s2340, 128
        %s2342 = scalar_lea.vmem [#allocation3], %s2341
        // Predicated region
        $region65: #{tpu_custom_call.1} parent=63 // pred_check
          %p2343 = pneg %p293
        $region66: #{tpu_custom_call.1} parent=63 // pred_check_branch
          %2345 = sbr.rel (%p2343) target = $region68
        $region67: #{tpu_custom_call.1} parent=63 // pred_region
          %s2346 = smul.u32 8, %s30
          %2348 = vsyncadd %s2339, 0
          %s2349 = smul.addr %s2346, 2
          %s2350 = smul.addr %s29, 32
          %s2351 = sadd.s32 %s2349, %s2350
          %s2352 = smul.addr %s2351, 8
          %s2353 = scalar_lea.hbm %s11, %s2352
          %s2354 = sshll.u32 %s2342, 4
          %s2355 = int_to_ptr.vmem [resolvable:$true] %s2354
          %s2356 = sshll.u32 %s2353, 4
          %s2357 = int_to_ptr.hbm [resolvable:$true] %s2356
          %2362 = dma.vmem_to_hbm [thread:$0]  %s2355, 2048, %s2357, %s2339, 128, 128, 8
        $region68: #{tpu_custom_call.1} parent=63 // pred_fallthru
          _
      $region64: #{tpu_custom_call.1} parent=5 // pred_fallthru
        _
      %p2363 = scmp.le.s32.totalorder 2, %s20
      // Predicated region
      $region69: #{tpu_custom_call.1} parent=5 // pred_check
        %p2364 = pneg %p2363
      $region70: #{tpu_custom_call.1} parent=5 // pred_check_branch
        %2366 = sbr.rel (%p2364) target = $region72
      $region71: #{tpu_custom_call.1} parent=5 // pred_region
        %s2367 = ssub.s32 %s20, 2
        // Predicated region
        $region73: #{tpu_custom_call.1} parent=71 // pred_check
          %p2368 = pneg %p299
        $region74: #{tpu_custom_call.1} parent=71 // pred_check_branch
          %2370 = sbr.rel (%p2368) target = $region76
        $region75: #{tpu_custom_call.1} parent=71 // pred_region
          %s2371 = sand.u32 %s284, 1
          %s2372 = scalar_lea.sflag [#allocation4], %s2371
          %s2373 = sand.u32 %s284, 1
          %s2374 = smul.addr %s2373, 128
          %s2375 = scalar_lea.vmem [#allocation3], %s2374
          %2377 = dma.done %s2372, 2048
        $region76: #{tpu_custom_call.1} parent=71 // pred_fallthru
          _
      $region72: #{tpu_custom_call.1} parent=5 // pred_fallthru
        _
    $region6: #{tpu_custom_call.1} parent=1 // loop_footer
      %s24 = sadd.s32 1, %s20
    $region7: #{tpu_custom_call.1} parent=1 // loop_footer_branch
      %19 = sbr.rel target = $region3
    $region8: #{tpu_custom_call.1} parent=1 // loop_exit
      _
    %2378 = vsyncpa [#allocation4], 1
    %s2379 = scalar_lea.sflag [#allocation4], 1
    %2380 = vsyncpa %s2379, 1

</llo_original>
